<compile_context>
chip_gen: v7x
topology: tpu7x:2x2x1
jax: 0.10.0
libtpu: 0.0.40
codegen_flags: <defaults>
</compile_context>

<pallas_src>
import functools

import jax
import jax.numpy as jnp
from jax.experimental import pallas as pl
from jax.experimental.pallas import tpu as pltpu

LANE = 128        # lane padding for the GAT feature path
NEG_INF = -1e30


# ----------------------------------------------------------------------------
# Fused kernel: GATConv+ReLU (x2)  ->  LSTM  ->  attention pool  ->  fc+softmax
# ----------------------------------------------------------------------------
def _gat_block(h_in, adj_bias, w_bf16, att_f32, bias_row):
    """One GATConv(heads=1) + fused ReLU on a dense additive-mask adjacency."""
    # node projection in bf16 (MXU-native), f32 accumulate
    h = jnp.dot(h_in.astype(jnp.bfloat16), w_bf16,
                preferred_element_type=jnp.float32)                   # (N, 128)
    # both attention scalars with a single (N,128)@(128,2) matmul (f32, tiny)
    a = jnp.dot(h, att_f32, preferred_element_type=jnp.float32)       # (N, 2)
    a_src = a[:, 0:1]                                                  # (N, 1)
    a_dst = a[:, 1:2]                                                  # (N, 1)
    # e[i, j] = LeakyReLU(a_dst[i] + a_src[j]) for edge j -> i
    e = a_dst + a_src.T                                                # (N, N)
    e = jnp.maximum(e, 0.2 * e)                                        # LeakyReLU
    e = e + adj_bias                                                   # 0 / -1e30
    # masked softmax over incoming edges (per target row), f32 throughout
    e_max = jnp.max(e, axis=1, keepdims=True)
    p = jnp.exp(e - e_max)
    alpha = p * pl.reciprocal(jnp.sum(p, axis=1, keepdims=True), approx=True)
    out = jnp.dot(alpha, h, preferred_element_type=jnp.float32) + bias_row
    return jnp.maximum(out, 0.0)                                       # ReLU


def _fused_kernel(x_ref, adjb_ref, w_ref, cols_ref, b_ref,
                  out_ref, lstm_out_ref, *, hidden, num_classes):
    H, C = hidden, num_classes
    n = x_ref.shape[0]
    adj_bias = adjb_ref[...]                                           # (N, N)

    # ---- spatial part: two GAT layers + ReLU --------------------------------
    h1 = _gat_block(x_ref[...], adj_bias,
                    w_ref[0:LANE, 0:LANE],          # gat1_w  (128,128) bf16
                    cols_ref[:, 0:2],               # [att_src | att_dst]
                    b_ref[0:1, 0:LANE])
    h2 = _gat_block(h1, adj_bias,
                    w_ref[0:LANE, LANE:2 * LANE],   # gat2_w  (128,128) bf16
                    cols_ref[:, 2:4],
                    b_ref[1:2, 0:LANE])

    # ---- LSTM over the node sequence (batch=1, seq=N) -----------------------
    # hoisted input projection (+ combined torch bias) for all steps at once;
    # kept as a value (16x256 f32 = 4 vregs), not a VMEM scratch.
    xw = (jnp.dot(h2.astype(jnp.bfloat16), w_ref[LANE:2 * LANE, :],
                  preferred_element_type=jnp.float32)
          + b_ref[2:3, :])                                             # (N, 4H)
    w_hh = w_ref[2 * LANE:2 * LANE + H, :]        # (H, 4H) bf16 = 8 vregs

    h_prev = jnp.zeros((1, H), jnp.float32)
    c_prev = jnp.zeros((1, H), jnp.float32)
    # static trip count -> fully unrolled; state stays in vregs
    for t in range(n):
        gates = xw[t:t + 1, :] + jnp.dot(h_prev.astype(jnp.bfloat16), w_hh,
                                         preferred_element_type=jnp.float32)
        i_g = jax.nn.sigmoid(gates[:, 0 * H:1 * H])
        f_g = jax.nn.sigmoid(gates[:, 1 * H:2 * H])
        g_g = jnp.tanh(gates[:, 2 * H:3 * H])
        o_g = jax.nn.sigmoid(gates[:, 3 * H:4 * H])
        c_prev = f_g * c_prev + i_g * g_g
        h_prev = o_g * jnp.tanh(c_prev)
        lstm_out_ref[pl.ds(t, 1), :] = h_prev     # store off the critical path

    lstm_out = lstm_out_ref[...]                                       # (N, H)

    # ---- temporal attention pooling (exact softmax over the sequence) -------
    logits = (jnp.dot(lstm_out, cols_ref[0:H, 4:5],
                      preferred_element_type=jnp.float32)
              + b_ref[3:4, C:C + 1])                                   # (N, 1)
    m = jnp.max(logits, axis=0, keepdims=True)
    p = jnp.exp(logits - m)
    attn = p / jnp.sum(p, axis=0, keepdims=True)
    pooled = jnp.sum(attn * lstm_out, axis=0, keepdims=True)           # (1, H)

    # ---- final fc + exact softmax over classes ------------------------------
    fc = (jnp.dot(pooled, cols_ref[0:H, 5:5 + C],
                  preferred_element_type=jnp.float32)
          + b_ref[3:4, 0:C])                                           # (1, C)
    fm = jnp.max(fc, axis=1, keepdims=True)
    e = jnp.exp(fc - fm)
    out_ref[...] = e / jnp.sum(e, axis=1, keepdims=True)


def spatio_temporal_gnn_forward(packed, x_pad, adj_bias, *,
                                hidden=64, num_classes=2):
    """Fused forward. `packed` are the 3 packed weight slabs, x_pad is (N,128)."""
    n = x_pad.shape[0]
    vmem = pl.BlockSpec(memory_space=pltpu.MemorySpace.VMEM)
    kernel = functools.partial(_fused_kernel, hidden=hidden,
                               num_classes=num_classes)
    return pl.pallas_call(
        kernel,
        out_shape=jax.ShapeDtypeStruct((1, num_classes), jnp.float32),
        in_specs=[vmem] * 5,
        out_specs=vmem,
        scratch_shapes=[
            pltpu.VMEM((n, hidden), jnp.float32),   # lstm_out
        ],
    )(x_pad, adj_bias, packed["w_big"], packed["w_cols"], packed["b_rows"])


# ----------------------------------------------------------------------------
# One-time preprocessing: additive adjacency bias + packed parameter slabs.
# Zero-padding is exact: padded feature lanes stay identically zero through
# the GAT layers, the LSTM recurrence and the attention / fc projections.
# ----------------------------------------------------------------------------
def build_adjacency_bias(edge_index, n):
    src, dst = edge_index[0], edge_index[1]
    adj = jnp.zeros((n, n), jnp.float32).at[dst, src].set(1.0)
    adj = jnp.maximum(adj, jnp.eye(n, dtype=jnp.float32))   # + self loops
    return jnp.where(adj > 0, 0.0, NEG_INF)                 # additive mask bias


def _pad2d(a, rows, cols):
    out = jnp.zeros((rows, cols), a.dtype)
    return out.at[: a.shape[0], : a.shape[1]].set(a)


def pack_params(p, hidden, num_classes, h_pad=LANE):
    H, C = hidden, num_classes
    G = 4 * H                       # gate-slab lane width (256)
    nf = p["gat1_w"].shape[0]
    assert G >= 2 * h_pad and G >= h_pad

    # ---- big bf16 matmul-weight slab (2*h_pad + H, 4H) = (320, 256) ---------
    #   rows [  0:128) : [ gat1_w | gat2_w ]  (each zero-padded to 128x128)
    #   rows [128:256) : W_ih  (real rows 0:H)
    #   rows [256:320) : W_hh
    w_big = jnp.zeros((2 * h_pad + H, G), jnp.float32)
    w_big = w_big.at[0:nf, 0:H].set(p["gat1_w"])
    w_big = w_big.at[0:H, h_pad:h_pad + H].set(p["gat2_w"])
    w_big = w_big.at[h_pad:h_pad + H, :].set(p["lstm_w_ih"])
    w_big = w_big.at[2 * h_pad:2 * h_pad + H, :].set(p["lstm_w_hh"])

    # ---- f32 column-weight slab (128, 8) ------------------------------------
    #   cols 0/1: gat1 att_src/att_dst, 2/3: gat2 att, 4: att_w, 5:5+C: fc_w
    w_cols = jnp.zeros((h_pad, 8), jnp.float32)
    w_cols = w_cols.at[0:H, 0:1].set(p["gat1_att_src"])
    w_cols = w_cols.at[0:H, 1:2].set(p["gat1_att_dst"])
    w_cols = w_cols.at[0:H, 2:3].set(p["gat2_att_src"])
    w_cols = w_cols.at[0:H, 3:4].set(p["gat2_att_dst"])
    w_cols = w_cols.at[0:H, 4:5].set(p["att_w"])
    w_cols = w_cols.at[0:H, 5:5 + C].set(p["fc_w"])

    # ---- f32 bias slab (4, 4H) ----------------------------------------------
    #   row 0: gat1_bias, row 1: gat2_bias, row 2: combined lstm bias,
    #   row 3: [ fc_b (C lanes) | att_b (1 lane) ]
    b_rows = jnp.zeros((4, G), jnp.float32)
    b_rows = b_rows.at[0, 0:H].set(p["gat1_bias"][0])
    b_rows = b_rows.at[1, 0:H].set(p["gat2_bias"][0])
    b_rows = b_rows.at[2, :].set(p["lstm_b"][0])
    b_rows = b_rows.at[3, 0:C].set(p["fc_b"][0])
    b_rows = b_rows.at[3, C].set(p["att_b"][0, 0])

    return {"w_big": w_big.astype(jnp.bfloat16),
            "w_cols": w_cols,
            "b_rows": b_rows}


def init_params(key, node_features, hidden_features, num_classes):
    ks = jax.random.split(key, 12)

    def u(k, shape, scale=0.1):
        return jax.random.uniform(k, shape, jnp.float32, -scale, scale)

    H = hidden_features
    return {
        # GAT layer 1
        "gat1_w":       u(ks[0], (node_features, H)),
        "gat1_att_src": u(ks[1], (H, 1)),
        "gat1_att_dst": u(ks[2], (H, 1)),
        "gat1_bias":    u(ks[3], (1, H)),
        # GAT layer 2
        "gat2_w":       u(ks[4], (H, H)),
        "gat2_att_src": u(ks[5], (H, 1)),
        "gat2_att_dst": u(ks[6], (H, 1)),
        "gat2_bias":    u(ks[7], (1, H)),
        # LSTM (gate order i, f, g, o; weights pre-transposed to (in, 4H);
        # lstm_b is the COMBINED torch bias, i.e. bias_ih + bias_hh)
        "lstm_w_ih":    u(ks[8], (H, 4 * H)),
        "lstm_w_hh":    u(ks[9], (H, 4 * H)),
        "lstm_b":       jnp.zeros((1, 4 * H), jnp.float32),
        # temporal attention Linear(H, 1)
        "att_w":        u(ks[10], (H, 1)),
        "att_b":        jnp.zeros((1, 1), jnp.float32),
        # final fc Linear(H, num_classes)
        "fc_w":         u(ks[11], (H, num_classes)),
        "fc_b":         jnp.zeros((1, num_classes), jnp.float32),
    }


if __name__ == "__main__":
    node_features = 100
    hidden_features = 64
    num_classes = 2
    n_nodes = 16

    key = jax.random.PRNGKey(0)
    k_x, k_p = jax.random.split(key)

    x = jax.random.normal(k_x, (n_nodes, node_features), jnp.float32)
    # simple bidirectional ring graph: 2 * n_nodes directed edges
    fwd_src = jnp.arange(n_nodes, dtype=jnp.int32)
    fwd_dst = (fwd_src + 1) % n_nodes
    edge_index = jnp.stack([
        jnp.concatenate([fwd_src, fwd_dst]),
        jnp.concatenate([fwd_dst, fwd_src]),
    ])  # (2, 32)

    params = init_params(k_p, node_features, hidden_features, num_classes)

    # one-time preprocessing (static graph / static weights)
    adj_bias = build_adjacency_bias(edge_index, n_nodes)
    packed = pack_params(params, hidden_features, num_classes)
    x_pad = _pad2d(x, n_nodes, LANE)

    fwd = jax.jit(functools.partial(spatio_temporal_gnn_forward,
                                    hidden=hidden_features,
                                    num_classes=num_classes))
    out = jax.block_until_ready(fwd(packed, x_pad, adj_bias))

    assert out.shape == (1, num_classes)
    assert bool(jnp.all(jnp.isfinite(out)))
    assert abs(float(jnp.sum(out)) - 1.0) < 1e-5   # exact-division softmax
    print("KERNEL_OK")
</pallas_src>

<mosaic_0001>
module attributes {stable_mosaic.version = 11 : i64} {
  func.func @_fused_kernel(%arg0: memref<16x128xf32, #tpu.memory_space<vmem>>, %arg1: memref<16x16xf32, #tpu.memory_space<vmem>>, %arg2: memref<320x256xbf16, #tpu.memory_space<vmem>>, %arg3: memref<128x8xf32, #tpu.memory_space<vmem>>, %arg4: memref<4x256xf32, #tpu.memory_space<vmem>>, %arg5: memref<1x2xf32, #tpu.memory_space<vmem>>, %arg6: memref<16x64xf32, #tpu.memory_space<vmem>>) attributes {dimension_semantics = [], scalar_prefetch = 0 : i64, scratch_operands = 1 : i64, tpu.core_type = #tpu.core_type<tc>} {
    %c0 = arith.constant 0 : index
    %c0_0 = arith.constant 0 : index
    %0 = vector.load %arg1[%c0, %c0_0] : memref<16x16xf32, #tpu.memory_space<vmem>>, vector<16x16xf32>
    %c0_1 = arith.constant 0 : index
    %c0_2 = arith.constant 0 : index
    %1 = vector.load %arg0[%c0_1, %c0_2] : memref<16x128xf32, #tpu.memory_space<vmem>>, vector<16x128xf32>
    %c0_3 = arith.constant 0 : index
    %c0_4 = arith.constant 0 : index
    %2 = vector.load %arg2[%c0_3, %c0_4] : memref<320x256xbf16, #tpu.memory_space<vmem>>, vector<128x128xbf16>
    %c0_5 = arith.constant 0 : index
    %c0_6 = arith.constant 0 : index
    %3 = vector.load %arg3[%c0_5, %c0_6] : memref<128x8xf32, #tpu.memory_space<vmem>>, vector<128x2xf32>
    %c0_7 = arith.constant 0 : index
    %c0_8 = arith.constant 0 : index
    %4 = vector.load %arg4[%c0_7, %c0_8] : memref<4x256xf32, #tpu.memory_space<vmem>>, vector<1x128xf32>
    %5 = arith.truncf %1 : vector<16x128xf32> to vector<16x128xbf16>
    %cst = arith.constant dense<0.000000e+00> : vector<16x128xf32>
    %6 = tpu.matmul %5, %2, %cst {dimension_numbers = #tpu.dot_dimension_numbers<[1], [0], [0], [1], [0, 0, 1, 1], [], []>} : vector<16x128xbf16>, vector<128x128xbf16>, vector<16x128xf32> -> vector<16x128xf32>
    %cst_9 = arith.constant dense<0.000000e+00> : vector<16x2xf32>
    %7 = tpu.matmul %6, %3, %cst_9 {dimension_numbers = #tpu.dot_dimension_numbers<[1], [0], [0], [1], [0, 0, 1, 1], [], []>} : vector<16x128xf32>, vector<128x2xf32>, vector<16x2xf32> -> vector<16x2xf32>
    %8 = vector.extract_strided_slice %7 {offsets = [0, 0], sizes = [16, 1], strides = [1, 1]} : vector<16x2xf32> to vector<16x1xf32>
    %9 = vector.extract_strided_slice %7 {offsets = [0, 1], sizes = [16, 1], strides = [1, 1]} : vector<16x2xf32> to vector<16x1xf32>
    %10 = tpu.transpose %8, [1, 0] : vector<16x1xf32> -> vector<1x16xf32>
    %11 = vector.broadcast %9 : vector<16x1xf32> to vector<16x16xf32>
    %12 = vector.broadcast %10 : vector<1x16xf32> to vector<16x16xf32>
    %13 = arith.addf %11, %12 : vector<16x16xf32>
    %cst_10 = arith.constant 2.000000e-01 : f32
    %14 = vector.broadcast %cst_10 : f32 to vector<16x16xf32>
    %15 = arith.mulf %14, %13 : vector<16x16xf32>
    %16 = arith.maximumf %13, %15 : vector<16x16xf32>
    %17 = arith.addf %16, %0 : vector<16x16xf32>
    %cst_11 = arith.constant dense<0xFF800000> : vector<16xf32>
    %18 = vector.multi_reduction <maximumf>, %17, %cst_11 [1] : vector<16x16xf32> to vector<16xf32>
    %19 = vector.shape_cast %18 : vector<16xf32> to vector<16x1xf32>
    %20 = vector.broadcast %19 : vector<16x1xf32> to vector<16x16xf32>
    %21 = arith.subf %17, %20 : vector<16x16xf32>
    %22 = math.exp %21 : vector<16x16xf32>
    %cst_12 = arith.constant dense<0.000000e+00> : vector<16xf32>
    %23 = vector.multi_reduction <add>, %22, %cst_12 [1] : vector<16x16xf32> to vector<16xf32>
    %24 = vector.shape_cast %23 : vector<16xf32> to vector<16x1xf32>
    %25 = tpu.reciprocal %24 {approx = true} : vector<16x1xf32> -> vector<16x1xf32>
    %26 = vector.broadcast %25 : vector<16x1xf32> to vector<16x16xf32>
    %27 = arith.mulf %22, %26 : vector<16x16xf32>
    %cst_13 = arith.constant dense<0.000000e+00> : vector<16x128xf32>
    %28 = tpu.matmul %27, %6, %cst_13 {dimension_numbers = #tpu.dot_dimension_numbers<[1], [0], [0], [1], [0, 0, 1, 1], [], []>} : vector<16x16xf32>, vector<16x128xf32>, vector<16x128xf32> -> vector<16x128xf32>
    %29 = vector.broadcast %4 : vector<1x128xf32> to vector<16x128xf32>
    %30 = arith.addf %28, %29 : vector<16x128xf32>
    %cst_14 = arith.constant 0.000000e+00 : f32
    %31 = vector.broadcast %cst_14 : f32 to vector<16x128xf32>
    %32 = arith.maximumf %30, %31 : vector<16x128xf32>
    %c0_15 = arith.constant 0 : index
    %c128 = arith.constant 128 : index
    %33 = vector.load %arg2[%c0_15, %c128] : memref<320x256xbf16, #tpu.memory_space<vmem>>, vector<128x128xbf16>
    %c0_16 = arith.constant 0 : index
    %c2 = arith.constant 2 : index
    %34 = vector.load %arg3[%c0_16, %c2] : memref<128x8xf32, #tpu.memory_space<vmem>>, vector<128x2xf32>
    %c1 = arith.constant 1 : index
    %c0_17 = arith.constant 0 : index
    %35 = vector.load %arg4[%c1, %c0_17] : memref<4x256xf32, #tpu.memory_space<vmem>>, vector<1x128xf32>
    %36 = arith.truncf %32 : vector<16x128xf32> to vector<16x128xbf16>
    %cst_18 = arith.constant dense<0.000000e+00> : vector<16x128xf32>
    %37 = tpu.matmul %36, %33, %cst_18 {dimension_numbers = #tpu.dot_dimension_numbers<[1], [0], [0], [1], [0, 0, 1, 1], [], []>} : vector<16x128xbf16>, vector<128x128xbf16>, vector<16x128xf32> -> vector<16x128xf32>
    %cst_19 = arith.constant dense<0.000000e+00> : vector<16x2xf32>
    %38 = tpu.matmul %37, %34, %cst_19 {dimension_numbers = #tpu.dot_dimension_numbers<[1], [0], [0], [1], [0, 0, 1, 1], [], []>} : vector<16x128xf32>, vector<128x2xf32>, vector<16x2xf32> -> vector<16x2xf32>
    %39 = vector.extract_strided_slice %38 {offsets = [0, 0], sizes = [16, 1], strides = [1, 1]} : vector<16x2xf32> to vector<16x1xf32>
    %40 = vector.extract_strided_slice %38 {offsets = [0, 1], sizes = [16, 1], strides = [1, 1]} : vector<16x2xf32> to vector<16x1xf32>
    %41 = tpu.transpose %39, [1, 0] : vector<16x1xf32> -> vector<1x16xf32>
    %42 = vector.broadcast %40 : vector<16x1xf32> to vector<16x16xf32>
    %43 = vector.broadcast %41 : vector<1x16xf32> to vector<16x16xf32>
    %44 = arith.addf %42, %43 : vector<16x16xf32>
    %cst_20 = arith.constant 2.000000e-01 : f32
    %45 = vector.broadcast %cst_20 : f32 to vector<16x16xf32>
    %46 = arith.mulf %45, %44 : vector<16x16xf32>
    %47 = arith.maximumf %44, %46 : vector<16x16xf32>
    %48 = arith.addf %47, %0 : vector<16x16xf32>
    %cst_21 = arith.constant dense<0xFF800000> : vector<16xf32>
    %49 = vector.multi_reduction <maximumf>, %48, %cst_21 [1] : vector<16x16xf32> to vector<16xf32>
    %50 = vector.shape_cast %49 : vector<16xf32> to vector<16x1xf32>
    %51 = vector.broadcast %50 : vector<16x1xf32> to vector<16x16xf32>
    %52 = arith.subf %48, %51 : vector<16x16xf32>
    %53 = math.exp %52 : vector<16x16xf32>
    %cst_22 = arith.constant dense<0.000000e+00> : vector<16xf32>
    %54 = vector.multi_reduction <add>, %53, %cst_22 [1] : vector<16x16xf32> to vector<16xf32>
    %55 = vector.shape_cast %54 : vector<16xf32> to vector<16x1xf32>
    %56 = tpu.reciprocal %55 {approx = true} : vector<16x1xf32> -> vector<16x1xf32>
    %57 = vector.broadcast %56 : vector<16x1xf32> to vector<16x16xf32>
    %58 = arith.mulf %53, %57 : vector<16x16xf32>
    %cst_23 = arith.constant dense<0.000000e+00> : vector<16x128xf32>
    %59 = tpu.matmul %58, %37, %cst_23 {dimension_numbers = #tpu.dot_dimension_numbers<[1], [0], [0], [1], [0, 0, 1, 1], [], []>} : vector<16x16xf32>, vector<16x128xf32>, vector<16x128xf32> -> vector<16x128xf32>
    %60 = vector.broadcast %35 : vector<1x128xf32> to vector<16x128xf32>
    %61 = arith.addf %59, %60 : vector<16x128xf32>
    %cst_24 = arith.constant 0.000000e+00 : f32
    %62 = vector.broadcast %cst_24 : f32 to vector<16x128xf32>
    %63 = arith.maximumf %61, %62 : vector<16x128xf32>
    %64 = arith.truncf %63 : vector<16x128xf32> to vector<16x128xbf16>
    %c128_25 = arith.constant 128 : index
    %c0_26 = arith.constant 0 : index
    %65 = vector.load %arg2[%c128_25, %c0_26] : memref<320x256xbf16, #tpu.memory_space<vmem>>, vector<128x256xbf16>
    %cst_27 = arith.constant dense<0.000000e+00> : vector<16x256xf32>
    %66 = tpu.matmul %64, %65, %cst_27 {dimension_numbers = #tpu.dot_dimension_numbers<[1], [0], [0], [1], [0, 0, 1, 1], [], []>} : vector<16x128xbf16>, vector<128x256xbf16>, vector<16x256xf32> -> vector<16x256xf32>
    %c2_28 = arith.constant 2 : index
    %c0_29 = arith.constant 0 : index
    %67 = vector.load %arg4[%c2_28, %c0_29] : memref<4x256xf32, #tpu.memory_space<vmem>>, vector<1x256xf32>
    %68 = vector.broadcast %67 : vector<1x256xf32> to vector<16x256xf32>
    %69 = arith.addf %66, %68 : vector<16x256xf32>
    %c256 = arith.constant 256 : index
    %c0_30 = arith.constant 0 : index
    %70 = vector.load %arg2[%c256, %c0_30] : memref<320x256xbf16, #tpu.memory_space<vmem>>, vector<64x256xbf16>
    %cst_31 = arith.constant 0.000000e+00 : f32
    %71 = vector.broadcast %cst_31 : f32 to vector<1x64xf32>
    %cst_32 = arith.constant 0.000000e+00 : f32
    %72 = vector.broadcast %cst_32 : f32 to vector<1x64xf32>
    %73 = vector.extract_strided_slice %69 {offsets = [0, 0], sizes = [1, 256], strides = [1, 1]} : vector<16x256xf32> to vector<1x256xf32>
    %74 = arith.truncf %71 : vector<1x64xf32> to vector<1x64xbf16>
    %cst_33 = arith.constant dense<0.000000e+00> : vector<1x256xf32>
    %75 = tpu.matmul %74, %70, %cst_33 {dimension_numbers = #tpu.dot_dimension_numbers<[1], [0], [0], [1], [0, 0, 1, 1], [], []>} : vector<1x64xbf16>, vector<64x256xbf16>, vector<1x256xf32> -> vector<1x256xf32>
    %76 = arith.addf %73, %75 : vector<1x256xf32>
    %77 = vector.extract_strided_slice %76 {offsets = [0, 0], sizes = [1, 64], strides = [1, 1]} : vector<1x256xf32> to vector<1x64xf32>
    %78 = arith.negf %77 : vector<1x64xf32>
    %79 = math.exp %78 : vector<1x64xf32>
    %cst_34 = arith.constant 1.000000e+00 : f32
    %80 = vector.broadcast %cst_34 : f32 to vector<1x64xf32>
    %81 = arith.addf %80, %79 : vector<1x64xf32>
    %82 = arith.divf %80, %81 : vector<1x64xf32>
    %83 = vector.extract_strided_slice %76 {offsets = [0, 64], sizes = [1, 64], strides = [1, 1]} : vector<1x256xf32> to vector<1x64xf32>
    %84 = arith.negf %83 : vector<1x64xf32>
    %85 = math.exp %84 : vector<1x64xf32>
    %cst_35 = arith.constant 1.000000e+00 : f32
    %86 = vector.broadcast %cst_35 : f32 to vector<1x64xf32>
    %87 = arith.addf %86, %85 : vector<1x64xf32>
    %88 = arith.divf %86, %87 : vector<1x64xf32>
    %89 = vector.extract_strided_slice %76 {offsets = [0, 128], sizes = [1, 64], strides = [1, 1]} : vector<1x256xf32> to vector<1x64xf32>
    %90 = math.tanh %89 : vector<1x64xf32>
    %91 = vector.extract_strided_slice %76 {offsets = [0, 192], sizes = [1, 64], strides = [1, 1]} : vector<1x256xf32> to vector<1x64xf32>
    %92 = arith.negf %91 : vector<1x64xf32>
    %93 = math.exp %92 : vector<1x64xf32>
    %cst_36 = arith.constant 1.000000e+00 : f32
    %94 = vector.broadcast %cst_36 : f32 to vector<1x64xf32>
    %95 = arith.addf %94, %93 : vector<1x64xf32>
    %96 = arith.divf %94, %95 : vector<1x64xf32>
    %97 = arith.mulf %88, %72 : vector<1x64xf32>
    %98 = arith.mulf %82, %90 : vector<1x64xf32>
    %99 = arith.addf %97, %98 : vector<1x64xf32>
    %100 = math.tanh %99 : vector<1x64xf32>
    %101 = arith.mulf %96, %100 : vector<1x64xf32>
    %c0_37 = arith.constant 0 : index
    %c0_38 = arith.constant 0 : index
    %102 = vector.load %arg6[%c0_37, %c0_38] : memref<16x64xf32, #tpu.memory_space<vmem>>, vector<1x64xf32>
    tpu.vector_store %arg6[%c0_37, %c0_38], %101 {strides = array<i32>} : memref<16x64xf32, #tpu.memory_space<vmem>>, vector<1x64xf32>,
    %103 = vector.extract_strided_slice %69 {offsets = [1, 0], sizes = [1, 256], strides = [1, 1]} : vector<16x256xf32> to vector<1x256xf32>
    %104 = arith.truncf %101 : vector<1x64xf32> to vector<1x64xbf16>
    %cst_39 = arith.constant dense<0.000000e+00> : vector<1x256xf32>
    %105 = tpu.matmul %104, %70, %cst_39 {dimension_numbers = #tpu.dot_dimension_numbers<[1], [0], [0], [1], [0, 0, 1, 1], [], []>} : vector<1x64xbf16>, vector<64x256xbf16>, vector<1x256xf32> -> vector<1x256xf32>
    %106 = arith.addf %103, %105 : vector<1x256xf32>
    %107 = vector.extract_strided_slice %106 {offsets = [0, 0], sizes = [1, 64], strides = [1, 1]} : vector<1x256xf32> to vector<1x64xf32>
    %108 = arith.negf %107 : vector<1x64xf32>
    %109 = math.exp %108 : vector<1x64xf32>
    %cst_40 = arith.constant 1.000000e+00 : f32
    %110 = vector.broadcast %cst_40 : f32 to vector<1x64xf32>
    %111 = arith.addf %110, %109 : vector<1x64xf32>
    %112 = arith.divf %110, %111 : vector<1x64xf32>
    %113 = vector.extract_strided_slice %106 {offsets = [0, 64], sizes = [1, 64], strides = [1, 1]} : vector<1x256xf32> to vector<1x64xf32>
    %114 = arith.negf %113 : vector<1x64xf32>
    %115 = math.exp %114 : vector<1x64xf32>
    %cst_41 = arith.constant 1.000000e+00 : f32
    %116 = vector.broadcast %cst_41 : f32 to vector<1x64xf32>
    %117 = arith.addf %116, %115 : vector<1x64xf32>
    %118 = arith.divf %116, %117 : vector<1x64xf32>
    %119 = vector.extract_strided_slice %106 {offsets = [0, 128], sizes = [1, 64], strides = [1, 1]} : vector<1x256xf32> to vector<1x64xf32>
    %120 = math.tanh %119 : vector<1x64xf32>
    %121 = vector.extract_strided_slice %106 {offsets = [0, 192], sizes = [1, 64], strides = [1, 1]} : vector<1x256xf32> to vector<1x64xf32>
    %122 = arith.negf %121 : vector<1x64xf32>
    %123 = math.exp %122 : vector<1x64xf32>
    %cst_42 = arith.constant 1.000000e+00 : f32
    %124 = vector.broadcast %cst_42 : f32 to vector<1x64xf32>
    %125 = arith.addf %124, %123 : vector<1x64xf32>
    %126 = arith.divf %124, %125 : vector<1x64xf32>
    %127 = arith.mulf %118, %99 : vector<1x64xf32>
    %128 = arith.mulf %112, %120 : vector<1x64xf32>
    %129 = arith.addf %127, %128 : vector<1x64xf32>
    %130 = math.tanh %129 : vector<1x64xf32>
    %131 = arith.mulf %126, %130 : vector<1x64xf32>
    %c1_43 = arith.constant 1 : index
    %c0_44 = arith.constant 0 : index
    %132 = vector.load %arg6[%c1_43, %c0_44] : memref<16x64xf32, #tpu.memory_space<vmem>>, vector<1x64xf32>
    tpu.vector_store %arg6[%c1_43, %c0_44], %131 {strides = array<i32>} : memref<16x64xf32, #tpu.memory_space<vmem>>, vector<1x64xf32>,
    %133 = vector.extract_strided_slice %69 {offsets = [2, 0], sizes = [1, 256], strides = [1, 1]} : vector<16x256xf32> to vector<1x256xf32>
    %134 = arith.truncf %131 : vector<1x64xf32> to vector<1x64xbf16>
    %cst_45 = arith.constant dense<0.000000e+00> : vector<1x256xf32>
    %135 = tpu.matmul %134, %70, %cst_45 {dimension_numbers = #tpu.dot_dimension_numbers<[1], [0], [0], [1], [0, 0, 1, 1], [], []>} : vector<1x64xbf16>, vector<64x256xbf16>, vector<1x256xf32> -> vector<1x256xf32>
    %136 = arith.addf %133, %135 : vector<1x256xf32>
    %137 = vector.extract_strided_slice %136 {offsets = [0, 0], sizes = [1, 64], strides = [1, 1]} : vector<1x256xf32> to vector<1x64xf32>
    %138 = arith.negf %137 : vector<1x64xf32>
    %139 = math.exp %138 : vector<1x64xf32>
    %cst_46 = arith.constant 1.000000e+00 : f32
    %140 = vector.broadcast %cst_46 : f32 to vector<1x64xf32>
    %141 = arith.addf %140, %139 : vector<1x64xf32>
    %142 = arith.divf %140, %141 : vector<1x64xf32>
    %143 = vector.extract_strided_slice %136 {offsets = [0, 64], sizes = [1, 64], strides = [1, 1]} : vector<1x256xf32> to vector<1x64xf32>
    %144 = arith.negf %143 : vector<1x64xf32>
    %145 = math.exp %144 : vector<1x64xf32>
    %cst_47 = arith.constant 1.000000e+00 : f32
    %146 = vector.broadcast %cst_47 : f32 to vector<1x64xf32>
    %147 = arith.addf %146, %145 : vector<1x64xf32>
    %148 = arith.divf %146, %147 : vector<1x64xf32>
    %149 = vector.extract_strided_slice %136 {offsets = [0, 128], sizes = [1, 64], strides = [1, 1]} : vector<1x256xf32> to vector<1x64xf32>
    %150 = math.tanh %149 : vector<1x64xf32>
    %151 = vector.extract_strided_slice %136 {offsets = [0, 192], sizes = [1, 64], strides = [1, 1]} : vector<1x256xf32> to vector<1x64xf32>
    %152 = arith.negf %151 : vector<1x64xf32>
    %153 = math.exp %152 : vector<1x64xf32>
    %cst_48 = arith.constant 1.000000e+00 : f32
    %154 = vector.broadcast %cst_48 : f32 to vector<1x64xf32>
    %155 = arith.addf %154, %153 : vector<1x64xf32>
    %156 = arith.divf %154, %155 : vector<1x64xf32>
    %157 = arith.mulf %148, %129 : vector<1x64xf32>
    %158 = arith.mulf %142, %150 : vector<1x64xf32>
    %159 = arith.addf %157, %158 : vector<1x64xf32>
    %160 = math.tanh %159 : vector<1x64xf32>
    %161 = arith.mulf %156, %160 : vector<1x64xf32>
    %c2_49 = arith.constant 2 : index
    %c0_50 = arith.constant 0 : index
    %162 = vector.load %arg6[%c2_49, %c0_50] : memref<16x64xf32, #tpu.memory_space<vmem>>, vector<1x64xf32>
    tpu.vector_store %arg6[%c2_49, %c0_50], %161 {strides = array<i32>} : memref<16x64xf32, #tpu.memory_space<vmem>>, vector<1x64xf32>,
    %163 = vector.extract_strided_slice %69 {offsets = [3, 0], sizes = [1, 256], strides = [1, 1]} : vector<16x256xf32> to vector<1x256xf32>
    %164 = arith.truncf %161 : vector<1x64xf32> to vector<1x64xbf16>
    %cst_51 = arith.constant dense<0.000000e+00> : vector<1x256xf32>
    %165 = tpu.matmul %164, %70, %cst_51 {dimension_numbers = #tpu.dot_dimension_numbers<[1], [0], [0], [1], [0, 0, 1, 1], [], []>} : vector<1x64xbf16>, vector<64x256xbf16>, vector<1x256xf32> -> vector<1x256xf32>
    %166 = arith.addf %163, %165 : vector<1x256xf32>
    %167 = vector.extract_strided_slice %166 {offsets = [0, 0], sizes = [1, 64], strides = [1, 1]} : vector<1x256xf32> to vector<1x64xf32>
    %168 = arith.negf %167 : vector<1x64xf32>
    %169 = math.exp %168 : vector<1x64xf32>
    %cst_52 = arith.constant 1.000000e+00 : f32
    %170 = vector.broadcast %cst_52 : f32 to vector<1x64xf32>
    %171 = arith.addf %170, %169 : vector<1x64xf32>
    %172 = arith.divf %170, %171 : vector<1x64xf32>
    %173 = vector.extract_strided_slice %166 {offsets = [0, 64], sizes = [1, 64], strides = [1, 1]} : vector<1x256xf32> to vector<1x64xf32>
    %174 = arith.negf %173 : vector<1x64xf32>
    %175 = math.exp %174 : vector<1x64xf32>
    %cst_53 = arith.constant 1.000000e+00 : f32
    %176 = vector.broadcast %cst_53 : f32 to vector<1x64xf32>
    %177 = arith.addf %176, %175 : vector<1x64xf32>
    %178 = arith.divf %176, %177 : vector<1x64xf32>
    %179 = vector.extract_strided_slice %166 {offsets = [0, 128], sizes = [1, 64], strides = [1, 1]} : vector<1x256xf32> to vector<1x64xf32>
    %180 = math.tanh %179 : vector<1x64xf32>
    %181 = vector.extract_strided_slice %166 {offsets = [0, 192], sizes = [1, 64], strides = [1, 1]} : vector<1x256xf32> to vector<1x64xf32>
    %182 = arith.negf %181 : vector<1x64xf32>
    %183 = math.exp %182 : vector<1x64xf32>
    %cst_54 = arith.constant 1.000000e+00 : f32
    %184 = vector.broadcast %cst_54 : f32 to vector<1x64xf32>
    %185 = arith.addf %184, %183 : vector<1x64xf32>
    %186 = arith.divf %184, %185 : vector<1x64xf32>
    %187 = arith.mulf %178, %159 : vector<1x64xf32>
    %188 = arith.mulf %172, %180 : vector<1x64xf32>
    %189 = arith.addf %187, %188 : vector<1x64xf32>
    %190 = math.tanh %189 : vector<1x64xf32>
    %191 = arith.mulf %186, %190 : vector<1x64xf32>
    %c3 = arith.constant 3 : index
    %c0_55 = arith.constant 0 : index
    %192 = vector.load %arg6[%c3, %c0_55] : memref<16x64xf32, #tpu.memory_space<vmem>>, vector<1x64xf32>
    tpu.vector_store %arg6[%c3, %c0_55], %191 {strides = array<i32>} : memref<16x64xf32, #tpu.memory_space<vmem>>, vector<1x64xf32>,
    %193 = vector.extract_strided_slice %69 {offsets = [4, 0], sizes = [1, 256], strides = [1, 1]} : vector<16x256xf32> to vector<1x256xf32>
    %194 = arith.truncf %191 : vector<1x64xf32> to vector<1x64xbf16>
    %cst_56 = arith.constant dense<0.000000e+00> : vector<1x256xf32>
    %195 = tpu.matmul %194, %70, %cst_56 {dimension_numbers = #tpu.dot_dimension_numbers<[1], [0], [0], [1], [0, 0, 1, 1], [], []>} : vector<1x64xbf16>, vector<64x256xbf16>, vector<1x256xf32> -> vector<1x256xf32>
    %196 = arith.addf %193, %195 : vector<1x256xf32>
    %197 = vector.extract_strided_slice %196 {offsets = [0, 0], sizes = [1, 64], strides = [1, 1]} : vector<1x256xf32> to vector<1x64xf32>
    %198 = arith.negf %197 : vector<1x64xf32>
    %199 = math.exp %198 : vector<1x64xf32>
    %cst_57 = arith.constant 1.000000e+00 : f32
    %200 = vector.broadcast %cst_57 : f32 to vector<1x64xf32>
    %201 = arith.addf %200, %199 : vector<1x64xf32>
    %202 = arith.divf %200, %201 : vector<1x64xf32>
    %203 = vector.extract_strided_slice %196 {offsets = [0, 64], sizes = [1, 64], strides = [1, 1]} : vector<1x256xf32> to vector<1x64xf32>
    %204 = arith.negf %203 : vector<1x64xf32>
    %205 = math.exp %204 : vector<1x64xf32>
    %cst_58 = arith.constant 1.000000e+00 : f32
    %206 = vector.broadcast %cst_58 : f32 to vector<1x64xf32>
    %207 = arith.addf %206, %205 : vector<1x64xf32>
    %208 = arith.divf %206, %207 : vector<1x64xf32>
    %209 = vector.extract_strided_slice %196 {offsets = [0, 128], sizes = [1, 64], strides = [1, 1]} : vector<1x256xf32> to vector<1x64xf32>
    %210 = math.tanh %209 : vector<1x64xf32>
    %211 = vector.extract_strided_slice %196 {offsets = [0, 192], sizes = [1, 64], strides = [1, 1]} : vector<1x256xf32> to vector<1x64xf32>
    %212 = arith.negf %211 : vector<1x64xf32>
    %213 = math.exp %212 : vector<1x64xf32>
    %cst_59 = arith.constant 1.000000e+00 : f32
    %214 = vector.broadcast %cst_59 : f32 to vector<1x64xf32>
    %215 = arith.addf %214, %213 : vector<1x64xf32>
    %216 = arith.divf %214, %215 : vector<1x64xf32>
    %217 = arith.mulf %208, %189 : vector<1x64xf32>
    %218 = arith.mulf %202, %210 : vector<1x64xf32>
    %219 = arith.addf %217, %218 : vector<1x64xf32>
    %220 = math.tanh %219 : vector<1x64xf32>
    %221 = arith.mulf %216, %220 : vector<1x64xf32>
    %c4 = arith.constant 4 : index
    %c0_60 = arith.constant 0 : index
    %222 = vector.load %arg6[%c4, %c0_60] : memref<16x64xf32, #tpu.memory_space<vmem>>, vector<1x64xf32>
    tpu.vector_store %arg6[%c4, %c0_60], %221 {strides = array<i32>} : memref<16x64xf32, #tpu.memory_space<vmem>>, vector<1x64xf32>,
    %223 = vector.extract_strided_slice %69 {offsets = [5, 0], sizes = [1, 256], strides = [1, 1]} : vector<16x256xf32> to vector<1x256xf32>
    %224 = arith.truncf %221 : vector<1x64xf32> to vector<1x64xbf16>
    %cst_61 = arith.constant dense<0.000000e+00> : vector<1x256xf32>
    %225 = tpu.matmul %224, %70, %cst_61 {dimension_numbers = #tpu.dot_dimension_numbers<[1], [0], [0], [1], [0, 0, 1, 1], [], []>} : vector<1x64xbf16>, vector<64x256xbf16>, vector<1x256xf32> -> vector<1x256xf32>
    %226 = arith.addf %223, %225 : vector<1x256xf32>
    %227 = vector.extract_strided_slice %226 {offsets = [0, 0], sizes = [1, 64], strides = [1, 1]} : vector<1x256xf32> to vector<1x64xf32>
    %228 = arith.negf %227 : vector<1x64xf32>
    %229 = math.exp %228 : vector<1x64xf32>
    %cst_62 = arith.constant 1.000000e+00 : f32
    %230 = vector.broadcast %cst_62 : f32 to vector<1x64xf32>
    %231 = arith.addf %230, %229 : vector<1x64xf32>
    %232 = arith.divf %230, %231 : vector<1x64xf32>
    %233 = vector.extract_strided_slice %226 {offsets = [0, 64], sizes = [1, 64], strides = [1, 1]} : vector<1x256xf32> to vector<1x64xf32>
    %234 = arith.negf %233 : vector<1x64xf32>
    %235 = math.exp %234 : vector<1x64xf32>
    %cst_63 = arith.constant 1.000000e+00 : f32
    %236 = vector.broadcast %cst_63 : f32 to vector<1x64xf32>
    %237 = arith.addf %236, %235 : vector<1x64xf32>
    %238 = arith.divf %236, %237 : vector<1x64xf32>
    %239 = vector.extract_strided_slice %226 {offsets = [0, 128], sizes = [1, 64], strides = [1, 1]} : vector<1x256xf32> to vector<1x64xf32>
    %240 = math.tanh %239 : vector<1x64xf32>
    %241 = vector.extract_strided_slice %226 {offsets = [0, 192], sizes = [1, 64], strides = [1, 1]} : vector<1x256xf32> to vector<1x64xf32>
    %242 = arith.negf %241 : vector<1x64xf32>
    %243 = math.exp %242 : vector<1x64xf32>
    %cst_64 = arith.constant 1.000000e+00 : f32
    %244 = vector.broadcast %cst_64 : f32 to vector<1x64xf32>
    %245 = arith.addf %244, %243 : vector<1x64xf32>
    %246 = arith.divf %244, %245 : vector<1x64xf32>
    %247 = arith.mulf %238, %219 : vector<1x64xf32>
    %248 = arith.mulf %232, %240 : vector<1x64xf32>
    %249 = arith.addf %247, %248 : vector<1x64xf32>
    %250 = math.tanh %249 : vector<1x64xf32>
    %251 = arith.mulf %246, %250 : vector<1x64xf32>
    %c5 = arith.constant 5 : index
    %c0_65 = arith.constant 0 : index
    %252 = vector.load %arg6[%c5, %c0_65] : memref<16x64xf32, #tpu.memory_space<vmem>>, vector<1x64xf32>
    tpu.vector_store %arg6[%c5, %c0_65], %251 {strides = array<i32>} : memref<16x64xf32, #tpu.memory_space<vmem>>, vector<1x64xf32>,
    %253 = vector.extract_strided_slice %69 {offsets = [6, 0], sizes = [1, 256], strides = [1, 1]} : vector<16x256xf32> to vector<1x256xf32>
    %254 = arith.truncf %251 : vector<1x64xf32> to vector<1x64xbf16>
    %cst_66 = arith.constant dense<0.000000e+00> : vector<1x256xf32>
    %255 = tpu.matmul %254, %70, %cst_66 {dimension_numbers = #tpu.dot_dimension_numbers<[1], [0], [0], [1], [0, 0, 1, 1], [], []>} : vector<1x64xbf16>, vector<64x256xbf16>, vector<1x256xf32> -> vector<1x256xf32>
    %256 = arith.addf %253, %255 : vector<1x256xf32>
    %257 = vector.extract_strided_slice %256 {offsets = [0, 0], sizes = [1, 64], strides = [1, 1]} : vector<1x256xf32> to vector<1x64xf32>
    %258 = arith.negf %257 : vector<1x64xf32>
    %259 = math.exp %258 : vector<1x64xf32>
    %cst_67 = arith.constant 1.000000e+00 : f32
    %260 = vector.broadcast %cst_67 : f32 to vector<1x64xf32>
    %261 = arith.addf %260, %259 : vector<1x64xf32>
    %262 = arith.divf %260, %261 : vector<1x64xf32>
    %263 = vector.extract_strided_slice %256 {offsets = [0, 64], sizes = [1, 64], strides = [1, 1]} : vector<1x256xf32> to vector<1x64xf32>
    %264 = arith.negf %263 : vector<1x64xf32>
    %265 = math.exp %264 : vector<1x64xf32>
    %cst_68 = arith.constant 1.000000e+00 : f32
    %266 = vector.broadcast %cst_68 : f32 to vector<1x64xf32>
    %267 = arith.addf %266, %265 : vector<1x64xf32>
    %268 = arith.divf %266, %267 : vector<1x64xf32>
    %269 = vector.extract_strided_slice %256 {offsets = [0, 128], sizes = [1, 64], strides = [1, 1]} : vector<1x256xf32> to vector<1x64xf32>
    %270 = math.tanh %269 : vector<1x64xf32>
    %271 = vector.extract_strided_slice %256 {offsets = [0, 192], sizes = [1, 64], strides = [1, 1]} : vector<1x256xf32> to vector<1x64xf32>
    %272 = arith.negf %271 : vector<1x64xf32>
    %273 = math.exp %272 : vector<1x64xf32>
    %cst_69 = arith.constant 1.000000e+00 : f32
    %274 = vector.broadcast %cst_69 : f32 to vector<1x64xf32>
    %275 = arith.addf %274, %273 : vector<1x64xf32>
    %276 = arith.divf %274, %275 : vector<1x64xf32>
    %277 = arith.mulf %268, %249 : vector<1x64xf32>
    %278 = arith.mulf %262, %270 : vector<1x64xf32>
    %279 = arith.addf %277, %278 : vector<1x64xf32>
    %280 = math.tanh %279 : vector<1x64xf32>
    %281 = arith.mulf %276, %280 : vector<1x64xf32>
    %c6 = arith.constant 6 : index
    %c0_70 = arith.constant 0 : index
    %282 = vector.load %arg6[%c6, %c0_70] : memref<16x64xf32, #tpu.memory_space<vmem>>, vector<1x64xf32>
    tpu.vector_store %arg6[%c6, %c0_70], %281 {strides = array<i32>} : memref<16x64xf32, #tpu.memory_space<vmem>>, vector<1x64xf32>,
    %283 = vector.extract_strided_slice %69 {offsets = [7, 0], sizes = [1, 256], strides = [1, 1]} : vector<16x256xf32> to vector<1x256xf32>
    %284 = arith.truncf %281 : vector<1x64xf32> to vector<1x64xbf16>
    %cst_71 = arith.constant dense<0.000000e+00> : vector<1x256xf32>
    %285 = tpu.matmul %284, %70, %cst_71 {dimension_numbers = #tpu.dot_dimension_numbers<[1], [0], [0], [1], [0, 0, 1, 1], [], []>} : vector<1x64xbf16>, vector<64x256xbf16>, vector<1x256xf32> -> vector<1x256xf32>
    %286 = arith.addf %283, %285 : vector<1x256xf32>
    %287 = vector.extract_strided_slice %286 {offsets = [0, 0], sizes = [1, 64], strides = [1, 1]} : vector<1x256xf32> to vector<1x64xf32>
    %288 = arith.negf %287 : vector<1x64xf32>
    %289 = math.exp %288 : vector<1x64xf32>
    %cst_72 = arith.constant 1.000000e+00 : f32
    %290 = vector.broadcast %cst_72 : f32 to vector<1x64xf32>
    %291 = arith.addf %290, %289 : vector<1x64xf32>
    %292 = arith.divf %290, %291 : vector<1x64xf32>
    %293 = vector.extract_strided_slice %286 {offsets = [0, 64], sizes = [1, 64], strides = [1, 1]} : vector<1x256xf32> to vector<1x64xf32>
    %294 = arith.negf %293 : vector<1x64xf32>
    %295 = math.exp %294 : vector<1x64xf32>
    %cst_73 = arith.constant 1.000000e+00 : f32
    %296 = vector.broadcast %cst_73 : f32 to vector<1x64xf32>
    %297 = arith.addf %296, %295 : vector<1x64xf32>
    %298 = arith.divf %296, %297 : vector<1x64xf32>
    %299 = vector.extract_strided_slice %286 {offsets = [0, 128], sizes = [1, 64], strides = [1, 1]} : vector<1x256xf32> to vector<1x64xf32>
    %300 = math.tanh %299 : vector<1x64xf32>
    %301 = vector.extract_strided_slice %286 {offsets = [0, 192], sizes = [1, 64], strides = [1, 1]} : vector<1x256xf32> to vector<1x64xf32>
    %302 = arith.negf %301 : vector<1x64xf32>
    %303 = math.exp %302 : vector<1x64xf32>
    %cst_74 = arith.constant 1.000000e+00 : f32
    %304 = vector.broadcast %cst_74 : f32 to vector<1x64xf32>
    %305 = arith.addf %304, %303 : vector<1x64xf32>
    %306 = arith.divf %304, %305 : vector<1x64xf32>
    %307 = arith.mulf %298, %279 : vector<1x64xf32>
    %308 = arith.mulf %292, %300 : vector<1x64xf32>
    %309 = arith.addf %307, %308 : vector<1x64xf32>
    %310 = math.tanh %309 : vector<1x64xf32>
    %311 = arith.mulf %306, %310 : vector<1x64xf32>
    %c7 = arith.constant 7 : index
    %c0_75 = arith.constant 0 : index
    %312 = vector.load %arg6[%c7, %c0_75] : memref<16x64xf32, #tpu.memory_space<vmem>>, vector<1x64xf32>
    tpu.vector_store %arg6[%c7, %c0_75], %311 {strides = array<i32>} : memref<16x64xf32, #tpu.memory_space<vmem>>, vector<1x64xf32>,
    %313 = vector.extract_strided_slice %69 {offsets = [8, 0], sizes = [1, 256], strides = [1, 1]} : vector<16x256xf32> to vector<1x256xf32>
    %314 = arith.truncf %311 : vector<1x64xf32> to vector<1x64xbf16>
    %cst_76 = arith.constant dense<0.000000e+00> : vector<1x256xf32>
    %315 = tpu.matmul %314, %70, %cst_76 {dimension_numbers = #tpu.dot_dimension_numbers<[1], [0], [0], [1], [0, 0, 1, 1], [], []>} : vector<1x64xbf16>, vector<64x256xbf16>, vector<1x256xf32> -> vector<1x256xf32>
    %316 = arith.addf %313, %315 : vector<1x256xf32>
    %317 = vector.extract_strided_slice %316 {offsets = [0, 0], sizes = [1, 64], strides = [1, 1]} : vector<1x256xf32> to vector<1x64xf32>
    %318 = arith.negf %317 : vector<1x64xf32>
    %319 = math.exp %318 : vector<1x64xf32>
    %cst_77 = arith.constant 1.000000e+00 : f32
    %320 = vector.broadcast %cst_77 : f32 to vector<1x64xf32>
    %321 = arith.addf %320, %319 : vector<1x64xf32>
    %322 = arith.divf %320, %321 : vector<1x64xf32>
    %323 = vector.extract_strided_slice %316 {offsets = [0, 64], sizes = [1, 64], strides = [1, 1]} : vector<1x256xf32> to vector<1x64xf32>
    %324 = arith.negf %323 : vector<1x64xf32>
    %325 = math.exp %324 : vector<1x64xf32>
    %cst_78 = arith.constant 1.000000e+00 : f32
    %326 = vector.broadcast %cst_78 : f32 to vector<1x64xf32>
    %327 = arith.addf %326, %325 : vector<1x64xf32>
    %328 = arith.divf %326, %327 : vector<1x64xf32>
    %329 = vector.extract_strided_slice %316 {offsets = [0, 128], sizes = [1, 64], strides = [1, 1]} : vector<1x256xf32> to vector<1x64xf32>
    %330 = math.tanh %329 : vector<1x64xf32>
    %331 = vector.extract_strided_slice %316 {offsets = [0, 192], sizes = [1, 64], strides = [1, 1]} : vector<1x256xf32> to vector<1x64xf32>
    %332 = arith.negf %331 : vector<1x64xf32>
    %333 = math.exp %332 : vector<1x64xf32>
    %cst_79 = arith.constant 1.000000e+00 : f32
    %334 = vector.broadcast %cst_79 : f32 to vector<1x64xf32>
    %335 = arith.addf %334, %333 : vector<1x64xf32>
    %336 = arith.divf %334, %335 : vector<1x64xf32>
    %337 = arith.mulf %328, %309 : vector<1x64xf32>
    %338 = arith.mulf %322, %330 : vector<1x64xf32>
    %339 = arith.addf %337, %338 : vector<1x64xf32>
    %340 = math.tanh %339 : vector<1x64xf32>
    %341 = arith.mulf %336, %340 : vector<1x64xf32>
    %c8 = arith.constant 8 : index
    %c0_80 = arith.constant 0 : index
    %342 = vector.load %arg6[%c8, %c0_80] : memref<16x64xf32, #tpu.memory_space<vmem>>, vector<1x64xf32>
    tpu.vector_store %arg6[%c8, %c0_80], %341 {strides = array<i32>} : memref<16x64xf32, #tpu.memory_space<vmem>>, vector<1x64xf32>,
    %343 = vector.extract_strided_slice %69 {offsets = [9, 0], sizes = [1, 256], strides = [1, 1]} : vector<16x256xf32> to vector<1x256xf32>
    %344 = arith.truncf %341 : vector<1x64xf32> to vector<1x64xbf16>
    %cst_81 = arith.constant dense<0.000000e+00> : vector<1x256xf32>
    %345 = tpu.matmul %344, %70, %cst_81 {dimension_numbers = #tpu.dot_dimension_numbers<[1], [0], [0], [1], [0, 0, 1, 1], [], []>} : vector<1x64xbf16>, vector<64x256xbf16>, vector<1x256xf32> -> vector<1x256xf32>
    %346 = arith.addf %343, %345 : vector<1x256xf32>
    %347 = vector.extract_strided_slice %346 {offsets = [0, 0], sizes = [1, 64], strides = [1, 1]} : vector<1x256xf32> to vector<1x64xf32>
    %348 = arith.negf %347 : vector<1x64xf32>
    %349 = math.exp %348 : vector<1x64xf32>
    %cst_82 = arith.constant 1.000000e+00 : f32
    %350 = vector.broadcast %cst_82 : f32 to vector<1x64xf32>
    %351 = arith.addf %350, %349 : vector<1x64xf32>
    %352 = arith.divf %350, %351 : vector<1x64xf32>
    %353 = vector.extract_strided_slice %346 {offsets = [0, 64], sizes = [1, 64], strides = [1, 1]} : vector<1x256xf32> to vector<1x64xf32>
    %354 = arith.negf %353 : vector<1x64xf32>
    %355 = math.exp %354 : vector<1x64xf32>
    %cst_83 = arith.constant 1.000000e+00 : f32
    %356 = vector.broadcast %cst_83 : f32 to vector<1x64xf32>
    %357 = arith.addf %356, %355 : vector<1x64xf32>
    %358 = arith.divf %356, %357 : vector<1x64xf32>
    %359 = vector.extract_strided_slice %346 {offsets = [0, 128], sizes = [1, 64], strides = [1, 1]} : vector<1x256xf32> to vector<1x64xf32>
    %360 = math.tanh %359 : vector<1x64xf32>
    %361 = vector.extract_strided_slice %346 {offsets = [0, 192], sizes = [1, 64], strides = [1, 1]} : vector<1x256xf32> to vector<1x64xf32>
    %362 = arith.negf %361 : vector<1x64xf32>
    %363 = math.exp %362 : vector<1x64xf32>
    %cst_84 = arith.constant 1.000000e+00 : f32
    %364 = vector.broadcast %cst_84 : f32 to vector<1x64xf32>
    %365 = arith.addf %364, %363 : vector<1x64xf32>
    %366 = arith.divf %364, %365 : vector<1x64xf32>
    %367 = arith.mulf %358, %339 : vector<1x64xf32>
    %368 = arith.mulf %352, %360 : vector<1x64xf32>
    %369 = arith.addf %367, %368 : vector<1x64xf32>
    %370 = math.tanh %369 : vector<1x64xf32>
    %371 = arith.mulf %366, %370 : vector<1x64xf32>
    %c9 = arith.constant 9 : index
    %c0_85 = arith.constant 0 : index
    %372 = vector.load %arg6[%c9, %c0_85] : memref<16x64xf32, #tpu.memory_space<vmem>>, vector<1x64xf32>
    tpu.vector_store %arg6[%c9, %c0_85], %371 {strides = array<i32>} : memref<16x64xf32, #tpu.memory_space<vmem>>, vector<1x64xf32>,
    %373 = vector.extract_strided_slice %69 {offsets = [10, 0], sizes = [1, 256], strides = [1, 1]} : vector<16x256xf32> to vector<1x256xf32>
    %374 = arith.truncf %371 : vector<1x64xf32> to vector<1x64xbf16>
    %cst_86 = arith.constant dense<0.000000e+00> : vector<1x256xf32>
    %375 = tpu.matmul %374, %70, %cst_86 {dimension_numbers = #tpu.dot_dimension_numbers<[1], [0], [0], [1], [0, 0, 1, 1], [], []>} : vector<1x64xbf16>, vector<64x256xbf16>, vector<1x256xf32> -> vector<1x256xf32>
    %376 = arith.addf %373, %375 : vector<1x256xf32>
    %377 = vector.extract_strided_slice %376 {offsets = [0, 0], sizes = [1, 64], strides = [1, 1]} : vector<1x256xf32> to vector<1x64xf32>
    %378 = arith.negf %377 : vector<1x64xf32>
    %379 = math.exp %378 : vector<1x64xf32>
    %cst_87 = arith.constant 1.000000e+00 : f32
    %380 = vector.broadcast %cst_87 : f32 to vector<1x64xf32>
    %381 = arith.addf %380, %379 : vector<1x64xf32>
    %382 = arith.divf %380, %381 : vector<1x64xf32>
    %383 = vector.extract_strided_slice %376 {offsets = [0, 64], sizes = [1, 64], strides = [1, 1]} : vector<1x256xf32> to vector<1x64xf32>
    %384 = arith.negf %383 : vector<1x64xf32>
    %385 = math.exp %384 : vector<1x64xf32>
    %cst_88 = arith.constant 1.000000e+00 : f32
    %386 = vector.broadcast %cst_88 : f32 to vector<1x64xf32>
    %387 = arith.addf %386, %385 : vector<1x64xf32>
    %388 = arith.divf %386, %387 : vector<1x64xf32>
    %389 = vector.extract_strided_slice %376 {offsets = [0, 128], sizes = [1, 64], strides = [1, 1]} : vector<1x256xf32> to vector<1x64xf32>
    %390 = math.tanh %389 : vector<1x64xf32>
    %391 = vector.extract_strided_slice %376 {offsets = [0, 192], sizes = [1, 64], strides = [1, 1]} : vector<1x256xf32> to vector<1x64xf32>
    %392 = arith.negf %391 : vector<1x64xf32>
    %393 = math.exp %392 : vector<1x64xf32>
    %cst_89 = arith.constant 1.000000e+00 : f32
    %394 = vector.broadcast %cst_89 : f32 to vector<1x64xf32>
    %395 = arith.addf %394, %393 : vector<1x64xf32>
    %396 = arith.divf %394, %395 : vector<1x64xf32>
    %397 = arith.mulf %388, %369 : vector<1x64xf32>
    %398 = arith.mulf %382, %390 : vector<1x64xf32>
    %399 = arith.addf %397, %398 : vector<1x64xf32>
    %400 = math.tanh %399 : vector<1x64xf32>
    %401 = arith.mulf %396, %400 : vector<1x64xf32>
    %c10 = arith.constant 10 : index
    %c0_90 = arith.constant 0 : index
    %402 = vector.load %arg6[%c10, %c0_90] : memref<16x64xf32, #tpu.memory_space<vmem>>, vector<1x64xf32>
    tpu.vector_store %arg6[%c10, %c0_90], %401 {strides = array<i32>} : memref<16x64xf32, #tpu.memory_space<vmem>>, vector<1x64xf32>,
    %403 = vector.extract_strided_slice %69 {offsets = [11, 0], sizes = [1, 256], strides = [1, 1]} : vector<16x256xf32> to vector<1x256xf32>
    %404 = arith.truncf %401 : vector<1x64xf32> to vector<1x64xbf16>
    %cst_91 = arith.constant dense<0.000000e+00> : vector<1x256xf32>
    %405 = tpu.matmul %404, %70, %cst_91 {dimension_numbers = #tpu.dot_dimension_numbers<[1], [0], [0], [1], [0, 0, 1, 1], [], []>} : vector<1x64xbf16>, vector<64x256xbf16>, vector<1x256xf32> -> vector<1x256xf32>
    %406 = arith.addf %403, %405 : vector<1x256xf32>
    %407 = vector.extract_strided_slice %406 {offsets = [0, 0], sizes = [1, 64], strides = [1, 1]} : vector<1x256xf32> to vector<1x64xf32>
    %408 = arith.negf %407 : vector<1x64xf32>
    %409 = math.exp %408 : vector<1x64xf32>
    %cst_92 = arith.constant 1.000000e+00 : f32
    %410 = vector.broadcast %cst_92 : f32 to vector<1x64xf32>
    %411 = arith.addf %410, %409 : vector<1x64xf32>
    %412 = arith.divf %410, %411 : vector<1x64xf32>
    %413 = vector.extract_strided_slice %406 {offsets = [0, 64], sizes = [1, 64], strides = [1, 1]} : vector<1x256xf32> to vector<1x64xf32>
    %414 = arith.negf %413 : vector<1x64xf32>
    %415 = math.exp %414 : vector<1x64xf32>
    %cst_93 = arith.constant 1.000000e+00 : f32
    %416 = vector.broadcast %cst_93 : f32 to vector<1x64xf32>
    %417 = arith.addf %416, %415 : vector<1x64xf32>
    %418 = arith.divf %416, %417 : vector<1x64xf32>
    %419 = vector.extract_strided_slice %406 {offsets = [0, 128], sizes = [1, 64], strides = [1, 1]} : vector<1x256xf32> to vector<1x64xf32>
    %420 = math.tanh %419 : vector<1x64xf32>
    %421 = vector.extract_strided_slice %406 {offsets = [0, 192], sizes = [1, 64], strides = [1, 1]} : vector<1x256xf32> to vector<1x64xf32>
    %422 = arith.negf %421 : vector<1x64xf32>
    %423 = math.exp %422 : vector<1x64xf32>
    %cst_94 = arith.constant 1.000000e+00 : f32
    %424 = vector.broadcast %cst_94 : f32 to vector<1x64xf32>
    %425 = arith.addf %424, %423 : vector<1x64xf32>
    %426 = arith.divf %424, %425 : vector<1x64xf32>
    %427 = arith.mulf %418, %399 : vector<1x64xf32>
    %428 = arith.mulf %412, %420 : vector<1x64xf32>
    %429 = arith.addf %427, %428 : vector<1x64xf32>
    %430 = math.tanh %429 : vector<1x64xf32>
    %431 = arith.mulf %426, %430 : vector<1x64xf32>
    %c11 = arith.constant 11 : index
    %c0_95 = arith.constant 0 : index
    %432 = vector.load %arg6[%c11, %c0_95] : memref<16x64xf32, #tpu.memory_space<vmem>>, vector<1x64xf32>
    tpu.vector_store %arg6[%c11, %c0_95], %431 {strides = array<i32>} : memref<16x64xf32, #tpu.memory_space<vmem>>, vector<1x64xf32>,
    %433 = vector.extract_strided_slice %69 {offsets = [12, 0], sizes = [1, 256], strides = [1, 1]} : vector<16x256xf32> to vector<1x256xf32>
    %434 = arith.truncf %431 : vector<1x64xf32> to vector<1x64xbf16>
    %cst_96 = arith.constant dense<0.000000e+00> : vector<1x256xf32>
    %435 = tpu.matmul %434, %70, %cst_96 {dimension_numbers = #tpu.dot_dimension_numbers<[1], [0], [0], [1], [0, 0, 1, 1], [], []>} : vector<1x64xbf16>, vector<64x256xbf16>, vector<1x256xf32> -> vector<1x256xf32>
    %436 = arith.addf %433, %435 : vector<1x256xf32>
    %437 = vector.extract_strided_slice %436 {offsets = [0, 0], sizes = [1, 64], strides = [1, 1]} : vector<1x256xf32> to vector<1x64xf32>
    %438 = arith.negf %437 : vector<1x64xf32>
    %439 = math.exp %438 : vector<1x64xf32>
    %cst_97 = arith.constant 1.000000e+00 : f32
    %440 = vector.broadcast %cst_97 : f32 to vector<1x64xf32>
    %441 = arith.addf %440, %439 : vector<1x64xf32>
    %442 = arith.divf %440, %441 : vector<1x64xf32>
    %443 = vector.extract_strided_slice %436 {offsets = [0, 64], sizes = [1, 64], strides = [1, 1]} : vector<1x256xf32> to vector<1x64xf32>
    %444 = arith.negf %443 : vector<1x64xf32>
    %445 = math.exp %444 : vector<1x64xf32>
    %cst_98 = arith.constant 1.000000e+00 : f32
    %446 = vector.broadcast %cst_98 : f32 to vector<1x64xf32>
    %447 = arith.addf %446, %445 : vector<1x64xf32>
    %448 = arith.divf %446, %447 : vector<1x64xf32>
    %449 = vector.extract_strided_slice %436 {offsets = [0, 128], sizes = [1, 64], strides = [1, 1]} : vector<1x256xf32> to vector<1x64xf32>
    %450 = math.tanh %449 : vector<1x64xf32>
    %451 = vector.extract_strided_slice %436 {offsets = [0, 192], sizes = [1, 64], strides = [1, 1]} : vector<1x256xf32> to vector<1x64xf32>
    %452 = arith.negf %451 : vector<1x64xf32>
    %453 = math.exp %452 : vector<1x64xf32>
    %cst_99 = arith.constant 1.000000e+00 : f32
    %454 = vector.broadcast %cst_99 : f32 to vector<1x64xf32>
    %455 = arith.addf %454, %453 : vector<1x64xf32>
    %456 = arith.divf %454, %455 : vector<1x64xf32>
    %457 = arith.mulf %448, %429 : vector<1x64xf32>
    %458 = arith.mulf %442, %450 : vector<1x64xf32>
    %459 = arith.addf %457, %458 : vector<1x64xf32>
    %460 = math.tanh %459 : vector<1x64xf32>
    %461 = arith.mulf %456, %460 : vector<1x64xf32>
    %c12 = arith.constant 12 : index
    %c0_100 = arith.constant 0 : index
    %462 = vector.load %arg6[%c12, %c0_100] : memref<16x64xf32, #tpu.memory_space<vmem>>, vector<1x64xf32>
    tpu.vector_store %arg6[%c12, %c0_100], %461 {strides = array<i32>} : memref<16x64xf32, #tpu.memory_space<vmem>>, vector<1x64xf32>,
    %463 = vector.extract_strided_slice %69 {offsets = [13, 0], sizes = [1, 256], strides = [1, 1]} : vector<16x256xf32> to vector<1x256xf32>
    %464 = arith.truncf %461 : vector<1x64xf32> to vector<1x64xbf16>
    %cst_101 = arith.constant dense<0.000000e+00> : vector<1x256xf32>
    %465 = tpu.matmul %464, %70, %cst_101 {dimension_numbers = #tpu.dot_dimension_numbers<[1], [0], [0], [1], [0, 0, 1, 1], [], []>} : vector<1x64xbf16>, vector<64x256xbf16>, vector<1x256xf32> -> vector<1x256xf32>
    %466 = arith.addf %463, %465 : vector<1x256xf32>
    %467 = vector.extract_strided_slice %466 {offsets = [0, 0], sizes = [1, 64], strides = [1, 1]} : vector<1x256xf32> to vector<1x64xf32>
    %468 = arith.negf %467 : vector<1x64xf32>
    %469 = math.exp %468 : vector<1x64xf32>
    %cst_102 = arith.constant 1.000000e+00 : f32
    %470 = vector.broadcast %cst_102 : f32 to vector<1x64xf32>
    %471 = arith.addf %470, %469 : vector<1x64xf32>
    %472 = arith.divf %470, %471 : vector<1x64xf32>
    %473 = vector.extract_strided_slice %466 {offsets = [0, 64], sizes = [1, 64], strides = [1, 1]} : vector<1x256xf32> to vector<1x64xf32>
    %474 = arith.negf %473 : vector<1x64xf32>
    %475 = math.exp %474 : vector<1x64xf32>
    %cst_103 = arith.constant 1.000000e+00 : f32
    %476 = vector.broadcast %cst_103 : f32 to vector<1x64xf32>
    %477 = arith.addf %476, %475 : vector<1x64xf32>
    %478 = arith.divf %476, %477 : vector<1x64xf32>
    %479 = vector.extract_strided_slice %466 {offsets = [0, 128], sizes = [1, 64], strides = [1, 1]} : vector<1x256xf32> to vector<1x64xf32>
    %480 = math.tanh %479 : vector<1x64xf32>
    %481 = vector.extract_strided_slice %466 {offsets = [0, 192], sizes = [1, 64], strides = [1, 1]} : vector<1x256xf32> to vector<1x64xf32>
    %482 = arith.negf %481 : vector<1x64xf32>
    %483 = math.exp %482 : vector<1x64xf32>
    %cst_104 = arith.constant 1.000000e+00 : f32
    %484 = vector.broadcast %cst_104 : f32 to vector<1x64xf32>
    %485 = arith.addf %484, %483 : vector<1x64xf32>
    %486 = arith.divf %484, %485 : vector<1x64xf32>
    %487 = arith.mulf %478, %459 : vector<1x64xf32>
    %488 = arith.mulf %472, %480 : vector<1x64xf32>
    %489 = arith.addf %487, %488 : vector<1x64xf32>
    %490 = math.tanh %489 : vector<1x64xf32>
    %491 = arith.mulf %486, %490 : vector<1x64xf32>
    %c13 = arith.constant 13 : index
    %c0_105 = arith.constant 0 : index
    %492 = vector.load %arg6[%c13, %c0_105] : memref<16x64xf32, #tpu.memory_space<vmem>>, vector<1x64xf32>
    tpu.vector_store %arg6[%c13, %c0_105], %491 {strides = array<i32>} : memref<16x64xf32, #tpu.memory_space<vmem>>, vector<1x64xf32>,
    %493 = vector.extract_strided_slice %69 {offsets = [14, 0], sizes = [1, 256], strides = [1, 1]} : vector<16x256xf32> to vector<1x256xf32>
    %494 = arith.truncf %491 : vector<1x64xf32> to vector<1x64xbf16>
    %cst_106 = arith.constant dense<0.000000e+00> : vector<1x256xf32>
    %495 = tpu.matmul %494, %70, %cst_106 {dimension_numbers = #tpu.dot_dimension_numbers<[1], [0], [0], [1], [0, 0, 1, 1], [], []>} : vector<1x64xbf16>, vector<64x256xbf16>, vector<1x256xf32> -> vector<1x256xf32>
    %496 = arith.addf %493, %495 : vector<1x256xf32>
    %497 = vector.extract_strided_slice %496 {offsets = [0, 0], sizes = [1, 64], strides = [1, 1]} : vector<1x256xf32> to vector<1x64xf32>
    %498 = arith.negf %497 : vector<1x64xf32>
    %499 = math.exp %498 : vector<1x64xf32>
    %cst_107 = arith.constant 1.000000e+00 : f32
    %500 = vector.broadcast %cst_107 : f32 to vector<1x64xf32>
    %501 = arith.addf %500, %499 : vector<1x64xf32>
    %502 = arith.divf %500, %501 : vector<1x64xf32>
    %503 = vector.extract_strided_slice %496 {offsets = [0, 64], sizes = [1, 64], strides = [1, 1]} : vector<1x256xf32> to vector<1x64xf32>
    %504 = arith.negf %503 : vector<1x64xf32>
    %505 = math.exp %504 : vector<1x64xf32>
    %cst_108 = arith.constant 1.000000e+00 : f32
    %506 = vector.broadcast %cst_108 : f32 to vector<1x64xf32>
    %507 = arith.addf %506, %505 : vector<1x64xf32>
    %508 = arith.divf %506, %507 : vector<1x64xf32>
    %509 = vector.extract_strided_slice %496 {offsets = [0, 128], sizes = [1, 64], strides = [1, 1]} : vector<1x256xf32> to vector<1x64xf32>
    %510 = math.tanh %509 : vector<1x64xf32>
    %511 = vector.extract_strided_slice %496 {offsets = [0, 192], sizes = [1, 64], strides = [1, 1]} : vector<1x256xf32> to vector<1x64xf32>
    %512 = arith.negf %511 : vector<1x64xf32>
    %513 = math.exp %512 : vector<1x64xf32>
    %cst_109 = arith.constant 1.000000e+00 : f32
    %514 = vector.broadcast %cst_109 : f32 to vector<1x64xf32>
    %515 = arith.addf %514, %513 : vector<1x64xf32>
    %516 = arith.divf %514, %515 : vector<1x64xf32>
    %517 = arith.mulf %508, %489 : vector<1x64xf32>
    %518 = arith.mulf %502, %510 : vector<1x64xf32>
    %519 = arith.addf %517, %518 : vector<1x64xf32>
    %520 = math.tanh %519 : vector<1x64xf32>
    %521 = arith.mulf %516, %520 : vector<1x64xf32>
    %c14 = arith.constant 14 : index
    %c0_110 = arith.constant 0 : index
    %522 = vector.load %arg6[%c14, %c0_110] : memref<16x64xf32, #tpu.memory_space<vmem>>, vector<1x64xf32>
    tpu.vector_store %arg6[%c14, %c0_110], %521 {strides = array<i32>} : memref<16x64xf32, #tpu.memory_space<vmem>>, vector<1x64xf32>,
    %523 = vector.extract_strided_slice %69 {offsets = [15, 0], sizes = [1, 256], strides = [1, 1]} : vector<16x256xf32> to vector<1x256xf32>
    %524 = arith.truncf %521 : vector<1x64xf32> to vector<1x64xbf16>
    %cst_111 = arith.constant dense<0.000000e+00> : vector<1x256xf32>
    %525 = tpu.matmul %524, %70, %cst_111 {dimension_numbers = #tpu.dot_dimension_numbers<[1], [0], [0], [1], [0, 0, 1, 1], [], []>} : vector<1x64xbf16>, vector<64x256xbf16>, vector<1x256xf32> -> vector<1x256xf32>
    %526 = arith.addf %523, %525 : vector<1x256xf32>
    %527 = vector.extract_strided_slice %526 {offsets = [0, 0], sizes = [1, 64], strides = [1, 1]} : vector<1x256xf32> to vector<1x64xf32>
    %528 = arith.negf %527 : vector<1x64xf32>
    %529 = math.exp %528 : vector<1x64xf32>
    %cst_112 = arith.constant 1.000000e+00 : f32
    %530 = vector.broadcast %cst_112 : f32 to vector<1x64xf32>
    %531 = arith.addf %530, %529 : vector<1x64xf32>
    %532 = arith.divf %530, %531 : vector<1x64xf32>
    %533 = vector.extract_strided_slice %526 {offsets = [0, 64], sizes = [1, 64], strides = [1, 1]} : vector<1x256xf32> to vector<1x64xf32>
    %534 = arith.negf %533 : vector<1x64xf32>
    %535 = math.exp %534 : vector<1x64xf32>
    %cst_113 = arith.constant 1.000000e+00 : f32
    %536 = vector.broadcast %cst_113 : f32 to vector<1x64xf32>
    %537 = arith.addf %536, %535 : vector<1x64xf32>
    %538 = arith.divf %536, %537 : vector<1x64xf32>
    %539 = vector.extract_strided_slice %526 {offsets = [0, 128], sizes = [1, 64], strides = [1, 1]} : vector<1x256xf32> to vector<1x64xf32>
    %540 = math.tanh %539 : vector<1x64xf32>
    %541 = vector.extract_strided_slice %526 {offsets = [0, 192], sizes = [1, 64], strides = [1, 1]} : vector<1x256xf32> to vector<1x64xf32>
    %542 = arith.negf %541 : vector<1x64xf32>
    %543 = math.exp %542 : vector<1x64xf32>
    %cst_114 = arith.constant 1.000000e+00 : f32
    %544 = vector.broadcast %cst_114 : f32 to vector<1x64xf32>
    %545 = arith.addf %544, %543 : vector<1x64xf32>
    %546 = arith.divf %544, %545 : vector<1x64xf32>
    %547 = arith.mulf %538, %519 : vector<1x64xf32>
    %548 = arith.mulf %532, %540 : vector<1x64xf32>
    %549 = arith.addf %547, %548 : vector<1x64xf32>
    %550 = math.tanh %549 : vector<1x64xf32>
    %551 = arith.mulf %546, %550 : vector<1x64xf32>
    %c15 = arith.constant 15 : index
    %c0_115 = arith.constant 0 : index
    %552 = vector.load %arg6[%c15, %c0_115] : memref<16x64xf32, #tpu.memory_space<vmem>>, vector<1x64xf32>
    tpu.vector_store %arg6[%c15, %c0_115], %551 {strides = array<i32>} : memref<16x64xf32, #tpu.memory_space<vmem>>, vector<1x64xf32>,
    %c0_116 = arith.constant 0 : index
    %c0_117 = arith.constant 0 : index
    %553 = vector.load %arg6[%c0_116, %c0_117] : memref<16x64xf32, #tpu.memory_space<vmem>>, vector<16x64xf32>
    %c0_118 = arith.constant 0 : index
    %c4_119 = arith.constant 4 : index
    %554 = vector.load %arg3[%c0_118, %c4_119] : memref<128x8xf32, #tpu.memory_space<vmem>>, vector<64x1xf32>
    %cst_120 = arith.constant dense<0.000000e+00> : vector<16x1xf32>
    %555 = tpu.matmul %553, %554, %cst_120 {dimension_numbers = #tpu.dot_dimension_numbers<[1], [0], [0], [1], [0, 0, 1, 1], [], []>} : vector<16x64xf32>, vector<64x1xf32>, vector<16x1xf32> -> vector<16x1xf32>
    %c3_121 = arith.constant 3 : index
    %c2_122 = arith.constant 2 : index
    %556 = vector.load %arg4[%c3_121, %c2_122] : memref<4x256xf32, #tpu.memory_space<vmem>>, vector<1x1xf32>
    %557 = vector.broadcast %556 : vector<1x1xf32> to vector<16x1xf32>
    %558 = arith.addf %555, %557 : vector<16x1xf32>
    %cst_123 = arith.constant dense<0xFF800000> : vector<1xf32>
    %559 = vector.multi_reduction <maximumf>, %558, %cst_123 [0] : vector<16x1xf32> to vector<1xf32>
    %560 = vector.shape_cast %559 : vector<1xf32> to vector<1x1xf32>
    %561 = vector.broadcast %560 : vector<1x1xf32> to vector<16x1xf32>
    %562 = arith.subf %558, %561 : vector<16x1xf32>
    %563 = math.exp %562 : vector<16x1xf32>
    %cst_124 = arith.constant dense<0.000000e+00> : vector<1xf32>
    %564 = vector.multi_reduction <add>, %563, %cst_124 [0] : vector<16x1xf32> to vector<1xf32>
    %565 = vector.shape_cast %564 : vector<1xf32> to vector<1x1xf32>
    %566 = vector.broadcast %565 : vector<1x1xf32> to vector<16x1xf32>
    %567 = arith.divf %563, %566 : vector<16x1xf32>
    %568 = vector.broadcast %567 : vector<16x1xf32> to vector<16x64xf32>
    %569 = arith.mulf %568, %553 : vector<16x64xf32>
    %cst_125 = arith.constant dense<0.000000e+00> : vector<64xf32>
    %570 = vector.multi_reduction <add>, %569, %cst_125 [0] : vector<16x64xf32> to vector<64xf32>
    %571 = vector.shape_cast %570 : vector<64xf32> to vector<1x64xf32>
    %c0_126 = arith.constant 0 : index
    %c5_127 = arith.constant 5 : index
    %572 = vector.load %arg3[%c0_126, %c5_127] : memref<128x8xf32, #tpu.memory_space<vmem>>, vector<64x2xf32>
    %cst_128 = arith.constant dense<0.000000e+00> : vector<1x2xf32>
    %573 = tpu.matmul %571, %572, %cst_128 {dimension_numbers = #tpu.dot_dimension_numbers<[1], [0], [0], [1], [0, 0, 1, 1], [], []>} : vector<1x64xf32>, vector<64x2xf32>, vector<1x2xf32> -> vector<1x2xf32>
    %c3_129 = arith.constant 3 : index
    %c0_130 = arith.constant 0 : index
    %574 = vector.load %arg4[%c3_129, %c0_130] : memref<4x256xf32, #tpu.memory_space<vmem>>, vector<1x2xf32>
    %575 = arith.addf %573, %574 : vector<1x2xf32>
    %cst_131 = arith.constant dense<0xFF800000> : vector<1xf32>
    %576 = vector.multi_reduction <maximumf>, %575, %cst_131 [1] : vector<1x2xf32> to vector<1xf32>
    %577 = vector.shape_cast %576 : vector<1xf32> to vector<1x1xf32>
    %578 = vector.broadcast %577 : vector<1x1xf32> to vector<1x2xf32>
    %579 = arith.subf %575, %578 : vector<1x2xf32>
    %580 = math.exp %579 : vector<1x2xf32>
    %cst_132 = arith.constant dense<0.000000e+00> : vector<1xf32>
    %581 = vector.multi_reduction <add>, %580, %cst_132 [1] : vector<1x2xf32> to vector<1xf32>
    %582 = vector.shape_cast %581 : vector<1xf32> to vector<1x1xf32>
    %583 = vector.broadcast %582 : vector<1x1xf32> to vector<1x2xf32>
    %584 = arith.divf %580, %583 : vector<1x2xf32>
    %c0_133 = arith.constant 0 : index
    %c0_134 = arith.constant 0 : index
    %585 = vector.load %arg5[%c0_133, %c0_134] : memref<1x2xf32, #tpu.memory_space<vmem>>, vector<1x2xf32>
    tpu.vector_store %arg5[%c0_133, %c0_134], %584 {strides = array<i32>} : memref<1x2xf32, #tpu.memory_space<vmem>>, vector<1x2xf32>,
    return
  }
}

</mosaic_0001>

<llo_original>
// kernel: spatio_temporal_gnn_forward.1
$region0: #{spatio_temporal_gnn_forward.1}
  #allocation0 [shape = 'u32[]', space=smem, size = 0x4, offset = 0x4, fixed_abs, tag = 'smem constant byte address 0x4 - core index']
  #allocation1 [shape = 'u32[144,128]{1,0:T(1,128)}', space=vmem, size = 0x12000, scoped, tag = 'internal scratch']
  #allocation2 [shape = 'f32[16,64]{1,0:T(8,128)}', space=vmem, size = 0x2000, scoped, tag = 'scratch operand']
  %s0 = inlined_call_operand.vmem [shape: f32[16,128], index: 0, kind: input, shape index: {}]
  %s1 = inlined_call_operand.vmem [shape: f32[16,16], index: 1, kind: input, shape index: {}]
  %s2 = inlined_call_operand.hbm [shape: bf16[320,256], index: 2, kind: input, shape index: {}]
  %s3 = inlined_call_operand.vmem [shape: f32[128,8], index: 3, kind: input, shape index: {}]
  %s4 = inlined_call_operand.vmem [shape: f32[4,256], index: 4, kind: input, shape index: {}]
  %s5 = inlined_call_operand.hbm [shape: f32[1,2], index: 5, kind: output, shape index: {}]
  %s6 = sld [smem:[#allocation0]]
  $region34: #{spatio_temporal_gnn_forward.1} parent=0
    _
  %s8 = ssub.s32 1, %s6
  %s9 = scalar_select 0, %s8, %s6
  $region1: #{spatio_temporal_gnn_forward.1} parent=0
    #allocation3 [shape = 'u8[163840]{0}', space=vmem, size = 0x28000, scoped, tag = 'input window, operand 2, single buffered']
    #allocation4 [shape = 's32[1]{0}', space=sflag, size = 0x4, scoped, tag = 'scoped memory for spatio_temporal_gnn_forward.1']
    #allocation5 [shape = 's32[1]{0}', space=sflag, size = 0x4, scoped, tag = 'scoped memory for spatio_temporal_gnn_forward.1']
    #allocation6 [shape = 'u8[512]{0}', space=vmem, size = 0x400, scoped, tag = 'output window, operand 0, single buffered']
    %10 = vsyncpa [#allocation4], 0
    %11 = vsyncpa [#allocation5], 0
    // Predicated region
    $region2: #{spatio_temporal_gnn_forward.1} parent=1 // pred_check
      _
    $region3: #{spatio_temporal_gnn_forward.1} parent=1 // pred_check_branch
      %13 = sbr.rel (0) target = $region5
    $region4: #{spatio_temporal_gnn_forward.1} parent=1 // pred_region
      _
    $region5: #{spatio_temporal_gnn_forward.1} parent=1 // pred_fallthru
      _
    // Predicated region
    $region6: #{spatio_temporal_gnn_forward.1} parent=1 // pred_check
      _
    $region7: #{spatio_temporal_gnn_forward.1} parent=1 // pred_check_branch
      %15 = sbr.rel (0) target = $region9
    $region8: #{spatio_temporal_gnn_forward.1} parent=1 // pred_region
      _
    $region9: #{spatio_temporal_gnn_forward.1} parent=1 // pred_fallthru
      _
    // Predicated region
    $region10: #{spatio_temporal_gnn_forward.1} parent=1 // pred_check
      _
    $region11: #{spatio_temporal_gnn_forward.1} parent=1 // pred_check_branch
      %17 = sbr.rel (0) target = $region13
    $region12: #{spatio_temporal_gnn_forward.1} parent=1 // pred_region
      %s19 = ssub.s32 5120, 5120
      %20 = vsyncadd [#allocation4], %s19
      %s21 = sshll.u32 [#allocation3], 4
      %s22 = int_to_ptr.vmem [resolvable:$true] %s21
      %27 = dma.hbm_to_vmem [thread:$0]  %s2, 5120, %s22, [#allocation4], 128, 128, 8
    $region13: #{spatio_temporal_gnn_forward.1} parent=1 // pred_fallthru
      _
    // Predicated region
    $region14: #{spatio_temporal_gnn_forward.1} parent=1 // pred_check
      _
    $region15: #{spatio_temporal_gnn_forward.1} parent=1 // pred_check_branch
      %29 = sbr.rel (0) target = $region17
    $region16: #{spatio_temporal_gnn_forward.1} parent=1 // pred_region
      _
    $region17: #{spatio_temporal_gnn_forward.1} parent=1 // pred_fallthru
      _
    // Predicated region
    $region18: #{spatio_temporal_gnn_forward.1} parent=1 // pred_check
      _
    $region19: #{spatio_temporal_gnn_forward.1} parent=1 // pred_check_branch
      %31 = sbr.rel (0) target = $region21
    $region20: #{spatio_temporal_gnn_forward.1} parent=1 // pred_region
      _
    $region21: #{spatio_temporal_gnn_forward.1} parent=1 // pred_fallthru
      _
    // Predicated region
    $region22: #{spatio_temporal_gnn_forward.1} parent=1 // pred_check
      _
    $region23: #{spatio_temporal_gnn_forward.1} parent=1 // pred_check_branch
      %33 = sbr.rel (0) target = $region25
    $region24: #{spatio_temporal_gnn_forward.1} parent=1 // pred_region
      %34 = dma.done [#allocation4], 5120
    $region25: #{spatio_temporal_gnn_forward.1} parent=1 // pred_fallthru
      _
    %v36 = vld [vmem:[%s1] sm:$0xff]
    %v37 = vld [vmem:[%s1 + $0x8] sm:$0xff]
    %v38 = vld [vmem:[%s0] sm:$0xff]
    %v39 = vld [vmem:[%s0 + $0x8] sm:$0xff]
    %v40 = vld [vmem:[#allocation3] sm:$0xf]
    %v41 = vld [vmem:[#allocation3 + $0x8] sm:$0xf]
    %v42 = vld [vmem:[#allocation3 + $0x10] sm:$0xf]
    %v43 = vld [vmem:[#allocation3 + $0x18] sm:$0xf]
    %v44 = vld [vmem:[#allocation3 + $0x20] sm:$0xf]
    %v45 = vld [vmem:[#allocation3 + $0x28] sm:$0xf]
    %v46 = vld [vmem:[#allocation3 + $0x30] sm:$0xf]
    %v47 = vld [vmem:[#allocation3 + $0x38] sm:$0xf]
    %v48 = vld [vmem:[#allocation3 + $0x40] sm:$0xf]
    %v49 = vld [vmem:[#allocation3 + $0x48] sm:$0xf]
    %v50 = vld [vmem:[#allocation3 + $0x50] sm:$0xf]
    %v51 = vld [vmem:[#allocation3 + $0x58] sm:$0xf]
    %v52 = vld [vmem:[#allocation3 + $0x60] sm:$0xf]
    %v53 = vld [vmem:[#allocation3 + $0x68] sm:$0xf]
    %v54 = vld [vmem:[#allocation3 + $0x70] sm:$0xf]
    %v55 = vld [vmem:[#allocation3 + $0x78] sm:$0xf]
    %v56 = vld [vmem:[%s3] sm:$0xff]
    %v57 = vld [vmem:[%s3 + $0x8] sm:$0xff]
    %v58 = vld [vmem:[%s3 + $0x10] sm:$0xff]
    %v59 = vld [vmem:[%s3 + $0x18] sm:$0xff]
    %v60 = vld [vmem:[%s3 + $0x20] sm:$0xff]
    %v61 = vld [vmem:[%s3 + $0x28] sm:$0xff]
    %v62 = vld [vmem:[%s3 + $0x30] sm:$0xff]
    %v63 = vld [vmem:[%s3 + $0x38] sm:$0xff]
    %v64 = vld [vmem:[%s3 + $0x40] sm:$0xff]
    %v65 = vld [vmem:[%s3 + $0x48] sm:$0xff]
    %v66 = vld [vmem:[%s3 + $0x50] sm:$0xff]
    %v67 = vld [vmem:[%s3 + $0x58] sm:$0xff]
    %v68 = vld [vmem:[%s3 + $0x60] sm:$0xff]
    %v69 = vld [vmem:[%s3 + $0x68] sm:$0xff]
    %v70 = vld [vmem:[%s3 + $0x70] sm:$0xff]
    %v71 = vld [vmem:[%s3 + $0x78] sm:$0xff]
    %v72 = vld [vmem:[%s4] sm:$0x1]
    %v73 = vpack.c.bf16 %v39, %v38
    %v90 = vunpack.c.l.b16 %v40
    %v91 = vunpack.c.l.b16 %v41
    %v92 = vunpack.c.l.b16 %v42
    %v93 = vunpack.c.l.b16 %v43
    %v94 = vunpack.c.l.b16 %v44
    %v95 = vunpack.c.l.b16 %v45
    %v96 = vunpack.c.l.b16 %v46
    %v97 = vunpack.c.l.b16 %v47
    %v98 = vunpack.c.l.b16 %v48
    %v99 = vunpack.c.l.b16 %v49
    %v100 = vunpack.c.l.b16 %v50
    %v101 = vunpack.c.l.b16 %v51
    %v102 = vunpack.c.l.b16 %v52
    %v103 = vunpack.c.l.b16 %v53
    %v104 = vunpack.c.l.b16 %v54
    %v105 = vunpack.c.l.b16 %v55
    %v106 = vpack.c.b16 %v91, %v90
    %v107 = vpack.c.b16 %v93, %v92
    %v108 = vpack.c.b16 %v95, %v94
    %v109 = vpack.c.b16 %v97, %v96
    %v110 = vpack.c.b16 %v99, %v98
    %v111 = vpack.c.b16 %v101, %v100
    %v112 = vpack.c.b16 %v103, %v102
    %v113 = vpack.c.b16 %v105, %v104
    %122 = vmatprep.subr.bf16.mxu0 0
    %123 = vmatpush1.bf16.msra.mxu0 %v106
    %124 = vmatprep.subr.bf16.mxu0 0
    %125 = vmatpush1.bf16.msra.mxu0 %v107
    %126 = vmatprep.subr.bf16.mxu0 0
    %127 = vmatpush1.bf16.msra.mxu0 %v108
    %128 = vmatprep.subr.bf16.mxu0 0
    %129 = vmatpush1.bf16.msra.mxu0 %v109
    %130 = vmatprep.subr.bf16.mxu0 0
    %131 = vmatpush1.bf16.msra.mxu0 %v110
    %132 = vmatprep.subr.bf16.mxu0 0
    %133 = vmatpush1.bf16.msra.mxu0 %v111
    %134 = vmatprep.subr.bf16.mxu0 0
    %135 = vmatpush1.bf16.msra.mxu0 %v112
    %136 = vmatprep.subr.bf16.mxu0 0
    %137 = vmatpush1.bf16.msra.mxu0 %v113
    %138 = vmatprep.subr.bf16.mxu0 0
    %139 = vmatpush1.bf16.msra.mxu0 0
    %140 = vmatprep.subr.bf16.mxu0 0
    %141 = vmatpush1.bf16.msra.mxu0 0
    %142 = vmatprep.subr.bf16.mxu0 0
    %143 = vmatpush1.bf16.msra.mxu0 0
    %144 = vmatprep.subr.bf16.mxu0 0
    %145 = vmatpush1.bf16.msra.mxu0 0
    %146 = vmatprep.subr.bf16.mxu0 0
    %147 = vmatpush1.bf16.msra.mxu0 0
    %148 = vmatprep.subr.bf16.mxu0 0
    %149 = vmatpush1.bf16.msra.mxu0 0
    %150 = vmatprep.subr.bf16.mxu0 0
    %151 = vmatpush1.bf16.msra.mxu0 0
    %152 = vmatprep.subr.bf16.mxu0 0
    %153 = vmatpush1.bf16.msra.mxu0 0
    %154 = vmatprep.mubr.bf16.mxu0 0
    %155 = vmatmul.mubr.bf16.gmra.mrb[0].mxu0 %v73
    %v156 = vpop.f32.mrb[0].mxu0
    %v157 = vadd.f32 0.0, %v156
    %v158 = vpop.f32.mrb[0].mxu0
    %v159 = vpop.f32.mrb[0].mxu0
    %v160 = vadd.f32 0.0, %v159
    %v161 = vpop.f32.mrb[0].mxu0
    %162 = vdwg.mxu0
    %163 = vmatprep.subr.mxu0 0.0
    %164 = vmatpush1.msra.mxu0 %v56
    %165 = vmatprep.subr.mxu0 0.0
    %166 = vmatpush1.msra.mxu0 %v57
    %167 = vmatprep.subr.mxu0 0.0
    %168 = vmatpush1.msra.mxu0 %v58
    %169 = vmatprep.subr.mxu0 0.0
    %170 = vmatpush1.msra.mxu0 %v59
    %171 = vmatprep.subr.mxu0 0.0
    %172 = vmatpush1.msra.mxu0 %v60
    %173 = vmatprep.subr.mxu0 0.0
    %174 = vmatpush1.msra.mxu0 %v61
    %175 = vmatprep.subr.mxu0 0.0
    %176 = vmatpush1.msra.mxu0 %v62
    %177 = vmatprep.subr.mxu0 0.0
    %178 = vmatpush1.msra.mxu0 %v63
    %179 = vmatprep.subr.mxu0 0.0
    %180 = vmatpush1.msra.mxu0 %v64
    %181 = vmatprep.subr.mxu0 0.0
    %182 = vmatpush1.msra.mxu0 %v65
    %183 = vmatprep.subr.mxu0 0.0
    %184 = vmatpush1.msra.mxu0 %v66
    %185 = vmatprep.subr.mxu0 0.0
    %186 = vmatpush1.msra.mxu0 %v67
    %187 = vmatprep.subr.mxu0 0.0
    %188 = vmatpush1.msra.mxu0 %v68
    %189 = vmatprep.subr.mxu0 0.0
    %190 = vmatpush1.msra.mxu0 %v69
    %191 = vmatprep.subr.mxu0 0.0
    %192 = vmatpush1.msra.mxu0 %v70
    %193 = vmatprep.subr.mxu0 0.0
    %194 = vmatpush1.msra.mxu0 %v71
    %195 = vmatprep.subr.mxu0 0.0
    %196 = vmatpush1.msra.mxu0 0.0
    %197 = vmatprep.subr.mxu0 0.0
    %198 = vmatpush1.msra.mxu0 0.0
    %199 = vmatprep.subr.mxu0 0.0
    %200 = vmatpush1.msra.mxu0 0.0
    %201 = vmatprep.subr.mxu0 0.0
    %202 = vmatpush1.msra.mxu0 0.0
    %203 = vmatprep.subr.mxu0 0.0
    %204 = vmatpush1.msra.mxu0 0.0
    %205 = vmatprep.subr.mxu0 0.0
    %206 = vmatpush1.msra.mxu0 0.0
    %207 = vmatprep.subr.mxu0 0.0
    %208 = vmatpush1.msra.mxu0 0.0
    %209 = vmatprep.subr.mxu0 0.0
    %210 = vmatpush1.msra.mxu0 0.0
    %211 = vmatprep.subr.mxu0 0.0
    %212 = vmatpush1.msra.mxu0 0.0
    %213 = vmatprep.subr.mxu0 0.0
    %214 = vmatpush1.msra.mxu0 0.0
    %215 = vmatprep.subr.mxu0 0.0
    %216 = vmatpush1.msra.mxu0 0.0
    %217 = vmatprep.subr.mxu0 0.0
    %218 = vmatpush1.msra.mxu0 0.0
    %219 = vmatprep.subr.mxu0 0.0
    %220 = vmatpush1.msra.mxu0 0.0
    %221 = vmatprep.subr.mxu0 0.0
    %222 = vmatpush1.msra.mxu0 0.0
    %223 = vmatprep.subr.mxu0 0.0
    %224 = vmatpush1.msra.mxu0 0.0
    %225 = vmatprep.subr.mxu0 0.0
    %226 = vmatpush1.msra.mxu0 0.0
    %227 = vmatprep.mubr.f32.mxu0 0.0
    %228 = vmatmul.mubr.f32.gmra.mrb[0].mxu0 %v157
    %v229 = vpop.f32.mrb[0].mxu0
    %v230 = vadd.f32 0.0, %v229
    %v231 = vpop.f32.mrb[0].mxu0
    %232 = vmatprep.mubr.f32.mxu0 0.0
    %233 = vmatmul.mubr.f32.gmra.mrb[0].mxu0 %v160
    %v234 = vpop.f32.mrb[0].mxu0
    %v235 = vadd.f32 0.0, %v234
    %v236 = vpop.f32.mrb[0].mxu0
    %237 = vdwg.mxu0
    %238 = vxpose.xlu0.b32.start [1/16] %v230, 128
    %239 = vxpose.xlu0.b32.cont [2/16] %v235, 128
    %240 = vxpose.xlu0.b32.cont [3/16] 0.0, 128
    %241 = vxpose.xlu0.b32.cont [4/16] 0.0, 128
    %242 = vxpose.xlu0.b32.cont [5/16] 0.0, 128
    %243 = vxpose.xlu0.b32.cont [6/16] 0.0, 128
    %244 = vxpose.xlu0.b32.cont [7/16] 0.0, 128
    %245 = vxpose.xlu0.b32.cont [8/16] 0.0, 128
    %246 = vxpose.xlu0.b32.cont [9/16] 0.0, 128
    %247 = vxpose.xlu0.b32.cont [10/16] 0.0, 128
    %248 = vxpose.xlu0.b32.cont [11/16] 0.0, 128
    %249 = vxpose.xlu0.b32.cont [12/16] 0.0, 128
    %250 = vxpose.xlu0.b32.cont [13/16] 0.0, 128
    %251 = vxpose.xlu0.b32.cont [14/16] 0.0, 128
    %252 = vxpose.xlu0.b32.cont [15/16] 0.0, 128
    %253 = vxpose.xlu0.b32.end [16/16] 0.0, 128
    %v254 = vpop.trf.xlu0
    %v255 = vpop.trf.xlu0
    %v256 = vpop.trf.xlu0
    %v257 = vpop.trf.xlu0
    %v258 = vpop.trf.xlu0
    %v259 = vpop.trf.xlu0
    %v260 = vpop.trf.xlu0
    %v261 = vpop.trf.xlu0
    %v262 = vpop.trf.xlu0
    %v263 = vpop.trf.xlu0
    %v264 = vpop.trf.xlu0
    %v265 = vpop.trf.xlu0
    %v266 = vpop.trf.xlu0
    %v267 = vpop.trf.xlu0
    %v268 = vpop.trf.xlu0
    %v269 = vpop.trf.xlu0
    %271 = vset.pattern.permute.xlu0 1
    %272 = vperm.xlu0 %271, %v230
    %v273 = vpop.permute.xlu0 %272
    %276 = vset.pattern.permute.xlu0 1
    %277 = vperm.xlu0 %276, %v235
    %v278 = vpop.permute.xlu0 %277
    %v280 = vlaneseq
    %v281 = vshrl.u32 %v280, 7
    %v282 = vsub.s32 0, %v281
    %v283 = vrot.slane %v254, %v282
    %v284 = vadd.f32 %v273, %v283
    %v285 = vadd.f32 %v278, %v283
    %v286 = vmul.f32 %v284, 0.2
    %v287 = vmul.f32 %v285, 0.2
    %v288 = vmax.f32 %v284, %v286
    %v289 = vmax.f32 %v285, %v287
    %v290 = vadd.f32 %v288, %v36
    %v291 = vadd.f32 %v289, %v37
    %vm292 = vcmask 130048
    %v293 = vsel %vm292, %v290, -inf
    %294 = vmax.xlane.f32.xlu0 %v293
    %v295 = vpop.xlane.xlu0 %294
    %v296 = vsel %vm292, %v291, -inf
    %297 = vmax.xlane.f32.xlu0 %v296
    %v298 = vpop.xlane.xlu0 %297
    %v299 = vsub.f32 %v290, %v295
    %v300 = vsub.f32 %v291, %v298
    %v301 = vmul.f32 %v299, 1.442695
    %v302 = vpow.pop %v301
    %v303 = vmul.f32 %v300, 1.442695
    %v304 = vpow.pop %v303
    %v305 = vsel %vm292, %v302, 0.0
    %306 = vadd.xlane.f32.xlu0 %v305
    %v307 = vpop.xlane.xlu0 %306
    %v308 = vsel %vm292, %v304, 0.0
    %309 = vadd.xlane.f32.xlu0 %v308
    %v310 = vpop.xlane.xlu0 %309
    %v311 = vrcp.pop %v307
    %v312 = vrcp.pop %v310
    %v313 = vmul.f32 %v302, %v311
    %v314 = vmul.f32 %v304, %v312
    %v315 = vlaneseq
    %v316 = vshrl.u32 %v315, 7
    %v317 = vsub.s32 0, %v316
    %v318 = vrot.slane %v72, %v317
    %v320 = vsel %vm292, %v313, 0
    %v323 = vsel %vm292, %v314, 0
    %325 = vmatprep.subr.mxu0 0.0
    %326 = vmatpush1.msra.mxu0 %v157
    %327 = vmatprep.subr.mxu0 0.0
    %328 = vmatpush1.msra.mxu0 %v160
    %329 = vmatprep.subr.mxu0 0.0
    %330 = vmatpush1.msra.mxu0 0.0
    %331 = vmatprep.subr.mxu0 0.0
    %332 = vmatpush1.msra.mxu0 0.0
    %333 = vmatprep.subr.mxu0 0.0
    %334 = vmatpush1.msra.mxu0 0.0
    %335 = vmatprep.subr.mxu0 0.0
    %336 = vmatpush1.msra.mxu0 0.0
    %337 = vmatprep.subr.mxu0 0.0
    %338 = vmatpush1.msra.mxu0 0.0
    %339 = vmatprep.subr.mxu0 0.0
    %340 = vmatpush1.msra.mxu0 0.0
    %341 = vmatprep.subr.mxu0 0.0
    %342 = vmatpush1.msra.mxu0 0.0
    %343 = vmatprep.subr.mxu0 0.0
    %344 = vmatpush1.msra.mxu0 0.0
    %345 = vmatprep.subr.mxu0 0.0
    %346 = vmatpush1.msra.mxu0 0.0
    %347 = vmatprep.subr.mxu0 0.0
    %348 = vmatpush1.msra.mxu0 0.0
    %349 = vmatprep.subr.mxu0 0.0
    %350 = vmatpush1.msra.mxu0 0.0
    %351 = vmatprep.subr.mxu0 0.0
    %352 = vmatpush1.msra.mxu0 0.0
    %353 = vmatprep.subr.mxu0 0.0
    %354 = vmatpush1.msra.mxu0 0.0
    %355 = vmatprep.subr.mxu0 0.0
    %356 = vmatpush1.msra.mxu0 0.0
    %357 = vmatprep.subr.mxu0 0.0
    %358 = vmatpush1.msra.mxu0 0.0
    %359 = vmatprep.subr.mxu0 0.0
    %360 = vmatpush1.msra.mxu0 0.0
    %361 = vmatprep.subr.mxu0 0.0
    %362 = vmatpush1.msra.mxu0 0.0
    %363 = vmatprep.subr.mxu0 0.0
    %364 = vmatpush1.msra.mxu0 0.0
    %365 = vmatprep.subr.mxu0 0.0
    %366 = vmatpush1.msra.mxu0 0.0
    %367 = vmatprep.subr.mxu0 0.0
    %368 = vmatpush1.msra.mxu0 0.0
    %369 = vmatprep.subr.mxu0 0.0
    %370 = vmatpush1.msra.mxu0 0.0
    %371 = vmatprep.subr.mxu0 0.0
    %372 = vmatpush1.msra.mxu0 0.0
    %373 = vmatprep.subr.mxu0 0.0
    %374 = vmatpush1.msra.mxu0 0.0
    %375 = vmatprep.subr.mxu0 0.0
    %376 = vmatpush1.msra.mxu0 0.0
    %377 = vmatprep.subr.mxu0 0.0
    %378 = vmatpush1.msra.mxu0 0.0
    %379 = vmatprep.subr.mxu0 0.0
    %380 = vmatpush1.msra.mxu0 0.0
    %381 = vmatprep.subr.mxu0 0.0
    %382 = vmatpush1.msra.mxu0 0.0
    %383 = vmatprep.subr.mxu0 0.0
    %384 = vmatpush1.msra.mxu0 0.0
    %385 = vmatprep.subr.mxu0 0.0
    %386 = vmatpush1.msra.mxu0 0.0
    %387 = vmatprep.subr.mxu0 0.0
    %388 = vmatpush1.msra.mxu0 0.0
    %389 = vmatprep.mubr.f32.mxu0 0.0
    %390 = vmatmul.mubr.f32.gmra.mrb[0].mxu0 %v320
    %v391 = vpop.f32.mrb[0].mxu0
    %v392 = vadd.f32 %v318, %v391
    %v393 = vpop.f32.mrb[0].mxu0
    %394 = vmatprep.mubr.f32.mxu0 0.0
    %395 = vmatmul.mubr.f32.gmra.mrb[0].mxu0 %v323
    %v396 = vpop.f32.mrb[0].mxu0
    %v397 = vadd.f32 %v318, %v396
    %v398 = vpop.f32.mrb[0].mxu0
    %399 = vdwg.mxu0
    %v400 = vmax.f32 %v392, 0.0
    %v401 = vmax.f32 %v397, 0.0
    %v402 = vld [vmem:[#allocation3 + $0x4] sm:$0xf]
    %v403 = vld [vmem:[#allocation3 + $0xc] sm:$0xf]
    %v404 = vld [vmem:[#allocation3 + $0x14] sm:$0xf]
    %v405 = vld [vmem:[#allocation3 + $0x1c] sm:$0xf]
    %v406 = vld [vmem:[#allocation3 + $0x24] sm:$0xf]
    %v407 = vld [vmem:[#allocation3 + $0x2c] sm:$0xf]
    %v408 = vld [vmem:[#allocation3 + $0x34] sm:$0xf]
    %v409 = vld [vmem:[#allocation3 + $0x3c] sm:$0xf]
    %v410 = vld [vmem:[#allocation3 + $0x44] sm:$0xf]
    %v411 = vld [vmem:[#allocation3 + $0x4c] sm:$0xf]
    %v412 = vld [vmem:[#allocation3 + $0x54] sm:$0xf]
    %v413 = vld [vmem:[#allocation3 + $0x5c] sm:$0xf]
    %v414 = vld [vmem:[#allocation3 + $0x64] sm:$0xf]
    %v415 = vld [vmem:[#allocation3 + $0x6c] sm:$0xf]
    %v416 = vld [vmem:[#allocation3 + $0x74] sm:$0xf]
    %v417 = vld [vmem:[#allocation3 + $0x7c] sm:$0xf]
    %v418 = vld [vmem:[%s4 + $0x1] sm:$0x1]
    %v419 = vpack.c.bf16 %v401, %v400
    %v436 = vunpack.c.l.b16 %v402
    %v437 = vunpack.c.l.b16 %v403
    %v438 = vunpack.c.l.b16 %v404
    %v439 = vunpack.c.l.b16 %v405
    %v440 = vunpack.c.l.b16 %v406
    %v441 = vunpack.c.l.b16 %v407
    %v442 = vunpack.c.l.b16 %v408
    %v443 = vunpack.c.l.b16 %v409
    %v444 = vunpack.c.l.b16 %v410
    %v445 = vunpack.c.l.b16 %v411
    %v446 = vunpack.c.l.b16 %v412
    %v447 = vunpack.c.l.b16 %v413
    %v448 = vunpack.c.l.b16 %v414
    %v449 = vunpack.c.l.b16 %v415
    %v450 = vunpack.c.l.b16 %v416
    %v451 = vunpack.c.l.b16 %v417
    %v452 = vpack.c.b16 %v437, %v436
    %v453 = vpack.c.b16 %v439, %v438
    %v454 = vpack.c.b16 %v441, %v440
    %v455 = vpack.c.b16 %v443, %v442
    %v456 = vpack.c.b16 %v445, %v444
    %v457 = vpack.c.b16 %v447, %v446
    %v458 = vpack.c.b16 %v449, %v448
    %v459 = vpack.c.b16 %v451, %v450
    %468 = vmatprep.subr.bf16.mxu0 0
    %469 = vmatpush1.bf16.msra.mxu0 %v452
    %470 = vmatprep.subr.bf16.mxu0 0
    %471 = vmatpush1.bf16.msra.mxu0 %v453
    %472 = vmatprep.subr.bf16.mxu0 0
    %473 = vmatpush1.bf16.msra.mxu0 %v454
    %474 = vmatprep.subr.bf16.mxu0 0
    %475 = vmatpush1.bf16.msra.mxu0 %v455
    %476 = vmatprep.subr.bf16.mxu0 0
    %477 = vmatpush1.bf16.msra.mxu0 %v456
    %478 = vmatprep.subr.bf16.mxu0 0
    %479 = vmatpush1.bf16.msra.mxu0 %v457
    %480 = vmatprep.subr.bf16.mxu0 0
    %481 = vmatpush1.bf16.msra.mxu0 %v458
    %482 = vmatprep.subr.bf16.mxu0 0
    %483 = vmatpush1.bf16.msra.mxu0 %v459
    %484 = vmatprep.subr.bf16.mxu0 0
    %485 = vmatpush1.bf16.msra.mxu0 0
    %486 = vmatprep.subr.bf16.mxu0 0
    %487 = vmatpush1.bf16.msra.mxu0 0
    %488 = vmatprep.subr.bf16.mxu0 0
    %489 = vmatpush1.bf16.msra.mxu0 0
    %490 = vmatprep.subr.bf16.mxu0 0
    %491 = vmatpush1.bf16.msra.mxu0 0
    %492 = vmatprep.subr.bf16.mxu0 0
    %493 = vmatpush1.bf16.msra.mxu0 0
    %494 = vmatprep.subr.bf16.mxu0 0
    %495 = vmatpush1.bf16.msra.mxu0 0
    %496 = vmatprep.subr.bf16.mxu0 0
    %497 = vmatpush1.bf16.msra.mxu0 0
    %498 = vmatprep.subr.bf16.mxu0 0
    %499 = vmatpush1.bf16.msra.mxu0 0
    %500 = vmatprep.mubr.bf16.mxu0 0
    %501 = vmatmul.mubr.bf16.gmra.mrb[0].mxu0 %v419
    %v502 = vpop.f32.mrb[0].mxu0
    %v503 = vadd.f32 0.0, %v502
    %v504 = vpop.f32.mrb[0].mxu0
    %v505 = vpop.f32.mrb[0].mxu0
    %v506 = vadd.f32 0.0, %v505
    %v507 = vpop.f32.mrb[0].mxu0
    %508 = vdwg.mxu0
    %525 = vrot.lane.b32.xlu0 %v56, 126
    %v526 = vpop.permute.xlu0 %525
    %527 = vrot.lane.b32.xlu0 %v57, 126
    %v528 = vpop.permute.xlu0 %527
    %529 = vrot.lane.b32.xlu0 %v58, 126
    %v530 = vpop.permute.xlu0 %529
    %531 = vrot.lane.b32.xlu0 %v59, 126
    %v532 = vpop.permute.xlu0 %531
    %533 = vrot.lane.b32.xlu0 %v60, 126
    %v534 = vpop.permute.xlu0 %533
    %535 = vrot.lane.b32.xlu0 %v61, 126
    %v536 = vpop.permute.xlu0 %535
    %537 = vrot.lane.b32.xlu0 %v62, 126
    %v538 = vpop.permute.xlu0 %537
    %539 = vrot.lane.b32.xlu0 %v63, 126
    %v540 = vpop.permute.xlu0 %539
    %541 = vrot.lane.b32.xlu0 %v64, 126
    %v542 = vpop.permute.xlu0 %541
    %543 = vrot.lane.b32.xlu0 %v65, 126
    %v544 = vpop.permute.xlu0 %543
    %545 = vrot.lane.b32.xlu0 %v66, 126
    %v546 = vpop.permute.xlu0 %545
    %547 = vrot.lane.b32.xlu0 %v67, 126
    %v548 = vpop.permute.xlu0 %547
    %549 = vrot.lane.b32.xlu0 %v68, 126
    %v550 = vpop.permute.xlu0 %549
    %551 = vrot.lane.b32.xlu0 %v69, 126
    %v552 = vpop.permute.xlu0 %551
    %553 = vrot.lane.b32.xlu0 %v70, 126
    %v554 = vpop.permute.xlu0 %553
    %555 = vrot.lane.b32.xlu0 %v71, 126
    %v556 = vpop.permute.xlu0 %555
    %573 = vmatprep.subr.mxu0 0.0
    %574 = vmatpush1.msra.mxu0 %v526
    %575 = vmatprep.subr.mxu0 0.0
    %576 = vmatpush1.msra.mxu0 %v528
    %577 = vmatprep.subr.mxu0 0.0
    %578 = vmatpush1.msra.mxu0 %v530
    %579 = vmatprep.subr.mxu0 0.0
    %580 = vmatpush1.msra.mxu0 %v532
    %581 = vmatprep.subr.mxu0 0.0
    %582 = vmatpush1.msra.mxu0 %v534
    %583 = vmatprep.subr.mxu0 0.0
    %584 = vmatpush1.msra.mxu0 %v536
    %585 = vmatprep.subr.mxu0 0.0
    %586 = vmatpush1.msra.mxu0 %v538
    %587 = vmatprep.subr.mxu0 0.0
    %588 = vmatpush1.msra.mxu0 %v540
    %589 = vmatprep.subr.mxu0 0.0
    %590 = vmatpush1.msra.mxu0 %v542
    %591 = vmatprep.subr.mxu0 0.0
    %592 = vmatpush1.msra.mxu0 %v544
    %593 = vmatprep.subr.mxu0 0.0
    %594 = vmatpush1.msra.mxu0 %v546
    %595 = vmatprep.subr.mxu0 0.0
    %596 = vmatpush1.msra.mxu0 %v548
    %597 = vmatprep.subr.mxu0 0.0
    %598 = vmatpush1.msra.mxu0 %v550
    %599 = vmatprep.subr.mxu0 0.0
    %600 = vmatpush1.msra.mxu0 %v552
    %601 = vmatprep.subr.mxu0 0.0
    %602 = vmatpush1.msra.mxu0 %v554
    %603 = vmatprep.subr.mxu0 0.0
    %604 = vmatpush1.msra.mxu0 %v556
    %605 = vmatprep.subr.mxu0 0.0
    %606 = vmatpush1.msra.mxu0 0.0
    %607 = vmatprep.subr.mxu0 0.0
    %608 = vmatpush1.msra.mxu0 0.0
    %609 = vmatprep.subr.mxu0 0.0
    %610 = vmatpush1.msra.mxu0 0.0
    %611 = vmatprep.subr.mxu0 0.0
    %612 = vmatpush1.msra.mxu0 0.0
    %613 = vmatprep.subr.mxu0 0.0
    %614 = vmatpush1.msra.mxu0 0.0
    %615 = vmatprep.subr.mxu0 0.0
    %616 = vmatpush1.msra.mxu0 0.0
    %617 = vmatprep.subr.mxu0 0.0
    %618 = vmatpush1.msra.mxu0 0.0
    %619 = vmatprep.subr.mxu0 0.0
    %620 = vmatpush1.msra.mxu0 0.0
    %621 = vmatprep.subr.mxu0 0.0
    %622 = vmatpush1.msra.mxu0 0.0
    %623 = vmatprep.subr.mxu0 0.0
    %624 = vmatpush1.msra.mxu0 0.0
    %625 = vmatprep.subr.mxu0 0.0
    %626 = vmatpush1.msra.mxu0 0.0
    %627 = vmatprep.subr.mxu0 0.0
    %628 = vmatpush1.msra.mxu0 0.0
    %629 = vmatprep.subr.mxu0 0.0
    %630 = vmatpush1.msra.mxu0 0.0
    %631 = vmatprep.subr.mxu0 0.0
    %632 = vmatpush1.msra.mxu0 0.0
    %633 = vmatprep.subr.mxu0 0.0
    %634 = vmatpush1.msra.mxu0 0.0
    %635 = vmatprep.subr.mxu0 0.0
    %636 = vmatpush1.msra.mxu0 0.0
    %637 = vmatprep.mubr.f32.mxu0 0.0
    %638 = vmatmul.mubr.f32.gmra.mrb[0].mxu0 %v503
    %v639 = vpop.f32.mrb[0].mxu0
    %v640 = vadd.f32 0.0, %v639
    %v641 = vpop.f32.mrb[0].mxu0
    %642 = vmatprep.mubr.f32.mxu0 0.0
    %643 = vmatmul.mubr.f32.gmra.mrb[0].mxu0 %v506
    %v644 = vpop.f32.mrb[0].mxu0
    %v645 = vadd.f32 0.0, %v644
    %v646 = vpop.f32.mrb[0].mxu0
    %647 = vdwg.mxu0
    %648 = vxpose.xlu0.b32.start [1/16] %v640, 128
    %649 = vxpose.xlu0.b32.cont [2/16] %v645, 128
    %650 = vxpose.xlu0.b32.cont [3/16] 0.0, 128
    %651 = vxpose.xlu0.b32.cont [4/16] 0.0, 128
    %652 = vxpose.xlu0.b32.cont [5/16] 0.0, 128
    %653 = vxpose.xlu0.b32.cont [6/16] 0.0, 128
    %654 = vxpose.xlu0.b32.cont [7/16] 0.0, 128
    %655 = vxpose.xlu0.b32.cont [8/16] 0.0, 128
    %656 = vxpose.xlu0.b32.cont [9/16] 0.0, 128
    %657 = vxpose.xlu0.b32.cont [10/16] 0.0, 128
    %658 = vxpose.xlu0.b32.cont [11/16] 0.0, 128
    %659 = vxpose.xlu0.b32.cont [12/16] 0.0, 128
    %660 = vxpose.xlu0.b32.cont [13/16] 0.0, 128
    %661 = vxpose.xlu0.b32.cont [14/16] 0.0, 128
    %662 = vxpose.xlu0.b32.cont [15/16] 0.0, 128
    %663 = vxpose.xlu0.b32.end [16/16] 0.0, 128
    %v664 = vpop.trf.xlu0
    %v665 = vpop.trf.xlu0
    %v666 = vpop.trf.xlu0
    %v667 = vpop.trf.xlu0
    %v668 = vpop.trf.xlu0
    %v669 = vpop.trf.xlu0
    %v670 = vpop.trf.xlu0
    %v671 = vpop.trf.xlu0
    %v672 = vpop.trf.xlu0
    %v673 = vpop.trf.xlu0
    %v674 = vpop.trf.xlu0
    %v675 = vpop.trf.xlu0
    %v676 = vpop.trf.xlu0
    %v677 = vpop.trf.xlu0
    %v678 = vpop.trf.xlu0
    %v679 = vpop.trf.xlu0
    %681 = vset.pattern.permute.xlu0 1
    %682 = vperm.xlu0 %681, %v640
    %v683 = vpop.permute.xlu0 %682
    %686 = vset.pattern.permute.xlu0 1
    %687 = vperm.xlu0 %686, %v645
    %v688 = vpop.permute.xlu0 %687
    %v690 = vlaneseq
    %v691 = vshrl.u32 %v690, 7
    %v692 = vsub.s32 0, %v691
    %v693 = vrot.slane %v664, %v692
    %v694 = vadd.f32 %v683, %v693
    %v695 = vadd.f32 %v688, %v693
    %v696 = vmul.f32 %v694, 0.2
    %v697 = vmul.f32 %v695, 0.2
    %v698 = vmax.f32 %v694, %v696
    %v699 = vmax.f32 %v695, %v697
    %v700 = vadd.f32 %v698, %v36
    %v701 = vadd.f32 %v699, %v37
    %v702 = vsel %vm292, %v700, -inf
    %703 = vmax.xlane.f32.xlu0 %v702
    %v704 = vpop.xlane.xlu0 %703
    %v705 = vsel %vm292, %v701, -inf
    %706 = vmax.xlane.f32.xlu0 %v705
    %v707 = vpop.xlane.xlu0 %706
    %v708 = vsub.f32 %v700, %v704
    %v709 = vsub.f32 %v701, %v707
    %v710 = vmul.f32 %v708, 1.442695
    %v711 = vpow.pop %v710
    %v712 = vmul.f32 %v709, 1.442695
    %v713 = vpow.pop %v712
    %v714 = vsel %vm292, %v711, 0.0
    %715 = vadd.xlane.f32.xlu0 %v714
    %v716 = vpop.xlane.xlu0 %715
    %v717 = vsel %vm292, %v713, 0.0
    %718 = vadd.xlane.f32.xlu0 %v717
    %v719 = vpop.xlane.xlu0 %718
    %v720 = vrcp.pop %v716
    %v721 = vrcp.pop %v719
    %v722 = vmul.f32 %v711, %v720
    %v723 = vmul.f32 %v713, %v721
    %v724 = vlaneseq
    %v725 = vshrl.u32 %v724, 7
    %v726 = vsub.s32 0, %v725
    %v727 = vrot.slane %v418, %v726
    %v729 = vsel %vm292, %v722, 0
    %v732 = vsel %vm292, %v723, 0
    %734 = vmatprep.subr.mxu0 0.0
    %735 = vmatpush1.msra.mxu0 %v503
    %736 = vmatprep.subr.mxu0 0.0
    %737 = vmatpush1.msra.mxu0 %v506
    %738 = vmatprep.subr.mxu0 0.0
    %739 = vmatpush1.msra.mxu0 0.0
    %740 = vmatprep.subr.mxu0 0.0
    %741 = vmatpush1.msra.mxu0 0.0
    %742 = vmatprep.subr.mxu0 0.0
    %743 = vmatpush1.msra.mxu0 0.0
    %744 = vmatprep.subr.mxu0 0.0
    %745 = vmatpush1.msra.mxu0 0.0
    %746 = vmatprep.subr.mxu0 0.0
    %747 = vmatpush1.msra.mxu0 0.0
    %748 = vmatprep.subr.mxu0 0.0
    %749 = vmatpush1.msra.mxu0 0.0
    %750 = vmatprep.subr.mxu0 0.0
    %751 = vmatpush1.msra.mxu0 0.0
    %752 = vmatprep.subr.mxu0 0.0
    %753 = vmatpush1.msra.mxu0 0.0
    %754 = vmatprep.subr.mxu0 0.0
    %755 = vmatpush1.msra.mxu0 0.0
    %756 = vmatprep.subr.mxu0 0.0
    %757 = vmatpush1.msra.mxu0 0.0
    %758 = vmatprep.subr.mxu0 0.0
    %759 = vmatpush1.msra.mxu0 0.0
    %760 = vmatprep.subr.mxu0 0.0
    %761 = vmatpush1.msra.mxu0 0.0
    %762 = vmatprep.subr.mxu0 0.0
    %763 = vmatpush1.msra.mxu0 0.0
    %764 = vmatprep.subr.mxu0 0.0
    %765 = vmatpush1.msra.mxu0 0.0
    %766 = vmatprep.subr.mxu0 0.0
    %767 = vmatpush1.msra.mxu0 0.0
    %768 = vmatprep.subr.mxu0 0.0
    %769 = vmatpush1.msra.mxu0 0.0
    %770 = vmatprep.subr.mxu0 0.0
    %771 = vmatpush1.msra.mxu0 0.0
    %772 = vmatprep.subr.mxu0 0.0
    %773 = vmatpush1.msra.mxu0 0.0
    %774 = vmatprep.subr.mxu0 0.0
    %775 = vmatpush1.msra.mxu0 0.0
    %776 = vmatprep.subr.mxu0 0.0
    %777 = vmatpush1.msra.mxu0 0.0
    %778 = vmatprep.subr.mxu0 0.0
    %779 = vmatpush1.msra.mxu0 0.0
    %780 = vmatprep.subr.mxu0 0.0
    %781 = vmatpush1.msra.mxu0 0.0
    %782 = vmatprep.subr.mxu0 0.0
    %783 = vmatpush1.msra.mxu0 0.0
    %784 = vmatprep.subr.mxu0 0.0
    %785 = vmatpush1.msra.mxu0 0.0
    %786 = vmatprep.subr.mxu0 0.0
    %787 = vmatpush1.msra.mxu0 0.0
    %788 = vmatprep.subr.mxu0 0.0
    %789 = vmatpush1.msra.mxu0 0.0
    %790 = vmatprep.subr.mxu0 0.0
    %791 = vmatpush1.msra.mxu0 0.0
    %792 = vmatprep.subr.mxu0 0.0
    %793 = vmatpush1.msra.mxu0 0.0
    %794 = vmatprep.subr.mxu0 0.0
    %795 = vmatpush1.msra.mxu0 0.0
    %796 = vmatprep.subr.mxu0 0.0
    %797 = vmatpush1.msra.mxu0 0.0
    %798 = vmatprep.mubr.f32.mxu0 0.0
    %799 = vmatmul.mubr.f32.gmra.mrb[0].mxu0 %v729
    %v800 = vpop.f32.mrb[0].mxu0
    %v801 = vadd.f32 %v727, %v800
    %v802 = vpop.f32.mrb[0].mxu0
    %803 = vmatprep.mubr.f32.mxu0 0.0
    %804 = vmatmul.mubr.f32.gmra.mrb[0].mxu0 %v732
    %v805 = vpop.f32.mrb[0].mxu0
    %v806 = vadd.f32 %v727, %v805
    %v807 = vpop.f32.mrb[0].mxu0
    %808 = vdwg.mxu0
    %v809 = vmax.f32 %v801, 0.0
    %v810 = vmax.f32 %v806, 0.0
    %v811 = vpack.c.bf16 %v810, %v809
    %v812 = vld [vmem:[#allocation3 + $0x80] sm:$0xff]
    %v813 = vld [vmem:[#allocation3 + $0x88] sm:$0xff]
    %v814 = vld [vmem:[#allocation3 + $0x90] sm:$0xff]
    %v815 = vld [vmem:[#allocation3 + $0x98] sm:$0xff]
    %v816 = vld [vmem:[#allocation3 + $0xa0] sm:$0xff]
    %v817 = vld [vmem:[#allocation3 + $0xa8] sm:$0xff]
    %v818 = vld [vmem:[#allocation3 + $0xb0] sm:$0xff]
    %v819 = vld [vmem:[#allocation3 + $0xb8] sm:$0xff]
    %v820 = vld [vmem:[#allocation3 + $0xc0] sm:$0xff]
    %v821 = vld [vmem:[#allocation3 + $0xc8] sm:$0xff]
    %v822 = vld [vmem:[#allocation3 + $0xd0] sm:$0xff]
    %v823 = vld [vmem:[#allocation3 + $0xd8] sm:$0xff]
    %v824 = vld [vmem:[#allocation3 + $0xe0] sm:$0xff]
    %v825 = vld [vmem:[#allocation3 + $0xe8] sm:$0xff]
    %v826 = vld [vmem:[#allocation3 + $0xf0] sm:$0xff]
    %v827 = vld [vmem:[#allocation3 + $0xf8] sm:$0xff]
    %s828 = scalar_lea.vmem %s4, 2
    %v829 = vld [vmem:[%s828] ss:$4 sm:$0x3]
    %v831 = vlaneseq
    %v832 = vshrl.u32 %v831, 7
    %v833 = vsub.s32 0, %v832
    %v834 = vrot.slane %v829, %v833
    %v835 = vlaneseq
    %v836 = vshrl.u32 %v835, 7
    %v837 = vsub.s32 1, %v836
    %v838 = vrot.slane %v829, %v837
    %v857 = vunpack.c.l.b16 %v812
    %v858 = vunpack.c.h.b16 %v812
    %v859 = vunpack.c.l.b16 %v813
    %v860 = vunpack.c.h.b16 %v813
    %v861 = vunpack.c.l.b16 %v814
    %v862 = vunpack.c.h.b16 %v814
    %v863 = vunpack.c.l.b16 %v815
    %v864 = vunpack.c.h.b16 %v815
    %v865 = vunpack.c.l.b16 %v816
    %v866 = vunpack.c.h.b16 %v816
    %v867 = vunpack.c.l.b16 %v817
    %v868 = vunpack.c.h.b16 %v817
    %v869 = vunpack.c.l.b16 %v818
    %v870 = vunpack.c.h.b16 %v818
    %v871 = vunpack.c.l.b16 %v819
    %v872 = vunpack.c.h.b16 %v819
    %v873 = vunpack.c.l.b16 %v820
    %v874 = vunpack.c.h.b16 %v820
    %v875 = vunpack.c.l.b16 %v821
    %v876 = vunpack.c.h.b16 %v821
    %v877 = vunpack.c.l.b16 %v822
    %v878 = vunpack.c.h.b16 %v822
    %v879 = vunpack.c.l.b16 %v823
    %v880 = vunpack.c.h.b16 %v823
    %v881 = vunpack.c.l.b16 %v824
    %v882 = vunpack.c.h.b16 %v824
    %v883 = vunpack.c.l.b16 %v825
    %v884 = vunpack.c.h.b16 %v825
    %v885 = vunpack.c.l.b16 %v826
    %v886 = vunpack.c.h.b16 %v826
    %v887 = vunpack.c.l.b16 %v827
    %v888 = vunpack.c.h.b16 %v827
    %v889 = vpack.c.b16 %v859, %v857
    %v890 = vpack.c.b16 %v860, %v858
    %v891 = vpack.c.b16 %v863, %v861
    %v892 = vpack.c.b16 %v864, %v862
    %v893 = vpack.c.b16 %v867, %v865
    %v894 = vpack.c.b16 %v868, %v866
    %v895 = vpack.c.b16 %v871, %v869
    %v896 = vpack.c.b16 %v872, %v870
    %v897 = vpack.c.b16 %v875, %v873
    %v898 = vpack.c.b16 %v876, %v874
    %v899 = vpack.c.b16 %v879, %v877
    %v900 = vpack.c.b16 %v880, %v878
    %v901 = vpack.c.b16 %v883, %v881
    %v902 = vpack.c.b16 %v884, %v882
    %v903 = vpack.c.b16 %v887, %v885
    %v904 = vpack.c.b16 %v888, %v886
    %921 = vmatprep.subr.bf16.mxu0 %v890
    %922 = vmatpush1.bf16.msra.mxu0 %v889
    %923 = vmatprep.subr.bf16.mxu0 %v892
    %924 = vmatpush1.bf16.msra.mxu0 %v891
    %925 = vmatprep.subr.bf16.mxu0 %v894
    %926 = vmatpush1.bf16.msra.mxu0 %v893
    %927 = vmatprep.subr.bf16.mxu0 %v896
    %928 = vmatpush1.bf16.msra.mxu0 %v895
    %929 = vmatprep.subr.bf16.mxu0 %v898
    %930 = vmatpush1.bf16.msra.mxu0 %v897
    %931 = vmatprep.subr.bf16.mxu0 %v900
    %932 = vmatpush1.bf16.msra.mxu0 %v899
    %933 = vmatprep.subr.bf16.mxu0 %v902
    %934 = vmatpush1.bf16.msra.mxu0 %v901
    %935 = vmatprep.subr.bf16.mxu0 %v904
    %936 = vmatpush1.bf16.msra.mxu0 %v903
    %937 = vmatprep.subr.bf16.mxu0 0
    %938 = vmatpush1.bf16.msra.mxu0 0
    %939 = vmatprep.subr.bf16.mxu0 0
    %940 = vmatpush1.bf16.msra.mxu0 0
    %941 = vmatprep.subr.bf16.mxu0 0
    %942 = vmatpush1.bf16.msra.mxu0 0
    %943 = vmatprep.subr.bf16.mxu0 0
    %944 = vmatpush1.bf16.msra.mxu0 0
    %945 = vmatprep.subr.bf16.mxu0 0
    %946 = vmatpush1.bf16.msra.mxu0 0
    %947 = vmatprep.subr.bf16.mxu0 0
    %948 = vmatpush1.bf16.msra.mxu0 0
    %949 = vmatprep.subr.bf16.mxu0 0
    %950 = vmatpush1.bf16.msra.mxu0 0
    %951 = vmatprep.subr.bf16.mxu0 0
    %952 = vmatpush1.bf16.msra.mxu0 0
    %953 = vmatprep.mubr.bf16.mxu0 0
    %954 = vmatmul.mubr.bf16.gmra.mrb[0].mxu0 %v811
    %v955 = vpop.f32.mrb[0].mxu0
    %v956 = vadd.f32 %v834, %v955
    %v957 = vpop.f32.mrb[0].mxu0
    %v958 = vadd.f32 %v838, %v957
    %v959 = vpop.f32.mrb[0].mxu0
    %v960 = vadd.f32 %v834, %v959
    %v961 = vpop.f32.mrb[0].mxu0
    %v962 = vadd.f32 %v838, %v961
    %963 = vdwg.mxu0
    %v964 = vld [vmem:[#allocation3 + $0x100] sm:$0xff]
    %v965 = vld [vmem:[#allocation3 + $0x108] sm:$0xff]
    %v966 = vld [vmem:[#allocation3 + $0x110] sm:$0xff]
    %v967 = vld [vmem:[#allocation3 + $0x118] sm:$0xff]
    %v968 = vld [vmem:[#allocation3 + $0x120] sm:$0xff]
    %v969 = vld [vmem:[#allocation3 + $0x128] sm:$0xff]
    %v970 = vld [vmem:[#allocation3 + $0x130] sm:$0xff]
    %v971 = vld [vmem:[#allocation3 + $0x138] sm:$0xff]
    %v980 = vunpack.c.l.b16 %v964
    %v981 = vunpack.c.h.b16 %v964
    %v982 = vunpack.c.l.b16 %v965
    %v983 = vunpack.c.h.b16 %v965
    %v984 = vunpack.c.l.b16 %v966
    %v985 = vunpack.c.h.b16 %v966
    %v986 = vunpack.c.l.b16 %v967
    %v987 = vunpack.c.h.b16 %v967
    %v988 = vunpack.c.l.b16 %v968
    %v989 = vunpack.c.h.b16 %v968
    %v990 = vunpack.c.l.b16 %v969
    %v991 = vunpack.c.h.b16 %v969
    %v992 = vunpack.c.l.b16 %v970
    %v993 = vunpack.c.h.b16 %v970
    %v994 = vunpack.c.l.b16 %v971
    %v995 = vunpack.c.h.b16 %v971
    %v996 = vpack.c.b16 %v982, %v980
    %v997 = vpack.c.b16 %v983, %v981
    %v998 = vpack.c.b16 %v986, %v984
    %v999 = vpack.c.b16 %v987, %v985
    %v1000 = vpack.c.b16 %v990, %v988
    %v1001 = vpack.c.b16 %v991, %v989
    %v1002 = vpack.c.b16 %v994, %v992
    %v1003 = vpack.c.b16 %v995, %v993
    %vm1012 = vcmask 523264
    %v1014 = vsel %vm1012, 0, 0
    %1016 = vmatprep.subr.bf16.mxu0 %v997
    %1017 = vmatpush1.bf16.msra.mxu0 %v996
    %1018 = vmatprep.subr.bf16.mxu0 %v999
    %1019 = vmatpush1.bf16.msra.mxu0 %v998
    %1020 = vmatprep.subr.bf16.mxu0 %v1001
    %1021 = vmatpush1.bf16.msra.mxu0 %v1000
    %1022 = vmatprep.subr.bf16.mxu0 %v1003
    %1023 = vmatpush1.bf16.msra.mxu0 %v1002
    %1024 = vmatprep.subr.bf16.mxu0 0
    %1025 = vmatpush1.bf16.msra.mxu0 0
    %1026 = vmatprep.subr.bf16.mxu0 0
    %1027 = vmatpush1.bf16.msra.mxu0 0
    %1028 = vmatprep.subr.bf16.mxu0 0
    %1029 = vmatpush1.bf16.msra.mxu0 0
    %1030 = vmatprep.subr.bf16.mxu0 0
    %1031 = vmatpush1.bf16.msra.mxu0 0
    %1032 = vmatprep.subr.bf16.mxu0 0
    %1033 = vmatpush1.bf16.msra.mxu0 0
    %1034 = vmatprep.subr.bf16.mxu0 0
    %1035 = vmatpush1.bf16.msra.mxu0 0
    %1036 = vmatprep.subr.bf16.mxu0 0
    %1037 = vmatpush1.bf16.msra.mxu0 0
    %1038 = vmatprep.subr.bf16.mxu0 0
    %1039 = vmatpush1.bf16.msra.mxu0 0
    %1040 = vmatprep.subr.bf16.mxu0 0
    %1041 = vmatpush1.bf16.msra.mxu0 0
    %1042 = vmatprep.subr.bf16.mxu0 0
    %1043 = vmatpush1.bf16.msra.mxu0 0
    %1044 = vmatprep.subr.bf16.mxu0 0
    %1045 = vmatpush1.bf16.msra.mxu0 0
    %1046 = vmatprep.subr.bf16.mxu0 0
    %1047 = vmatpush1.bf16.msra.mxu0 0
    %1048 = vmatprep.mubr.bf16.mxu0 0
    %1049 = vmatmul.mubr.bf16.gmra.mrb[0].mxu0 %v1014
    %v1050 = vpop.f32.mrb[0].mxu0
    %v1051 = vadd.f32 0.0, %v1050
    %v1052 = vpop.f32.mrb[0].mxu0
    %v1053 = vadd.f32 0.0, %v1052
    %v1054 = vpop.f32.mrb[0].mxu0
    %v1055 = vpop.f32.mrb[0].mxu0
    %1056 = vdwg.mxu0
    %v1057 = vadd.f32 %v956, %v1051
    %v1058 = vadd.f32 %v958, %v1053
    %v1059 = vxor.u32 %v1057, 2147483648
    %v1060 = vmul.f32 %v1059, 1.442695
    %v1061 = vpow.pop %v1060
    %v1062 = vadd.f32 %v1061, 1.0
    %v1063 = vrcp.pop %v1062
    %v1064 = vmul.f32 1.0, %v1063
    %v1065 = vtanh.pop %v1058
    %v1066 = vxor.u32 %v1058, 2147483648
    %v1067 = vmul.f32 %v1066, 1.442695
    %v1068 = vpow.pop %v1067
    %v1069 = vadd.f32 %v1068, 1.0
    %v1070 = vrcp.pop %v1069
    %v1071 = vmul.f32 1.0, %v1070
    %v1072 = vmul.f32 %v1064, 0.0
    %v1073 = vmul.f32 %v1064, %v1065
    %1075 = vrot.lane.b32.xlu0 %v1073, 64
    %v1076 = vpop.permute.xlu0 %1075
    %v1078 = vadd.f32 %v1072, %v1076
    %v1079 = vtanh.pop %v1078
    %v1080 = vmul.f32 %v1071, %v1079
    %1082 = vrot.lane.b32.xlu0 %v1080, 64
    %v1083 = vpop.permute.xlu0 %1082
    %vm1085 = vcmask 516096
    %1086 = vst.msk [vmem:[#allocation2] sm:$0x1] %vm1085, %v1083
    %v1087 = vpack.c.bf16 %v1080, %v1080
    %1089 = vrot.lane.b32.xlu0 %v1087, 64
    %v1090 = vpop.permute.xlu0 %1089
    %v1092 = vsel %vm1012, %v1090, 0
    %1094 = vmatprep.subr.bf16.mxu0 %v997
    %1095 = vmatpush1.bf16.msra.mxu0 %v996
    %1096 = vmatprep.subr.bf16.mxu0 %v999
    %1097 = vmatpush1.bf16.msra.mxu0 %v998
    %1098 = vmatprep.subr.bf16.mxu0 %v1001
    %1099 = vmatpush1.bf16.msra.mxu0 %v1000
    %1100 = vmatprep.subr.bf16.mxu0 %v1003
    %1101 = vmatpush1.bf16.msra.mxu0 %v1002
    %1102 = vmatprep.subr.bf16.mxu0 0
    %1103 = vmatpush1.bf16.msra.mxu0 0
    %1104 = vmatprep.subr.bf16.mxu0 0
    %1105 = vmatpush1.bf16.msra.mxu0 0
    %1106 = vmatprep.subr.bf16.mxu0 0
    %1107 = vmatpush1.bf16.msra.mxu0 0
    %1108 = vmatprep.subr.bf16.mxu0 0
    %1109 = vmatpush1.bf16.msra.mxu0 0
    %1110 = vmatprep.subr.bf16.mxu0 0
    %1111 = vmatpush1.bf16.msra.mxu0 0
    %1112 = vmatprep.subr.bf16.mxu0 0
    %1113 = vmatpush1.bf16.msra.mxu0 0
    %1114 = vmatprep.subr.bf16.mxu0 0
    %1115 = vmatpush1.bf16.msra.mxu0 0
    %1116 = vmatprep.subr.bf16.mxu0 0
    %1117 = vmatpush1.bf16.msra.mxu0 0
    %1118 = vmatprep.subr.bf16.mxu0 0
    %1119 = vmatpush1.bf16.msra.mxu0 0
    %1120 = vmatprep.subr.bf16.mxu0 0
    %1121 = vmatpush1.bf16.msra.mxu0 0
    %1122 = vmatprep.subr.bf16.mxu0 0
    %1123 = vmatpush1.bf16.msra.mxu0 0
    %1124 = vmatprep.subr.bf16.mxu0 0
    %1125 = vmatpush1.bf16.msra.mxu0 0
    %1126 = vmatprep.mubr.bf16.mxu0 0
    %1127 = vmatmul.mubr.bf16.gmra.mrb[0].mxu0 %v1092
    %v1128 = vpop.f32.mrb[0].mxu0
    %v1129 = vadd.f32 0.0, %v1128
    %v1130 = vpop.f32.mrb[0].mxu0
    %v1131 = vadd.f32 0.0, %v1130
    %v1132 = vpop.f32.mrb[0].mxu0
    %v1133 = vpop.f32.mrb[0].mxu0
    %1134 = vdwg.mxu0
    %v1137 = vrot.slane %v1129, 7
    %v1138 = vrot.slane %v1131, 7
    %v1141 = vadd.f32 %v956, %v1137
    %v1142 = vadd.f32 %v958, %v1138
    %v1143 = vxor.u32 %v1141, 2147483648
    %v1144 = vmul.f32 %v1143, 1.442695
    %v1145 = vpow.pop %v1144
    %v1146 = vadd.f32 %v1145, 1.0
    %v1147 = vrcp.pop %v1146
    %v1148 = vmul.f32 1.0, %v1147
    %v1149 = vtanh.pop %v1142
    %v1150 = vxor.u32 %v1142, 2147483648
    %v1151 = vmul.f32 %v1150, 1.442695
    %v1152 = vpow.pop %v1151
    %v1153 = vadd.f32 %v1152, 1.0
    %v1154 = vrcp.pop %v1153
    %v1155 = vmul.f32 1.0, %v1154
    %v1157 = vrot.slane %v1078, 7
    %v1159 = vmul.f32 %v1148, %v1157
    %v1160 = vmul.f32 %v1148, %v1149
    %1162 = vrot.lane.b32.xlu0 %v1160, 64
    %v1163 = vpop.permute.xlu0 %1162
    %v1165 = vadd.f32 %v1159, %v1163
    %v1166 = vtanh.pop %v1165
    %v1167 = vmul.f32 %v1155, %v1166
    %1169 = vrot.lane.b32.xlu0 %v1167, 64
    %v1170 = vpop.permute.xlu0 %1169
    %vm1172 = vcmask 517121
    %1173 = vst.msk [vmem:[#allocation2] sm:$0x2] %vm1172, %v1170
    %v1174 = vpack.c.bf16 %v1167, %v1167
    %v1176 = vshrl.u32 %v1174, 16
    %1178 = vrot.lane.b32.xlu0 %v1176, 64
    %v1179 = vpop.permute.xlu0 %1178
    %v1181 = vsel %vm1012, %v1179, 0
    %1183 = vmatprep.subr.bf16.mxu0 %v997
    %1184 = vmatpush1.bf16.msra.mxu0 %v996
    %1185 = vmatprep.subr.bf16.mxu0 %v999
    %1186 = vmatpush1.bf16.msra.mxu0 %v998
    %1187 = vmatprep.subr.bf16.mxu0 %v1001
    %1188 = vmatpush1.bf16.msra.mxu0 %v1000
    %1189 = vmatprep.subr.bf16.mxu0 %v1003
    %1190 = vmatpush1.bf16.msra.mxu0 %v1002
    %1191 = vmatprep.subr.bf16.mxu0 0
    %1192 = vmatpush1.bf16.msra.mxu0 0
    %1193 = vmatprep.subr.bf16.mxu0 0
    %1194 = vmatpush1.bf16.msra.mxu0 0
    %1195 = vmatprep.subr.bf16.mxu0 0
    %1196 = vmatpush1.bf16.msra.mxu0 0
    %1197 = vmatprep.subr.bf16.mxu0 0
    %1198 = vmatpush1.bf16.msra.mxu0 0
    %1199 = vmatprep.subr.bf16.mxu0 0
    %1200 = vmatpush1.bf16.msra.mxu0 0
    %1201 = vmatprep.subr.bf16.mxu0 0
    %1202 = vmatpush1.bf16.msra.mxu0 0
    %1203 = vmatprep.subr.bf16.mxu0 0
    %1204 = vmatpush1.bf16.msra.mxu0 0
    %1205 = vmatprep.subr.bf16.mxu0 0
    %1206 = vmatpush1.bf16.msra.mxu0 0
    %1207 = vmatprep.subr.bf16.mxu0 0
    %1208 = vmatpush1.bf16.msra.mxu0 0
    %1209 = vmatprep.subr.bf16.mxu0 0
    %1210 = vmatpush1.bf16.msra.mxu0 0
    %1211 = vmatprep.subr.bf16.mxu0 0
    %1212 = vmatpush1.bf16.msra.mxu0 0
    %1213 = vmatprep.subr.bf16.mxu0 0
    %1214 = vmatpush1.bf16.msra.mxu0 0
    %1215 = vmatprep.mubr.bf16.mxu0 0
    %1216 = vmatmul.mubr.bf16.gmra.mrb[0].mxu0 %v1181
    %v1217 = vpop.f32.mrb[0].mxu0
    %v1218 = vadd.f32 0.0, %v1217
    %v1219 = vpop.f32.mrb[0].mxu0
    %v1220 = vadd.f32 0.0, %v1219
    %v1221 = vpop.f32.mrb[0].mxu0
    %v1222 = vpop.f32.mrb[0].mxu0
    %1223 = vdwg.mxu0
    %v1226 = vrot.slane %v1218, 6
    %v1227 = vrot.slane %v1220, 6
    %v1230 = vadd.f32 %v956, %v1226
    %v1231 = vadd.f32 %v958, %v1227
    %v1232 = vxor.u32 %v1230, 2147483648
    %v1233 = vmul.f32 %v1232, 1.442695
    %v1234 = vpow.pop %v1233
    %v1235 = vadd.f32 %v1234, 1.0
    %v1236 = vrcp.pop %v1235
    %v1237 = vmul.f32 1.0, %v1236
    %v1238 = vtanh.pop %v1231
    %v1239 = vxor.u32 %v1231, 2147483648
    %v1240 = vmul.f32 %v1239, 1.442695
    %v1241 = vpow.pop %v1240
    %v1242 = vadd.f32 %v1241, 1.0
    %v1243 = vrcp.pop %v1242
    %v1244 = vmul.f32 1.0, %v1243
    %v1246 = vrot.slane %v1165, 7
    %v1248 = vmul.f32 %v1237, %v1246
    %v1249 = vmul.f32 %v1237, %v1238
    %1251 = vrot.lane.b32.xlu0 %v1249, 64
    %v1252 = vpop.permute.xlu0 %1251
    %v1254 = vadd.f32 %v1248, %v1252
    %v1255 = vtanh.pop %v1254
    %v1256 = vmul.f32 %v1244, %v1255
    %1258 = vrot.lane.b32.xlu0 %v1256, 64
    %v1259 = vpop.permute.xlu0 %1258
    %vm1261 = vcmask 518146
    %1262 = vst.msk [vmem:[#allocation2] sm:$0x4] %vm1261, %v1259
    %v1263 = vpack.c.bf16 %v1256, %v1256
    %v1265 = vrot.slane %v1263, 1
    %1266 = vrot.lane.b32.xlu0 %v1265, 64
    %v1267 = vpop.permute.xlu0 %1266
    %v1269 = vsel %vm1012, %v1267, 0
    %1271 = vmatprep.subr.bf16.mxu0 %v997
    %1272 = vmatpush1.bf16.msra.mxu0 %v996
    %1273 = vmatprep.subr.bf16.mxu0 %v999
    %1274 = vmatpush1.bf16.msra.mxu0 %v998
    %1275 = vmatprep.subr.bf16.mxu0 %v1001
    %1276 = vmatpush1.bf16.msra.mxu0 %v1000
    %1277 = vmatprep.subr.bf16.mxu0 %v1003
    %1278 = vmatpush1.bf16.msra.mxu0 %v1002
    %1279 = vmatprep.subr.bf16.mxu0 0
    %1280 = vmatpush1.bf16.msra.mxu0 0
    %1281 = vmatprep.subr.bf16.mxu0 0
    %1282 = vmatpush1.bf16.msra.mxu0 0
    %1283 = vmatprep.subr.bf16.mxu0 0
    %1284 = vmatpush1.bf16.msra.mxu0 0
    %1285 = vmatprep.subr.bf16.mxu0 0
    %1286 = vmatpush1.bf16.msra.mxu0 0
    %1287 = vmatprep.subr.bf16.mxu0 0
    %1288 = vmatpush1.bf16.msra.mxu0 0
    %1289 = vmatprep.subr.bf16.mxu0 0
    %1290 = vmatpush1.bf16.msra.mxu0 0
    %1291 = vmatprep.subr.bf16.mxu0 0
    %1292 = vmatpush1.bf16.msra.mxu0 0
    %1293 = vmatprep.subr.bf16.mxu0 0
    %1294 = vmatpush1.bf16.msra.mxu0 0
    %1295 = vmatprep.subr.bf16.mxu0 0
    %1296 = vmatpush1.bf16.msra.mxu0 0
    %1297 = vmatprep.subr.bf16.mxu0 0
    %1298 = vmatpush1.bf16.msra.mxu0 0
    %1299 = vmatprep.subr.bf16.mxu0 0
    %1300 = vmatpush1.bf16.msra.mxu0 0
    %1301 = vmatprep.subr.bf16.mxu0 0
    %1302 = vmatpush1.bf16.msra.mxu0 0
    %1303 = vmatprep.mubr.bf16.mxu0 0
    %1304 = vmatmul.mubr.bf16.gmra.mrb[0].mxu0 %v1269
    %v1305 = vpop.f32.mrb[0].mxu0
    %v1306 = vadd.f32 0.0, %v1305
    %v1307 = vpop.f32.mrb[0].mxu0
    %v1308 = vadd.f32 0.0, %v1307
    %v1309 = vpop.f32.mrb[0].mxu0
    %v1310 = vpop.f32.mrb[0].mxu0
    %1311 = vdwg.mxu0
    %v1314 = vrot.slane %v1306, 5
    %v1315 = vrot.slane %v1308, 5
    %v1318 = vadd.f32 %v956, %v1314
    %v1319 = vadd.f32 %v958, %v1315
    %v1320 = vxor.u32 %v1318, 2147483648
    %v1321 = vmul.f32 %v1320, 1.442695
    %v1322 = vpow.pop %v1321
    %v1323 = vadd.f32 %v1322, 1.0
    %v1324 = vrcp.pop %v1323
    %v1325 = vmul.f32 1.0, %v1324
    %v1326 = vtanh.pop %v1319
    %v1327 = vxor.u32 %v1319, 2147483648
    %v1328 = vmul.f32 %v1327, 1.442695
    %v1329 = vpow.pop %v1328
    %v1330 = vadd.f32 %v1329, 1.0
    %v1331 = vrcp.pop %v1330
    %v1332 = vmul.f32 1.0, %v1331
    %v1334 = vrot.slane %v1254, 7
    %v1336 = vmul.f32 %v1325, %v1334
    %v1337 = vmul.f32 %v1325, %v1326
    %1339 = vrot.lane.b32.xlu0 %v1337, 64
    %v1340 = vpop.permute.xlu0 %1339
    %v1342 = vadd.f32 %v1336, %v1340
    %v1343 = vtanh.pop %v1342
    %v1344 = vmul.f32 %v1332, %v1343
    %1346 = vrot.lane.b32.xlu0 %v1344, 64
    %v1347 = vpop.permute.xlu0 %1346
    %vm1349 = vcmask 519171
    %1350 = vst.msk [vmem:[#allocation2] sm:$0x8] %vm1349, %v1347
    %v1351 = vpack.c.bf16 %v1344, %v1344
    %v1353 = vshrl.u32 %v1351, 16
    %v1355 = vrot.slane %v1353, 1
    %1356 = vrot.lane.b32.xlu0 %v1355, 64
    %v1357 = vpop.permute.xlu0 %1356
    %v1359 = vsel %vm1012, %v1357, 0
    %1361 = vmatprep.subr.bf16.mxu0 %v997
    %1362 = vmatpush1.bf16.msra.mxu0 %v996
    %1363 = vmatprep.subr.bf16.mxu0 %v999
    %1364 = vmatpush1.bf16.msra.mxu0 %v998
    %1365 = vmatprep.subr.bf16.mxu0 %v1001
    %1366 = vmatpush1.bf16.msra.mxu0 %v1000
    %1367 = vmatprep.subr.bf16.mxu0 %v1003
    %1368 = vmatpush1.bf16.msra.mxu0 %v1002
    %1369 = vmatprep.subr.bf16.mxu0 0
    %1370 = vmatpush1.bf16.msra.mxu0 0
    %1371 = vmatprep.subr.bf16.mxu0 0
    %1372 = vmatpush1.bf16.msra.mxu0 0
    %1373 = vmatprep.subr.bf16.mxu0 0
    %1374 = vmatpush1.bf16.msra.mxu0 0
    %1375 = vmatprep.subr.bf16.mxu0 0
    %1376 = vmatpush1.bf16.msra.mxu0 0
    %1377 = vmatprep.subr.bf16.mxu0 0
    %1378 = vmatpush1.bf16.msra.mxu0 0
    %1379 = vmatprep.subr.bf16.mxu0 0
    %1380 = vmatpush1.bf16.msra.mxu0 0
    %1381 = vmatprep.subr.bf16.mxu0 0
    %1382 = vmatpush1.bf16.msra.mxu0 0
    %1383 = vmatprep.subr.bf16.mxu0 0
    %1384 = vmatpush1.bf16.msra.mxu0 0
    %1385 = vmatprep.subr.bf16.mxu0 0
    %1386 = vmatpush1.bf16.msra.mxu0 0
    %1387 = vmatprep.subr.bf16.mxu0 0
    %1388 = vmatpush1.bf16.msra.mxu0 0
    %1389 = vmatprep.subr.bf16.mxu0 0
    %1390 = vmatpush1.bf16.msra.mxu0 0
    %1391 = vmatprep.subr.bf16.mxu0 0
    %1392 = vmatpush1.bf16.msra.mxu0 0
    %1393 = vmatprep.mubr.bf16.mxu0 0
    %1394 = vmatmul.mubr.bf16.gmra.mrb[0].mxu0 %v1359
    %v1395 = vpop.f32.mrb[0].mxu0
    %v1396 = vadd.f32 0.0, %v1395
    %v1397 = vpop.f32.mrb[0].mxu0
    %v1398 = vadd.f32 0.0, %v1397
    %v1399 = vpop.f32.mrb[0].mxu0
    %v1400 = vpop.f32.mrb[0].mxu0
    %1401 = vdwg.mxu0
    %v1404 = vrot.slane %v1396, 4
    %v1405 = vrot.slane %v1398, 4
    %v1408 = vadd.f32 %v956, %v1404
    %v1409 = vadd.f32 %v958, %v1405
    %v1410 = vxor.u32 %v1408, 2147483648
    %v1411 = vmul.f32 %v1410, 1.442695
    %v1412 = vpow.pop %v1411
    %v1413 = vadd.f32 %v1412, 1.0
    %v1414 = vrcp.pop %v1413
    %v1415 = vmul.f32 1.0, %v1414
    %v1416 = vtanh.pop %v1409
    %v1417 = vxor.u32 %v1409, 2147483648
    %v1418 = vmul.f32 %v1417, 1.442695
    %v1419 = vpow.pop %v1418
    %v1420 = vadd.f32 %v1419, 1.0
    %v1421 = vrcp.pop %v1420
    %v1422 = vmul.f32 1.0, %v1421
    %v1424 = vrot.slane %v1342, 7
    %v1426 = vmul.f32 %v1415, %v1424
    %v1427 = vmul.f32 %v1415, %v1416
    %1429 = vrot.lane.b32.xlu0 %v1427, 64
    %v1430 = vpop.permute.xlu0 %1429
    %v1432 = vadd.f32 %v1426, %v1430
    %v1433 = vtanh.pop %v1432
    %v1434 = vmul.f32 %v1422, %v1433
    %1436 = vrot.lane.b32.xlu0 %v1434, 64
    %v1437 = vpop.permute.xlu0 %1436
    %vm1439 = vcmask 520196
    %1440 = vst.msk [vmem:[#allocation2] sm:$0x10] %vm1439, %v1437
    %v1441 = vpack.c.bf16 %v1434, %v1434
    %v1443 = vrot.slane %v1441, 2
    %1444 = vrot.lane.b32.xlu0 %v1443, 64
    %v1445 = vpop.permute.xlu0 %1444
    %v1447 = vsel %vm1012, %v1445, 0
    %1449 = vmatprep.subr.bf16.mxu0 %v997
    %1450 = vmatpush1.bf16.msra.mxu0 %v996
    %1451 = vmatprep.subr.bf16.mxu0 %v999
    %1452 = vmatpush1.bf16.msra.mxu0 %v998
    %1453 = vmatprep.subr.bf16.mxu0 %v1001
    %1454 = vmatpush1.bf16.msra.mxu0 %v1000
    %1455 = vmatprep.subr.bf16.mxu0 %v1003
    %1456 = vmatpush1.bf16.msra.mxu0 %v1002
    %1457 = vmatprep.subr.bf16.mxu0 0
    %1458 = vmatpush1.bf16.msra.mxu0 0
    %1459 = vmatprep.subr.bf16.mxu0 0
    %1460 = vmatpush1.bf16.msra.mxu0 0
    %1461 = vmatprep.subr.bf16.mxu0 0
    %1462 = vmatpush1.bf16.msra.mxu0 0
    %1463 = vmatprep.subr.bf16.mxu0 0
    %1464 = vmatpush1.bf16.msra.mxu0 0
    %1465 = vmatprep.subr.bf16.mxu0 0
    %1466 = vmatpush1.bf16.msra.mxu0 0
    %1467 = vmatprep.subr.bf16.mxu0 0
    %1468 = vmatpush1.bf16.msra.mxu0 0
    %1469 = vmatprep.subr.bf16.mxu0 0
    %1470 = vmatpush1.bf16.msra.mxu0 0
    %1471 = vmatprep.subr.bf16.mxu0 0
    %1472 = vmatpush1.bf16.msra.mxu0 0
    %1473 = vmatprep.subr.bf16.mxu0 0
    %1474 = vmatpush1.bf16.msra.mxu0 0
    %1475 = vmatprep.subr.bf16.mxu0 0
    %1476 = vmatpush1.bf16.msra.mxu0 0
    %1477 = vmatprep.subr.bf16.mxu0 0
    %1478 = vmatpush1.bf16.msra.mxu0 0
    %1479 = vmatprep.subr.bf16.mxu0 0
    %1480 = vmatpush1.bf16.msra.mxu0 0
    %1481 = vmatprep.mubr.bf16.mxu0 0
    %1482 = vmatmul.mubr.bf16.gmra.mrb[0].mxu0 %v1447
    %v1483 = vpop.f32.mrb[0].mxu0
    %v1484 = vadd.f32 0.0, %v1483
    %v1485 = vpop.f32.mrb[0].mxu0
    %v1486 = vadd.f32 0.0, %v1485
    %v1487 = vpop.f32.mrb[0].mxu0
    %v1488 = vpop.f32.mrb[0].mxu0
    %1489 = vdwg.mxu0
    %v1492 = vrot.slane %v1484, 3
    %v1493 = vrot.slane %v1486, 3
    %v1496 = vadd.f32 %v956, %v1492
    %v1497 = vadd.f32 %v958, %v1493
    %v1498 = vxor.u32 %v1496, 2147483648
    %v1499 = vmul.f32 %v1498, 1.442695
    %v1500 = vpow.pop %v1499
    %v1501 = vadd.f32 %v1500, 1.0
    %v1502 = vrcp.pop %v1501
    %v1503 = vmul.f32 1.0, %v1502
    %v1504 = vtanh.pop %v1497
    %v1505 = vxor.u32 %v1497, 2147483648
    %v1506 = vmul.f32 %v1505, 1.442695
    %v1507 = vpow.pop %v1506
    %v1508 = vadd.f32 %v1507, 1.0
    %v1509 = vrcp.pop %v1508
    %v1510 = vmul.f32 1.0, %v1509
    %v1512 = vrot.slane %v1432, 7
    %v1514 = vmul.f32 %v1503, %v1512
    %v1515 = vmul.f32 %v1503, %v1504
    %1517 = vrot.lane.b32.xlu0 %v1515, 64
    %v1518 = vpop.permute.xlu0 %1517
    %v1520 = vadd.f32 %v1514, %v1518
    %v1521 = vtanh.pop %v1520
    %v1522 = vmul.f32 %v1510, %v1521
    %1524 = vrot.lane.b32.xlu0 %v1522, 64
    %v1525 = vpop.permute.xlu0 %1524
    %vm1527 = vcmask 521221
    %1528 = vst.msk [vmem:[#allocation2] sm:$0x20] %vm1527, %v1525
    %v1529 = vpack.c.bf16 %v1522, %v1522
    %v1531 = vshrl.u32 %v1529, 16
    %v1533 = vrot.slane %v1531, 2
    %1534 = vrot.lane.b32.xlu0 %v1533, 64
    %v1535 = vpop.permute.xlu0 %1534
    %v1537 = vsel %vm1012, %v1535, 0
    %1539 = vmatprep.subr.bf16.mxu0 %v997
    %1540 = vmatpush1.bf16.msra.mxu0 %v996
    %1541 = vmatprep.subr.bf16.mxu0 %v999
    %1542 = vmatpush1.bf16.msra.mxu0 %v998
    %1543 = vmatprep.subr.bf16.mxu0 %v1001
    %1544 = vmatpush1.bf16.msra.mxu0 %v1000
    %1545 = vmatprep.subr.bf16.mxu0 %v1003
    %1546 = vmatpush1.bf16.msra.mxu0 %v1002
    %1547 = vmatprep.subr.bf16.mxu0 0
    %1548 = vmatpush1.bf16.msra.mxu0 0
    %1549 = vmatprep.subr.bf16.mxu0 0
    %1550 = vmatpush1.bf16.msra.mxu0 0
    %1551 = vmatprep.subr.bf16.mxu0 0
    %1552 = vmatpush1.bf16.msra.mxu0 0
    %1553 = vmatprep.subr.bf16.mxu0 0
    %1554 = vmatpush1.bf16.msra.mxu0 0
    %1555 = vmatprep.subr.bf16.mxu0 0
    %1556 = vmatpush1.bf16.msra.mxu0 0
    %1557 = vmatprep.subr.bf16.mxu0 0
    %1558 = vmatpush1.bf16.msra.mxu0 0
    %1559 = vmatprep.subr.bf16.mxu0 0
    %1560 = vmatpush1.bf16.msra.mxu0 0
    %1561 = vmatprep.subr.bf16.mxu0 0
    %1562 = vmatpush1.bf16.msra.mxu0 0
    %1563 = vmatprep.subr.bf16.mxu0 0
    %1564 = vmatpush1.bf16.msra.mxu0 0
    %1565 = vmatprep.subr.bf16.mxu0 0
    %1566 = vmatpush1.bf16.msra.mxu0 0
    %1567 = vmatprep.subr.bf16.mxu0 0
    %1568 = vmatpush1.bf16.msra.mxu0 0
    %1569 = vmatprep.subr.bf16.mxu0 0
    %1570 = vmatpush1.bf16.msra.mxu0 0
    %1571 = vmatprep.mubr.bf16.mxu0 0
    %1572 = vmatmul.mubr.bf16.gmra.mrb[0].mxu0 %v1537
    %v1573 = vpop.f32.mrb[0].mxu0
    %v1574 = vadd.f32 0.0, %v1573
    %v1575 = vpop.f32.mrb[0].mxu0
    %v1576 = vadd.f32 0.0, %v1575
    %v1577 = vpop.f32.mrb[0].mxu0
    %v1578 = vpop.f32.mrb[0].mxu0
    %1579 = vdwg.mxu0
    %v1582 = vrot.slane %v1574, 2
    %v1583 = vrot.slane %v1576, 2
    %v1586 = vadd.f32 %v956, %v1582
    %v1587 = vadd.f32 %v958, %v1583
    %v1588 = vxor.u32 %v1586, 2147483648
    %v1589 = vmul.f32 %v1588, 1.442695
    %v1590 = vpow.pop %v1589
    %v1591 = vadd.f32 %v1590, 1.0
    %v1592 = vrcp.pop %v1591
    %v1593 = vmul.f32 1.0, %v1592
    %v1594 = vtanh.pop %v1587
    %v1595 = vxor.u32 %v1587, 2147483648
    %v1596 = vmul.f32 %v1595, 1.442695
    %v1597 = vpow.pop %v1596
    %v1598 = vadd.f32 %v1597, 1.0
    %v1599 = vrcp.pop %v1598
    %v1600 = vmul.f32 1.0, %v1599
    %v1602 = vrot.slane %v1520, 7
    %v1604 = vmul.f32 %v1593, %v1602
    %v1605 = vmul.f32 %v1593, %v1594
    %1607 = vrot.lane.b32.xlu0 %v1605, 64
    %v1608 = vpop.permute.xlu0 %1607
    %v1610 = vadd.f32 %v1604, %v1608
    %v1611 = vtanh.pop %v1610
    %v1612 = vmul.f32 %v1600, %v1611
    %1614 = vrot.lane.b32.xlu0 %v1612, 64
    %v1615 = vpop.permute.xlu0 %1614
    %vm1617 = vcmask 522246
    %1618 = vst.msk [vmem:[#allocation2] sm:$0x40] %vm1617, %v1615
    %v1619 = vpack.c.bf16 %v1612, %v1612
    %v1621 = vrot.slane %v1619, 3
    %1622 = vrot.lane.b32.xlu0 %v1621, 64
    %v1623 = vpop.permute.xlu0 %1622
    %v1625 = vsel %vm1012, %v1623, 0
    %1627 = vmatprep.subr.bf16.mxu0 %v997
    %1628 = vmatpush1.bf16.msra.mxu0 %v996
    %1629 = vmatprep.subr.bf16.mxu0 %v999
    %1630 = vmatpush1.bf16.msra.mxu0 %v998
    %1631 = vmatprep.subr.bf16.mxu0 %v1001
    %1632 = vmatpush1.bf16.msra.mxu0 %v1000
    %1633 = vmatprep.subr.bf16.mxu0 %v1003
    %1634 = vmatpush1.bf16.msra.mxu0 %v1002
    %1635 = vmatprep.subr.bf16.mxu0 0
    %1636 = vmatpush1.bf16.msra.mxu0 0
    %1637 = vmatprep.subr.bf16.mxu0 0
    %1638 = vmatpush1.bf16.msra.mxu0 0
    %1639 = vmatprep.subr.bf16.mxu0 0
    %1640 = vmatpush1.bf16.msra.mxu0 0
    %1641 = vmatprep.subr.bf16.mxu0 0
    %1642 = vmatpush1.bf16.msra.mxu0 0
    %1643 = vmatprep.subr.bf16.mxu0 0
    %1644 = vmatpush1.bf16.msra.mxu0 0
    %1645 = vmatprep.subr.bf16.mxu0 0
    %1646 = vmatpush1.bf16.msra.mxu0 0
    %1647 = vmatprep.subr.bf16.mxu0 0
    %1648 = vmatpush1.bf16.msra.mxu0 0
    %1649 = vmatprep.subr.bf16.mxu0 0
    %1650 = vmatpush1.bf16.msra.mxu0 0
    %1651 = vmatprep.subr.bf16.mxu0 0
    %1652 = vmatpush1.bf16.msra.mxu0 0
    %1653 = vmatprep.subr.bf16.mxu0 0
    %1654 = vmatpush1.bf16.msra.mxu0 0
    %1655 = vmatprep.subr.bf16.mxu0 0
    %1656 = vmatpush1.bf16.msra.mxu0 0
    %1657 = vmatprep.subr.bf16.mxu0 0
    %1658 = vmatpush1.bf16.msra.mxu0 0
    %1659 = vmatprep.mubr.bf16.mxu0 0
    %1660 = vmatmul.mubr.bf16.gmra.mrb[0].mxu0 %v1625
    %v1661 = vpop.f32.mrb[0].mxu0
    %v1662 = vadd.f32 0.0, %v1661
    %v1663 = vpop.f32.mrb[0].mxu0
    %v1664 = vadd.f32 0.0, %v1663
    %v1665 = vpop.f32.mrb[0].mxu0
    %v1666 = vpop.f32.mrb[0].mxu0
    %1667 = vdwg.mxu0
    %v1670 = vrot.slane %v1662, 1
    %v1671 = vrot.slane %v1664, 1
    %v1674 = vadd.f32 %v956, %v1670
    %v1675 = vadd.f32 %v958, %v1671
    %v1676 = vxor.u32 %v1674, 2147483648
    %v1677 = vmul.f32 %v1676, 1.442695
    %v1678 = vpow.pop %v1677
    %v1679 = vadd.f32 %v1678, 1.0
    %v1680 = vrcp.pop %v1679
    %v1681 = vmul.f32 1.0, %v1680
    %v1682 = vtanh.pop %v1675
    %v1683 = vxor.u32 %v1675, 2147483648
    %v1684 = vmul.f32 %v1683, 1.442695
    %v1685 = vpow.pop %v1684
    %v1686 = vadd.f32 %v1685, 1.0
    %v1687 = vrcp.pop %v1686
    %v1688 = vmul.f32 1.0, %v1687
    %v1690 = vrot.slane %v1610, 7
    %v1692 = vmul.f32 %v1681, %v1690
    %v1693 = vmul.f32 %v1681, %v1682
    %1695 = vrot.lane.b32.xlu0 %v1693, 64
    %v1696 = vpop.permute.xlu0 %1695
    %v1698 = vadd.f32 %v1692, %v1696
    %v1699 = vtanh.pop %v1698
    %v1700 = vmul.f32 %v1688, %v1699
    %1702 = vrot.lane.b32.xlu0 %v1700, 64
    %v1703 = vpop.permute.xlu0 %1702
    %vm1705 = vcmask 523271
    %1706 = vst.msk [vmem:[#allocation2] sm:$0x80] %vm1705, %v1703
    %v1707 = vpack.c.bf16 %v1700, %v1700
    %v1709 = vshrl.u32 %v1707, 16
    %v1711 = vrot.slane %v1709, 3
    %1712 = vrot.lane.b32.xlu0 %v1711, 64
    %v1713 = vpop.permute.xlu0 %1712
    %v1715 = vsel %vm1012, %v1713, 0
    %1717 = vmatprep.subr.bf16.mxu0 %v997
    %1718 = vmatpush1.bf16.msra.mxu0 %v996
    %1719 = vmatprep.subr.bf16.mxu0 %v999
    %1720 = vmatpush1.bf16.msra.mxu0 %v998
    %1721 = vmatprep.subr.bf16.mxu0 %v1001
    %1722 = vmatpush1.bf16.msra.mxu0 %v1000
    %1723 = vmatprep.subr.bf16.mxu0 %v1003
    %1724 = vmatpush1.bf16.msra.mxu0 %v1002
    %1725 = vmatprep.subr.bf16.mxu0 0
    %1726 = vmatpush1.bf16.msra.mxu0 0
    %1727 = vmatprep.subr.bf16.mxu0 0
    %1728 = vmatpush1.bf16.msra.mxu0 0
    %1729 = vmatprep.subr.bf16.mxu0 0
    %1730 = vmatpush1.bf16.msra.mxu0 0
    %1731 = vmatprep.subr.bf16.mxu0 0
    %1732 = vmatpush1.bf16.msra.mxu0 0
    %1733 = vmatprep.subr.bf16.mxu0 0
    %1734 = vmatpush1.bf16.msra.mxu0 0
    %1735 = vmatprep.subr.bf16.mxu0 0
    %1736 = vmatpush1.bf16.msra.mxu0 0
    %1737 = vmatprep.subr.bf16.mxu0 0
    %1738 = vmatpush1.bf16.msra.mxu0 0
    %1739 = vmatprep.subr.bf16.mxu0 0
    %1740 = vmatpush1.bf16.msra.mxu0 0
    %1741 = vmatprep.subr.bf16.mxu0 0
    %1742 = vmatpush1.bf16.msra.mxu0 0
    %1743 = vmatprep.subr.bf16.mxu0 0
    %1744 = vmatpush1.bf16.msra.mxu0 0
    %1745 = vmatprep.subr.bf16.mxu0 0
    %1746 = vmatpush1.bf16.msra.mxu0 0
    %1747 = vmatprep.subr.bf16.mxu0 0
    %1748 = vmatpush1.bf16.msra.mxu0 0
    %1749 = vmatprep.mubr.bf16.mxu0 0
    %1750 = vmatmul.mubr.bf16.gmra.mrb[0].mxu0 %v1715
    %v1751 = vpop.f32.mrb[0].mxu0
    %v1752 = vadd.f32 0.0, %v1751
    %v1753 = vpop.f32.mrb[0].mxu0
    %v1754 = vadd.f32 0.0, %v1753
    %v1755 = vpop.f32.mrb[0].mxu0
    %v1756 = vpop.f32.mrb[0].mxu0
    %1757 = vdwg.mxu0
    %v1758 = vadd.f32 %v960, %v1752
    %v1759 = vadd.f32 %v962, %v1754
    %v1760 = vxor.u32 %v1758, 2147483648
    %v1761 = vmul.f32 %v1760, 1.442695
    %v1762 = vpow.pop %v1761
    %v1763 = vadd.f32 %v1762, 1.0
    %v1764 = vrcp.pop %v1763
    %v1765 = vmul.f32 1.0, %v1764
    %v1766 = vtanh.pop %v1759
    %v1767 = vxor.u32 %v1759, 2147483648
    %v1768 = vmul.f32 %v1767, 1.442695
    %v1769 = vpow.pop %v1768
    %v1770 = vadd.f32 %v1769, 1.0
    %v1771 = vrcp.pop %v1770
    %v1772 = vmul.f32 1.0, %v1771
    %v1774 = vrot.slane %v1698, 7
    %v1776 = vmul.f32 %v1765, %v1774
    %v1777 = vmul.f32 %v1765, %v1766
    %1779 = vrot.lane.b32.xlu0 %v1777, 64
    %v1780 = vpop.permute.xlu0 %1779
    %v1782 = vadd.f32 %v1776, %v1780
    %v1783 = vtanh.pop %v1782
    %v1784 = vmul.f32 %v1772, %v1783
    %1786 = vrot.lane.b32.xlu0 %v1784, 64
    %v1787 = vpop.permute.xlu0 %1786
    %1789 = vst.msk [vmem:[#allocation2 + $0x8] sm:$0x1] %vm1085, %v1787
    %v1790 = vpack.c.bf16 %v1784, %v1784
    %1792 = vrot.lane.b32.xlu0 %v1790, 64
    %v1793 = vpop.permute.xlu0 %1792
    %v1795 = vsel %vm1012, %v1793, 0
    %1797 = vmatprep.subr.bf16.mxu0 %v997
    %1798 = vmatpush1.bf16.msra.mxu0 %v996
    %1799 = vmatprep.subr.bf16.mxu0 %v999
    %1800 = vmatpush1.bf16.msra.mxu0 %v998
    %1801 = vmatprep.subr.bf16.mxu0 %v1001
    %1802 = vmatpush1.bf16.msra.mxu0 %v1000
    %1803 = vmatprep.subr.bf16.mxu0 %v1003
    %1804 = vmatpush1.bf16.msra.mxu0 %v1002
    %1805 = vmatprep.subr.bf16.mxu0 0
    %1806 = vmatpush1.bf16.msra.mxu0 0
    %1807 = vmatprep.subr.bf16.mxu0 0
    %1808 = vmatpush1.bf16.msra.mxu0 0
    %1809 = vmatprep.subr.bf16.mxu0 0
    %1810 = vmatpush1.bf16.msra.mxu0 0
    %1811 = vmatprep.subr.bf16.mxu0 0
    %1812 = vmatpush1.bf16.msra.mxu0 0
    %1813 = vmatprep.subr.bf16.mxu0 0
    %1814 = vmatpush1.bf16.msra.mxu0 0
    %1815 = vmatprep.subr.bf16.mxu0 0
    %1816 = vmatpush1.bf16.msra.mxu0 0
    %1817 = vmatprep.subr.bf16.mxu0 0
    %1818 = vmatpush1.bf16.msra.mxu0 0
    %1819 = vmatprep.subr.bf16.mxu0 0
    %1820 = vmatpush1.bf16.msra.mxu0 0
    %1821 = vmatprep.subr.bf16.mxu0 0
    %1822 = vmatpush1.bf16.msra.mxu0 0
    %1823 = vmatprep.subr.bf16.mxu0 0
    %1824 = vmatpush1.bf16.msra.mxu0 0
    %1825 = vmatprep.subr.bf16.mxu0 0
    %1826 = vmatpush1.bf16.msra.mxu0 0
    %1827 = vmatprep.subr.bf16.mxu0 0
    %1828 = vmatpush1.bf16.msra.mxu0 0
    %1829 = vmatprep.mubr.bf16.mxu0 0
    %1830 = vmatmul.mubr.bf16.gmra.mrb[0].mxu0 %v1795
    %v1831 = vpop.f32.mrb[0].mxu0
    %v1832 = vadd.f32 0.0, %v1831
    %v1833 = vpop.f32.mrb[0].mxu0
    %v1834 = vadd.f32 0.0, %v1833
    %v1835 = vpop.f32.mrb[0].mxu0
    %v1836 = vpop.f32.mrb[0].mxu0
    %1837 = vdwg.mxu0
    %v1840 = vrot.slane %v1832, 7
    %v1841 = vrot.slane %v1834, 7
    %v1844 = vadd.f32 %v960, %v1840
    %v1845 = vadd.f32 %v962, %v1841
    %v1846 = vxor.u32 %v1844, 2147483648
    %v1847 = vmul.f32 %v1846, 1.442695
    %v1848 = vpow.pop %v1847
    %v1849 = vadd.f32 %v1848, 1.0
    %v1850 = vrcp.pop %v1849
    %v1851 = vmul.f32 1.0, %v1850
    %v1852 = vtanh.pop %v1845
    %v1853 = vxor.u32 %v1845, 2147483648
    %v1854 = vmul.f32 %v1853, 1.442695
    %v1855 = vpow.pop %v1854
    %v1856 = vadd.f32 %v1855, 1.0
    %v1857 = vrcp.pop %v1856
    %v1858 = vmul.f32 1.0, %v1857
    %v1860 = vrot.slane %v1782, 7
    %v1862 = vmul.f32 %v1851, %v1860
    %v1863 = vmul.f32 %v1851, %v1852
    %1865 = vrot.lane.b32.xlu0 %v1863, 64
    %v1866 = vpop.permute.xlu0 %1865
    %v1868 = vadd.f32 %v1862, %v1866
    %v1869 = vtanh.pop %v1868
    %v1870 = vmul.f32 %v1858, %v1869
    %1872 = vrot.lane.b32.xlu0 %v1870, 64
    %v1873 = vpop.permute.xlu0 %1872
    %1875 = vst.msk [vmem:[#allocation2 + $0x8] sm:$0x2] %vm1172, %v1873
    %v1876 = vpack.c.bf16 %v1870, %v1870
    %v1878 = vshrl.u32 %v1876, 16
    %1880 = vrot.lane.b32.xlu0 %v1878, 64
    %v1881 = vpop.permute.xlu0 %1880
    %v1883 = vsel %vm1012, %v1881, 0
    %1885 = vmatprep.subr.bf16.mxu0 %v997
    %1886 = vmatpush1.bf16.msra.mxu0 %v996
    %1887 = vmatprep.subr.bf16.mxu0 %v999
    %1888 = vmatpush1.bf16.msra.mxu0 %v998
    %1889 = vmatprep.subr.bf16.mxu0 %v1001
    %1890 = vmatpush1.bf16.msra.mxu0 %v1000
    %1891 = vmatprep.subr.bf16.mxu0 %v1003
    %1892 = vmatpush1.bf16.msra.mxu0 %v1002
    %1893 = vmatprep.subr.bf16.mxu0 0
    %1894 = vmatpush1.bf16.msra.mxu0 0
    %1895 = vmatprep.subr.bf16.mxu0 0
    %1896 = vmatpush1.bf16.msra.mxu0 0
    %1897 = vmatprep.subr.bf16.mxu0 0
    %1898 = vmatpush1.bf16.msra.mxu0 0
    %1899 = vmatprep.subr.bf16.mxu0 0
    %1900 = vmatpush1.bf16.msra.mxu0 0
    %1901 = vmatprep.subr.bf16.mxu0 0
    %1902 = vmatpush1.bf16.msra.mxu0 0
    %1903 = vmatprep.subr.bf16.mxu0 0
    %1904 = vmatpush1.bf16.msra.mxu0 0
    %1905 = vmatprep.subr.bf16.mxu0 0
    %1906 = vmatpush1.bf16.msra.mxu0 0
    %1907 = vmatprep.subr.bf16.mxu0 0
    %1908 = vmatpush1.bf16.msra.mxu0 0
    %1909 = vmatprep.subr.bf16.mxu0 0
    %1910 = vmatpush1.bf16.msra.mxu0 0
    %1911 = vmatprep.subr.bf16.mxu0 0
    %1912 = vmatpush1.bf16.msra.mxu0 0
    %1913 = vmatprep.subr.bf16.mxu0 0
    %1914 = vmatpush1.bf16.msra.mxu0 0
    %1915 = vmatprep.subr.bf16.mxu0 0
    %1916 = vmatpush1.bf16.msra.mxu0 0
    %1917 = vmatprep.mubr.bf16.mxu0 0
    %1918 = vmatmul.mubr.bf16.gmra.mrb[0].mxu0 %v1883
    %v1919 = vpop.f32.mrb[0].mxu0
    %v1920 = vadd.f32 0.0, %v1919
    %v1921 = vpop.f32.mrb[0].mxu0
    %v1922 = vadd.f32 0.0, %v1921
    %v1923 = vpop.f32.mrb[0].mxu0
    %v1924 = vpop.f32.mrb[0].mxu0
    %1925 = vdwg.mxu0
    %v1928 = vrot.slane %v1920, 6
    %v1929 = vrot.slane %v1922, 6
    %v1932 = vadd.f32 %v960, %v1928
    %v1933 = vadd.f32 %v962, %v1929
    %v1934 = vxor.u32 %v1932, 2147483648
    %v1935 = vmul.f32 %v1934, 1.442695
    %v1936 = vpow.pop %v1935
    %v1937 = vadd.f32 %v1936, 1.0
    %v1938 = vrcp.pop %v1937
    %v1939 = vmul.f32 1.0, %v1938
    %v1940 = vtanh.pop %v1933
    %v1941 = vxor.u32 %v1933, 2147483648
    %v1942 = vmul.f32 %v1941, 1.442695
    %v1943 = vpow.pop %v1942
    %v1944 = vadd.f32 %v1943, 1.0
    %v1945 = vrcp.pop %v1944
    %v1946 = vmul.f32 1.0, %v1945
    %v1948 = vrot.slane %v1868, 7
    %v1950 = vmul.f32 %v1939, %v1948
    %v1951 = vmul.f32 %v1939, %v1940
    %1953 = vrot.lane.b32.xlu0 %v1951, 64
    %v1954 = vpop.permute.xlu0 %1953
    %v1956 = vadd.f32 %v1950, %v1954
    %v1957 = vtanh.pop %v1956
    %v1958 = vmul.f32 %v1946, %v1957
    %1960 = vrot.lane.b32.xlu0 %v1958, 64
    %v1961 = vpop.permute.xlu0 %1960
    %1963 = vst.msk [vmem:[#allocation2 + $0x8] sm:$0x4] %vm1261, %v1961
    %v1964 = vpack.c.bf16 %v1958, %v1958
    %v1966 = vrot.slane %v1964, 1
    %1967 = vrot.lane.b32.xlu0 %v1966, 64
    %v1968 = vpop.permute.xlu0 %1967
    %v1970 = vsel %vm1012, %v1968, 0
    %1972 = vmatprep.subr.bf16.mxu0 %v997
    %1973 = vmatpush1.bf16.msra.mxu0 %v996
    %1974 = vmatprep.subr.bf16.mxu0 %v999
    %1975 = vmatpush1.bf16.msra.mxu0 %v998
    %1976 = vmatprep.subr.bf16.mxu0 %v1001
    %1977 = vmatpush1.bf16.msra.mxu0 %v1000
    %1978 = vmatprep.subr.bf16.mxu0 %v1003
    %1979 = vmatpush1.bf16.msra.mxu0 %v1002
    %1980 = vmatprep.subr.bf16.mxu0 0
    %1981 = vmatpush1.bf16.msra.mxu0 0
    %1982 = vmatprep.subr.bf16.mxu0 0
    %1983 = vmatpush1.bf16.msra.mxu0 0
    %1984 = vmatprep.subr.bf16.mxu0 0
    %1985 = vmatpush1.bf16.msra.mxu0 0
    %1986 = vmatprep.subr.bf16.mxu0 0
    %1987 = vmatpush1.bf16.msra.mxu0 0
    %1988 = vmatprep.subr.bf16.mxu0 0
    %1989 = vmatpush1.bf16.msra.mxu0 0
    %1990 = vmatprep.subr.bf16.mxu0 0
    %1991 = vmatpush1.bf16.msra.mxu0 0
    %1992 = vmatprep.subr.bf16.mxu0 0
    %1993 = vmatpush1.bf16.msra.mxu0 0
    %1994 = vmatprep.subr.bf16.mxu0 0
    %1995 = vmatpush1.bf16.msra.mxu0 0
    %1996 = vmatprep.subr.bf16.mxu0 0
    %1997 = vmatpush1.bf16.msra.mxu0 0
    %1998 = vmatprep.subr.bf16.mxu0 0
    %1999 = vmatpush1.bf16.msra.mxu0 0
    %2000 = vmatprep.subr.bf16.mxu0 0
    %2001 = vmatpush1.bf16.msra.mxu0 0
    %2002 = vmatprep.subr.bf16.mxu0 0
    %2003 = vmatpush1.bf16.msra.mxu0 0
    %2004 = vmatprep.mubr.bf16.mxu0 0
    %2005 = vmatmul.mubr.bf16.gmra.mrb[0].mxu0 %v1970
    %v2006 = vpop.f32.mrb[0].mxu0
    %v2007 = vadd.f32 0.0, %v2006
    %v2008 = vpop.f32.mrb[0].mxu0
    %v2009 = vadd.f32 0.0, %v2008
    %v2010 = vpop.f32.mrb[0].mxu0
    %v2011 = vpop.f32.mrb[0].mxu0
    %2012 = vdwg.mxu0
    %v2015 = vrot.slane %v2007, 5
    %v2016 = vrot.slane %v2009, 5
    %v2019 = vadd.f32 %v960, %v2015
    %v2020 = vadd.f32 %v962, %v2016
    %v2021 = vxor.u32 %v2019, 2147483648
    %v2022 = vmul.f32 %v2021, 1.442695
    %v2023 = vpow.pop %v2022
    %v2024 = vadd.f32 %v2023, 1.0
    %v2025 = vrcp.pop %v2024
    %v2026 = vmul.f32 1.0, %v2025
    %v2027 = vtanh.pop %v2020
    %v2028 = vxor.u32 %v2020, 2147483648
    %v2029 = vmul.f32 %v2028, 1.442695
    %v2030 = vpow.pop %v2029
    %v2031 = vadd.f32 %v2030, 1.0
    %v2032 = vrcp.pop %v2031
    %v2033 = vmul.f32 1.0, %v2032
    %v2035 = vrot.slane %v1956, 7
    %v2037 = vmul.f32 %v2026, %v2035
    %v2038 = vmul.f32 %v2026, %v2027
    %2040 = vrot.lane.b32.xlu0 %v2038, 64
    %v2041 = vpop.permute.xlu0 %2040
    %v2043 = vadd.f32 %v2037, %v2041
    %v2044 = vtanh.pop %v2043
    %v2045 = vmul.f32 %v2033, %v2044
    %2047 = vrot.lane.b32.xlu0 %v2045, 64
    %v2048 = vpop.permute.xlu0 %2047
    %2050 = vst.msk [vmem:[#allocation2 + $0x8] sm:$0x8] %vm1349, %v2048
    %v2051 = vpack.c.bf16 %v2045, %v2045
    %v2053 = vshrl.u32 %v2051, 16
    %v2055 = vrot.slane %v2053, 1
    %2056 = vrot.lane.b32.xlu0 %v2055, 64
    %v2057 = vpop.permute.xlu0 %2056
    %v2059 = vsel %vm1012, %v2057, 0
    %2061 = vmatprep.subr.bf16.mxu0 %v997
    %2062 = vmatpush1.bf16.msra.mxu0 %v996
    %2063 = vmatprep.subr.bf16.mxu0 %v999
    %2064 = vmatpush1.bf16.msra.mxu0 %v998
    %2065 = vmatprep.subr.bf16.mxu0 %v1001
    %2066 = vmatpush1.bf16.msra.mxu0 %v1000
    %2067 = vmatprep.subr.bf16.mxu0 %v1003
    %2068 = vmatpush1.bf16.msra.mxu0 %v1002
    %2069 = vmatprep.subr.bf16.mxu0 0
    %2070 = vmatpush1.bf16.msra.mxu0 0
    %2071 = vmatprep.subr.bf16.mxu0 0
    %2072 = vmatpush1.bf16.msra.mxu0 0
    %2073 = vmatprep.subr.bf16.mxu0 0
    %2074 = vmatpush1.bf16.msra.mxu0 0
    %2075 = vmatprep.subr.bf16.mxu0 0
    %2076 = vmatpush1.bf16.msra.mxu0 0
    %2077 = vmatprep.subr.bf16.mxu0 0
    %2078 = vmatpush1.bf16.msra.mxu0 0
    %2079 = vmatprep.subr.bf16.mxu0 0
    %2080 = vmatpush1.bf16.msra.mxu0 0
    %2081 = vmatprep.subr.bf16.mxu0 0
    %2082 = vmatpush1.bf16.msra.mxu0 0
    %2083 = vmatprep.subr.bf16.mxu0 0
    %2084 = vmatpush1.bf16.msra.mxu0 0
    %2085 = vmatprep.subr.bf16.mxu0 0
    %2086 = vmatpush1.bf16.msra.mxu0 0
    %2087 = vmatprep.subr.bf16.mxu0 0
    %2088 = vmatpush1.bf16.msra.mxu0 0
    %2089 = vmatprep.subr.bf16.mxu0 0
    %2090 = vmatpush1.bf16.msra.mxu0 0
    %2091 = vmatprep.subr.bf16.mxu0 0
    %2092 = vmatpush1.bf16.msra.mxu0 0
    %2093 = vmatprep.mubr.bf16.mxu0 0
    %2094 = vmatmul.mubr.bf16.gmra.mrb[0].mxu0 %v2059
    %v2095 = vpop.f32.mrb[0].mxu0
    %v2096 = vadd.f32 0.0, %v2095
    %v2097 = vpop.f32.mrb[0].mxu0
    %v2098 = vadd.f32 0.0, %v2097
    %v2099 = vpop.f32.mrb[0].mxu0
    %v2100 = vpop.f32.mrb[0].mxu0
    %2101 = vdwg.mxu0
    %v2104 = vrot.slane %v2096, 4
    %v2105 = vrot.slane %v2098, 4
    %v2108 = vadd.f32 %v960, %v2104
    %v2109 = vadd.f32 %v962, %v2105
    %v2110 = vxor.u32 %v2108, 2147483648
    %v2111 = vmul.f32 %v2110, 1.442695
    %v2112 = vpow.pop %v2111
    %v2113 = vadd.f32 %v2112, 1.0
    %v2114 = vrcp.pop %v2113
    %v2115 = vmul.f32 1.0, %v2114
    %v2116 = vtanh.pop %v2109
    %v2117 = vxor.u32 %v2109, 2147483648
    %v2118 = vmul.f32 %v2117, 1.442695
    %v2119 = vpow.pop %v2118
    %v2120 = vadd.f32 %v2119, 1.0
    %v2121 = vrcp.pop %v2120
    %v2122 = vmul.f32 1.0, %v2121
    %v2124 = vrot.slane %v2043, 7
    %v2126 = vmul.f32 %v2115, %v2124
    %v2127 = vmul.f32 %v2115, %v2116
    %2129 = vrot.lane.b32.xlu0 %v2127, 64
    %v2130 = vpop.permute.xlu0 %2129
    %v2132 = vadd.f32 %v2126, %v2130
    %v2133 = vtanh.pop %v2132
    %v2134 = vmul.f32 %v2122, %v2133
    %2136 = vrot.lane.b32.xlu0 %v2134, 64
    %v2137 = vpop.permute.xlu0 %2136
    %2139 = vst.msk [vmem:[#allocation2 + $0x8] sm:$0x10] %vm1439, %v2137
    %v2140 = vpack.c.bf16 %v2134, %v2134
    %v2142 = vrot.slane %v2140, 2
    %2143 = vrot.lane.b32.xlu0 %v2142, 64
    %v2144 = vpop.permute.xlu0 %2143
    %v2146 = vsel %vm1012, %v2144, 0
    %2148 = vmatprep.subr.bf16.mxu0 %v997
    %2149 = vmatpush1.bf16.msra.mxu0 %v996
    %2150 = vmatprep.subr.bf16.mxu0 %v999
    %2151 = vmatpush1.bf16.msra.mxu0 %v998
    %2152 = vmatprep.subr.bf16.mxu0 %v1001
    %2153 = vmatpush1.bf16.msra.mxu0 %v1000
    %2154 = vmatprep.subr.bf16.mxu0 %v1003
    %2155 = vmatpush1.bf16.msra.mxu0 %v1002
    %2156 = vmatprep.subr.bf16.mxu0 0
    %2157 = vmatpush1.bf16.msra.mxu0 0
    %2158 = vmatprep.subr.bf16.mxu0 0
    %2159 = vmatpush1.bf16.msra.mxu0 0
    %2160 = vmatprep.subr.bf16.mxu0 0
    %2161 = vmatpush1.bf16.msra.mxu0 0
    %2162 = vmatprep.subr.bf16.mxu0 0
    %2163 = vmatpush1.bf16.msra.mxu0 0
    %2164 = vmatprep.subr.bf16.mxu0 0
    %2165 = vmatpush1.bf16.msra.mxu0 0
    %2166 = vmatprep.subr.bf16.mxu0 0
    %2167 = vmatpush1.bf16.msra.mxu0 0
    %2168 = vmatprep.subr.bf16.mxu0 0
    %2169 = vmatpush1.bf16.msra.mxu0 0
    %2170 = vmatprep.subr.bf16.mxu0 0
    %2171 = vmatpush1.bf16.msra.mxu0 0
    %2172 = vmatprep.subr.bf16.mxu0 0
    %2173 = vmatpush1.bf16.msra.mxu0 0
    %2174 = vmatprep.subr.bf16.mxu0 0
    %2175 = vmatpush1.bf16.msra.mxu0 0
    %2176 = vmatprep.subr.bf16.mxu0 0
    %2177 = vmatpush1.bf16.msra.mxu0 0
    %2178 = vmatprep.subr.bf16.mxu0 0
    %2179 = vmatpush1.bf16.msra.mxu0 0
    %2180 = vmatprep.mubr.bf16.mxu0 0
    %2181 = vmatmul.mubr.bf16.gmra.mrb[0].mxu0 %v2146
    %v2182 = vpop.f32.mrb[0].mxu0
    %v2183 = vadd.f32 0.0, %v2182
    %v2184 = vpop.f32.mrb[0].mxu0
    %v2185 = vadd.f32 0.0, %v2184
    %v2186 = vpop.f32.mrb[0].mxu0
    %v2187 = vpop.f32.mrb[0].mxu0
    %2188 = vdwg.mxu0
    %v2191 = vrot.slane %v2183, 3
    %v2192 = vrot.slane %v2185, 3
    %v2195 = vadd.f32 %v960, %v2191
    %v2196 = vadd.f32 %v962, %v2192
    %v2197 = vxor.u32 %v2195, 2147483648
    %v2198 = vmul.f32 %v2197, 1.442695
    %v2199 = vpow.pop %v2198
    %v2200 = vadd.f32 %v2199, 1.0
    %v2201 = vrcp.pop %v2200
    %v2202 = vmul.f32 1.0, %v2201
    %v2203 = vtanh.pop %v2196
    %v2204 = vxor.u32 %v2196, 2147483648
    %v2205 = vmul.f32 %v2204, 1.442695
    %v2206 = vpow.pop %v2205
    %v2207 = vadd.f32 %v2206, 1.0
    %v2208 = vrcp.pop %v2207
    %v2209 = vmul.f32 1.0, %v2208
    %v2211 = vrot.slane %v2132, 7
    %v2213 = vmul.f32 %v2202, %v2211
    %v2214 = vmul.f32 %v2202, %v2203
    %2216 = vrot.lane.b32.xlu0 %v2214, 64
    %v2217 = vpop.permute.xlu0 %2216
    %v2219 = vadd.f32 %v2213, %v2217
    %v2220 = vtanh.pop %v2219
    %v2221 = vmul.f32 %v2209, %v2220
    %2223 = vrot.lane.b32.xlu0 %v2221, 64
    %v2224 = vpop.permute.xlu0 %2223
    %2226 = vst.msk [vmem:[#allocation2 + $0x8] sm:$0x20] %vm1527, %v2224
    %v2227 = vpack.c.bf16 %v2221, %v2221
    %v2229 = vshrl.u32 %v2227, 16
    %v2231 = vrot.slane %v2229, 2
    %2232 = vrot.lane.b32.xlu0 %v2231, 64
    %v2233 = vpop.permute.xlu0 %2232
    %v2235 = vsel %vm1012, %v2233, 0
    %2237 = vmatprep.subr.bf16.mxu0 %v997
    %2238 = vmatpush1.bf16.msra.mxu0 %v996
    %2239 = vmatprep.subr.bf16.mxu0 %v999
    %2240 = vmatpush1.bf16.msra.mxu0 %v998
    %2241 = vmatprep.subr.bf16.mxu0 %v1001
    %2242 = vmatpush1.bf16.msra.mxu0 %v1000
    %2243 = vmatprep.subr.bf16.mxu0 %v1003
    %2244 = vmatpush1.bf16.msra.mxu0 %v1002
    %2245 = vmatprep.subr.bf16.mxu0 0
    %2246 = vmatpush1.bf16.msra.mxu0 0
    %2247 = vmatprep.subr.bf16.mxu0 0
    %2248 = vmatpush1.bf16.msra.mxu0 0
    %2249 = vmatprep.subr.bf16.mxu0 0
    %2250 = vmatpush1.bf16.msra.mxu0 0
    %2251 = vmatprep.subr.bf16.mxu0 0
    %2252 = vmatpush1.bf16.msra.mxu0 0
    %2253 = vmatprep.subr.bf16.mxu0 0
    %2254 = vmatpush1.bf16.msra.mxu0 0
    %2255 = vmatprep.subr.bf16.mxu0 0
    %2256 = vmatpush1.bf16.msra.mxu0 0
    %2257 = vmatprep.subr.bf16.mxu0 0
    %2258 = vmatpush1.bf16.msra.mxu0 0
    %2259 = vmatprep.subr.bf16.mxu0 0
    %2260 = vmatpush1.bf16.msra.mxu0 0
    %2261 = vmatprep.subr.bf16.mxu0 0
    %2262 = vmatpush1.bf16.msra.mxu0 0
    %2263 = vmatprep.subr.bf16.mxu0 0
    %2264 = vmatpush1.bf16.msra.mxu0 0
    %2265 = vmatprep.subr.bf16.mxu0 0
    %2266 = vmatpush1.bf16.msra.mxu0 0
    %2267 = vmatprep.subr.bf16.mxu0 0
    %2268 = vmatpush1.bf16.msra.mxu0 0
    %2269 = vmatprep.mubr.bf16.mxu0 0
    %2270 = vmatmul.mubr.bf16.gmra.mrb[0].mxu0 %v2235
    %v2271 = vpop.f32.mrb[0].mxu0
    %v2272 = vadd.f32 0.0, %v2271
    %v2273 = vpop.f32.mrb[0].mxu0
    %v2274 = vadd.f32 0.0, %v2273
    %v2275 = vpop.f32.mrb[0].mxu0
    %v2276 = vpop.f32.mrb[0].mxu0
    %2277 = vdwg.mxu0
    %v2280 = vrot.slane %v2272, 2
    %v2281 = vrot.slane %v2274, 2
    %v2284 = vadd.f32 %v960, %v2280
    %v2285 = vadd.f32 %v962, %v2281
    %v2286 = vxor.u32 %v2284, 2147483648
    %v2287 = vmul.f32 %v2286, 1.442695
    %v2288 = vpow.pop %v2287
    %v2289 = vadd.f32 %v2288, 1.0
    %v2290 = vrcp.pop %v2289
    %v2291 = vmul.f32 1.0, %v2290
    %v2292 = vtanh.pop %v2285
    %v2293 = vxor.u32 %v2285, 2147483648
    %v2294 = vmul.f32 %v2293, 1.442695
    %v2295 = vpow.pop %v2294
    %v2296 = vadd.f32 %v2295, 1.0
    %v2297 = vrcp.pop %v2296
    %v2298 = vmul.f32 1.0, %v2297
    %v2300 = vrot.slane %v2219, 7
    %v2302 = vmul.f32 %v2291, %v2300
    %v2303 = vmul.f32 %v2291, %v2292
    %2305 = vrot.lane.b32.xlu0 %v2303, 64
    %v2306 = vpop.permute.xlu0 %2305
    %v2308 = vadd.f32 %v2302, %v2306
    %v2309 = vtanh.pop %v2308
    %v2310 = vmul.f32 %v2298, %v2309
    %2312 = vrot.lane.b32.xlu0 %v2310, 64
    %v2313 = vpop.permute.xlu0 %2312
    %2315 = vst.msk [vmem:[#allocation2 + $0x8] sm:$0x40] %vm1617, %v2313
    %v2316 = vpack.c.bf16 %v2310, %v2310
    %v2318 = vrot.slane %v2316, 3
    %2319 = vrot.lane.b32.xlu0 %v2318, 64
    %v2320 = vpop.permute.xlu0 %2319
    %v2322 = vsel %vm1012, %v2320, 0
    %2324 = vmatprep.subr.bf16.mxu0 %v997
    %2325 = vmatpush1.bf16.msra.mxu0 %v996
    %2326 = vmatprep.subr.bf16.mxu0 %v999
    %2327 = vmatpush1.bf16.msra.mxu0 %v998
    %2328 = vmatprep.subr.bf16.mxu0 %v1001
    %2329 = vmatpush1.bf16.msra.mxu0 %v1000
    %2330 = vmatprep.subr.bf16.mxu0 %v1003
    %2331 = vmatpush1.bf16.msra.mxu0 %v1002
    %2332 = vmatprep.subr.bf16.mxu0 0
    %2333 = vmatpush1.bf16.msra.mxu0 0
    %2334 = vmatprep.subr.bf16.mxu0 0
    %2335 = vmatpush1.bf16.msra.mxu0 0
    %2336 = vmatprep.subr.bf16.mxu0 0
    %2337 = vmatpush1.bf16.msra.mxu0 0
    %2338 = vmatprep.subr.bf16.mxu0 0
    %2339 = vmatpush1.bf16.msra.mxu0 0
    %2340 = vmatprep.subr.bf16.mxu0 0
    %2341 = vmatpush1.bf16.msra.mxu0 0
    %2342 = vmatprep.subr.bf16.mxu0 0
    %2343 = vmatpush1.bf16.msra.mxu0 0
    %2344 = vmatprep.subr.bf16.mxu0 0
    %2345 = vmatpush1.bf16.msra.mxu0 0
    %2346 = vmatprep.subr.bf16.mxu0 0
    %2347 = vmatpush1.bf16.msra.mxu0 0
    %2348 = vmatprep.subr.bf16.mxu0 0
    %2349 = vmatpush1.bf16.msra.mxu0 0
    %2350 = vmatprep.subr.bf16.mxu0 0
    %2351 = vmatpush1.bf16.msra.mxu0 0
    %2352 = vmatprep.subr.bf16.mxu0 0
    %2353 = vmatpush1.bf16.msra.mxu0 0
    %2354 = vmatprep.subr.bf16.mxu0 0
    %2355 = vmatpush1.bf16.msra.mxu0 0
    %2356 = vmatprep.mubr.bf16.mxu0 0
    %2357 = vmatmul.mubr.bf16.gmra.mrb[0].mxu0 %v2322
    %v2358 = vpop.f32.mrb[0].mxu0
    %v2359 = vadd.f32 0.0, %v2358
    %v2360 = vpop.f32.mrb[0].mxu0
    %v2361 = vadd.f32 0.0, %v2360
    %v2362 = vpop.f32.mrb[0].mxu0
    %v2363 = vpop.f32.mrb[0].mxu0
    %2364 = vdwg.mxu0
    %v2367 = vrot.slane %v2359, 1
    %v2368 = vrot.slane %v2361, 1
    %v2371 = vadd.f32 %v960, %v2367
    %v2372 = vadd.f32 %v962, %v2368
    %v2373 = vxor.u32 %v2371, 2147483648
    %v2374 = vmul.f32 %v2373, 1.442695
    %v2375 = vpow.pop %v2374
    %v2376 = vadd.f32 %v2375, 1.0
    %v2377 = vrcp.pop %v2376
    %v2378 = vmul.f32 1.0, %v2377
    %v2379 = vtanh.pop %v2372
    %v2380 = vxor.u32 %v2372, 2147483648
    %v2381 = vmul.f32 %v2380, 1.442695
    %v2382 = vpow.pop %v2381
    %v2383 = vadd.f32 %v2382, 1.0
    %v2384 = vrcp.pop %v2383
    %v2385 = vmul.f32 1.0, %v2384
    %v2387 = vrot.slane %v2308, 7
    %v2389 = vmul.f32 %v2378, %v2387
    %v2390 = vmul.f32 %v2378, %v2379
    %2392 = vrot.lane.b32.xlu0 %v2390, 64
    %v2393 = vpop.permute.xlu0 %2392
    %v2395 = vadd.f32 %v2389, %v2393
    %v2396 = vtanh.pop %v2395
    %v2397 = vmul.f32 %v2385, %v2396
    %2399 = vrot.lane.b32.xlu0 %v2397, 64
    %v2400 = vpop.permute.xlu0 %2399
    %2402 = vst.msk [vmem:[#allocation2 + $0x8] sm:$0x80] %vm1705, %v2400
    %v2403 = vld [vmem:[#allocation2] sm:$0xff]
    %v2404 = vld [vmem:[#allocation2 + $0x8] sm:$0xff]
    %v2405 = vld [vmem:[%s3] sm:$0xff]
    %v2406 = vld [vmem:[%s3 + $0x8] sm:$0xff]
    %v2407 = vld [vmem:[%s3 + $0x10] sm:$0xff]
    %v2408 = vld [vmem:[%s3 + $0x18] sm:$0xff]
    %v2409 = vld [vmem:[%s3 + $0x20] sm:$0xff]
    %v2410 = vld [vmem:[%s3 + $0x28] sm:$0xff]
    %v2411 = vld [vmem:[%s3 + $0x30] sm:$0xff]
    %v2412 = vld [vmem:[%s3 + $0x38] sm:$0xff]
    %v2413 = vld [vmem:[%s4 + $0x3] sm:$0x1]
    %v2414 = vlaneseq
    %v2415 = vshrl.u32 %v2414, 7
    %v2416 = vsub.s32 0, %v2415
    %v2417 = vrot.slane %v2413, %v2416
    %2426 = vrot.lane.b32.xlu0 %v2405, 124
    %v2427 = vpop.permute.xlu0 %2426
    %2428 = vrot.lane.b32.xlu0 %v2406, 124
    %v2429 = vpop.permute.xlu0 %2428
    %2430 = vrot.lane.b32.xlu0 %v2407, 124
    %v2431 = vpop.permute.xlu0 %2430
    %2432 = vrot.lane.b32.xlu0 %v2408, 124
    %v2433 = vpop.permute.xlu0 %2432
    %2434 = vrot.lane.b32.xlu0 %v2409, 124
    %v2435 = vpop.permute.xlu0 %2434
    %2436 = vrot.lane.b32.xlu0 %v2410, 124
    %v2437 = vpop.permute.xlu0 %2436
    %2438 = vrot.lane.b32.xlu0 %v2411, 124
    %v2439 = vpop.permute.xlu0 %2438
    %2440 = vrot.lane.b32.xlu0 %v2412, 124
    %v2441 = vpop.permute.xlu0 %2440
    %2451 = vrot.lane.b32.xlu0 %v2417, 126
    %v2452 = vpop.permute.xlu0 %2451
    %v2455 = vsel %vm1012, %v2403, 0
    %v2458 = vsel %vm1012, %v2404, 0
    %2460 = vmatprep.subr.mxu0 0.0
    %2461 = vmatpush1.msra.mxu0 %v2427
    %2462 = vmatprep.subr.mxu0 0.0
    %2463 = vmatpush1.msra.mxu0 %v2429
    %2464 = vmatprep.subr.mxu0 0.0
    %2465 = vmatpush1.msra.mxu0 %v2431
    %2466 = vmatprep.subr.mxu0 0.0
    %2467 = vmatpush1.msra.mxu0 %v2433
    %2468 = vmatprep.subr.mxu0 0.0
    %2469 = vmatpush1.msra.mxu0 %v2435
    %2470 = vmatprep.subr.mxu0 0.0
    %2471 = vmatpush1.msra.mxu0 %v2437
    %2472 = vmatprep.subr.mxu0 0.0
    %2473 = vmatpush1.msra.mxu0 %v2439
    %2474 = vmatprep.subr.mxu0 0.0
    %2475 = vmatpush1.msra.mxu0 %v2441
    %2476 = vmatprep.subr.mxu0 0.0
    %2477 = vmatpush1.msra.mxu0 0.0
    %2478 = vmatprep.subr.mxu0 0.0
    %2479 = vmatpush1.msra.mxu0 0.0
    %2480 = vmatprep.subr.mxu0 0.0
    %2481 = vmatpush1.msra.mxu0 0.0
    %2482 = vmatprep.subr.mxu0 0.0
    %2483 = vmatpush1.msra.mxu0 0.0
    %2484 = vmatprep.subr.mxu0 0.0
    %2485 = vmatpush1.msra.mxu0 0.0
    %2486 = vmatprep.subr.mxu0 0.0
    %2487 = vmatpush1.msra.mxu0 0.0
    %2488 = vmatprep.subr.mxu0 0.0
    %2489 = vmatpush1.msra.mxu0 0.0
    %2490 = vmatprep.subr.mxu0 0.0
    %2491 = vmatpush1.msra.mxu0 0.0
    %2492 = vmatprep.subr.mxu0 0.0
    %2493 = vmatpush1.msra.mxu0 0.0
    %2494 = vmatprep.subr.mxu0 0.0
    %2495 = vmatpush1.msra.mxu0 0.0
    %2496 = vmatprep.subr.mxu0 0.0
    %2497 = vmatpush1.msra.mxu0 0.0
    %2498 = vmatprep.subr.mxu0 0.0
    %2499 = vmatpush1.msra.mxu0 0.0
    %2500 = vmatprep.subr.mxu0 0.0
    %2501 = vmatpush1.msra.mxu0 0.0
    %2502 = vmatprep.subr.mxu0 0.0
    %2503 = vmatpush1.msra.mxu0 0.0
    %2504 = vmatprep.subr.mxu0 0.0
    %2505 = vmatpush1.msra.mxu0 0.0
    %2506 = vmatprep.subr.mxu0 0.0
    %2507 = vmatpush1.msra.mxu0 0.0
    %2508 = vmatprep.subr.mxu0 0.0
    %2509 = vmatpush1.msra.mxu0 0.0
    %2510 = vmatprep.subr.mxu0 0.0
    %2511 = vmatpush1.msra.mxu0 0.0
    %2512 = vmatprep.subr.mxu0 0.0
    %2513 = vmatpush1.msra.mxu0 0.0
    %2514 = vmatprep.subr.mxu0 0.0
    %2515 = vmatpush1.msra.mxu0 0.0
    %2516 = vmatprep.subr.mxu0 0.0
    %2517 = vmatpush1.msra.mxu0 0.0
    %2518 = vmatprep.subr.mxu0 0.0
    %2519 = vmatpush1.msra.mxu0 0.0
    %2520 = vmatprep.subr.mxu0 0.0
    %2521 = vmatpush1.msra.mxu0 0.0
    %2522 = vmatprep.subr.mxu0 0.0
    %2523 = vmatpush1.msra.mxu0 0.0
    %2524 = vmatprep.mubr.f32.mxu0 0.0
    %2525 = vmatmul.mubr.f32.gmra.mrb[0].mxu0 %v2455
    %v2526 = vpop.f32.mrb[0].mxu0
    %v2527 = vadd.f32 %v2452, %v2526
    %v2528 = vpop.f32.mrb[0].mxu0
    %2529 = vmatprep.mubr.f32.mxu0 0.0
    %2530 = vmatmul.mubr.f32.gmra.mrb[0].mxu0 %v2458
    %v2531 = vpop.f32.mrb[0].mxu0
    %v2532 = vadd.f32 %v2452, %v2531
    %v2533 = vpop.f32.mrb[0].mxu0
    %2534 = vdwg.mxu0
    %vm2535 = vcmask 7168
    %v2536 = vsel %vm2535, %v2527, -inf
    %v2537 = vsel %vm2535, %v2532, -inf
    %v2538 = vmax.f32 %v2536, %v2537
    %v2539 = vrot.slane %v2538, 4
    %v2540 = vmax.f32 %v2538, %v2539
    %v2541 = vrot.slane %v2540, 2
    %v2542 = vmax.f32 %v2540, %v2541
    %v2543 = vrot.slane %v2542, 1
    %v2544 = vmax.f32 %v2542, %v2543
    %v2545 = vsub.f32 %v2527, %v2544
    %v2546 = vsub.f32 %v2532, %v2544
    %v2547 = vmul.f32 %v2545, 1.442695
    %v2548 = vpow.pop %v2547
    %v2549 = vmul.f32 %v2546, 1.442695
    %v2550 = vpow.pop %v2549
    %v2551 = vsel %vm2535, %v2548, 0.0
    %v2552 = vsel %vm2535, %v2550, 0.0
    %v2553 = vadd.f32 %v2551, %v2552
    %v2554 = vrot.slane %v2553, 4
    %v2555 = vadd.f32 %v2553, %v2554
    %v2556 = vrot.slane %v2555, 2
    %v2557 = vadd.f32 %v2555, %v2556
    %v2558 = vrot.slane %v2557, 1
    %v2559 = vadd.f32 %v2557, %v2558
    %v2560 = vrcp.pop %v2559
    %v2561 = vmul.f32 %v2548, %v2560
    %v2562 = vmul.f32 %v2550, %v2560
    %2564 = vset.pattern.permute.xlu0 0
    %2565 = vperm.xlu0 %2564, %v2561
    %v2566 = vpop.permute.xlu0 %2565
    %2569 = vset.pattern.permute.xlu0 0
    %2570 = vperm.xlu0 %2569, %v2562
    %v2571 = vpop.permute.xlu0 %2570
    %v2573 = vmul.f32 %v2566, %v2403
    %v2574 = vmul.f32 %v2571, %v2404
    %v2575 = vsel %vm1012, %v2573, 0.0
    %v2576 = vsel %vm1012, %v2574, 0.0
    %v2577 = vadd.f32 %v2575, %v2576
    %v2578 = vrot.slane %v2577, 4
    %v2579 = vadd.f32 %v2577, %v2578
    %v2580 = vrot.slane %v2579, 2
    %v2581 = vadd.f32 %v2579, %v2580
    %v2582 = vrot.slane %v2581, 1
    %v2583 = vadd.f32 %v2581, %v2582
    %2584 = vrot.lane.b32.xlu0 %v2405, 123
    %v2585 = vpop.permute.xlu0 %2584
    %2586 = vrot.lane.b32.xlu0 %v2406, 123
    %v2587 = vpop.permute.xlu0 %2586
    %2588 = vrot.lane.b32.xlu0 %v2407, 123
    %v2589 = vpop.permute.xlu0 %2588
    %2590 = vrot.lane.b32.xlu0 %v2408, 123
    %v2591 = vpop.permute.xlu0 %2590
    %2592 = vrot.lane.b32.xlu0 %v2409, 123
    %v2593 = vpop.permute.xlu0 %2592
    %2594 = vrot.lane.b32.xlu0 %v2410, 123
    %v2595 = vpop.permute.xlu0 %2594
    %2596 = vrot.lane.b32.xlu0 %v2411, 123
    %v2597 = vpop.permute.xlu0 %2596
    %2598 = vrot.lane.b32.xlu0 %v2412, 123
    %v2599 = vpop.permute.xlu0 %2598
    %v2609 = vsel %vm1012, %v2583, 0
    %2611 = vmatprep.subr.mxu0 0.0
    %2612 = vmatpush1.msra.mxu0 %v2585
    %2613 = vmatprep.subr.mxu0 0.0
    %2614 = vmatpush1.msra.mxu0 %v2587
    %2615 = vmatprep.subr.mxu0 0.0
    %2616 = vmatpush1.msra.mxu0 %v2589
    %2617 = vmatprep.subr.mxu0 0.0
    %2618 = vmatpush1.msra.mxu0 %v2591
    %2619 = vmatprep.subr.mxu0 0.0
    %2620 = vmatpush1.msra.mxu0 %v2593
    %2621 = vmatprep.subr.mxu0 0.0
    %2622 = vmatpush1.msra.mxu0 %v2595
    %2623 = vmatprep.subr.mxu0 0.0
    %2624 = vmatpush1.msra.mxu0 %v2597
    %2625 = vmatprep.subr.mxu0 0.0
    %2626 = vmatpush1.msra.mxu0 %v2599
    %2627 = vmatprep.subr.mxu0 0.0
    %2628 = vmatpush1.msra.mxu0 0.0
    %2629 = vmatprep.subr.mxu0 0.0
    %2630 = vmatpush1.msra.mxu0 0.0
    %2631 = vmatprep.subr.mxu0 0.0
    %2632 = vmatpush1.msra.mxu0 0.0
    %2633 = vmatprep.subr.mxu0 0.0
    %2634 = vmatpush1.msra.mxu0 0.0
    %2635 = vmatprep.subr.mxu0 0.0
    %2636 = vmatpush1.msra.mxu0 0.0
    %2637 = vmatprep.subr.mxu0 0.0
    %2638 = vmatpush1.msra.mxu0 0.0
    %2639 = vmatprep.subr.mxu0 0.0
    %2640 = vmatpush1.msra.mxu0 0.0
    %2641 = vmatprep.subr.mxu0 0.0
    %2642 = vmatpush1.msra.mxu0 0.0
    %2643 = vmatprep.subr.mxu0 0.0
    %2644 = vmatpush1.msra.mxu0 0.0
    %2645 = vmatprep.subr.mxu0 0.0
    %2646 = vmatpush1.msra.mxu0 0.0
    %2647 = vmatprep.subr.mxu0 0.0
    %2648 = vmatpush1.msra.mxu0 0.0
    %2649 = vmatprep.subr.mxu0 0.0
    %2650 = vmatpush1.msra.mxu0 0.0
    %2651 = vmatprep.subr.mxu0 0.0
    %2652 = vmatpush1.msra.mxu0 0.0
    %2653 = vmatprep.subr.mxu0 0.0
    %2654 = vmatpush1.msra.mxu0 0.0
    %2655 = vmatprep.subr.mxu0 0.0
    %2656 = vmatpush1.msra.mxu0 0.0
    %2657 = vmatprep.subr.mxu0 0.0
    %2658 = vmatpush1.msra.mxu0 0.0
    %2659 = vmatprep.subr.mxu0 0.0
    %2660 = vmatpush1.msra.mxu0 0.0
    %2661 = vmatprep.subr.mxu0 0.0
    %2662 = vmatpush1.msra.mxu0 0.0
    %2663 = vmatprep.subr.mxu0 0.0
    %2664 = vmatpush1.msra.mxu0 0.0
    %2665 = vmatprep.subr.mxu0 0.0
    %2666 = vmatpush1.msra.mxu0 0.0
    %2667 = vmatprep.subr.mxu0 0.0
    %2668 = vmatpush1.msra.mxu0 0.0
    %2669 = vmatprep.subr.mxu0 0.0
    %2670 = vmatpush1.msra.mxu0 0.0
    %2671 = vmatprep.subr.mxu0 0.0
    %2672 = vmatpush1.msra.mxu0 0.0
    %2673 = vmatprep.subr.mxu0 0.0
    %2674 = vmatpush1.msra.mxu0 0.0
    %2675 = vmatprep.mubr.f32.mxu0 0.0
    %2676 = vmatmul.mubr.f32.gmra.mrb[0].mxu0 %v2609
    %v2677 = vpop.f32.mrb[0].mxu0
    %v2678 = vadd.f32 %v2413, %v2677
    %v2679 = vpop.f32.mrb[0].mxu0
    %2680 = vdwg.mxu0
    %vm2681 = vcmask 8192
    %v2682 = vsel %vm2681, %v2678, -inf
    %2683 = vmax.xlane.f32.xlu0 %v2682
    %v2684 = vpop.xlane.xlu0 %2683
    %v2685 = vsub.f32 %v2678, %v2684
    %v2686 = vmul.f32 %v2685, 1.442695
    %v2687 = vpow.pop %v2686
    %v2688 = vsel %vm2681, %v2687, 0.0
    %2689 = vadd.xlane.f32.xlu0 %v2688
    %v2690 = vpop.xlane.xlu0 %2689
    %v2691 = vrcp.pop %v2690
    %v2692 = vmul.f32 %v2687, %v2691
    %2693 = vst.msk [vmem:[#allocation6] sm:$0x1] %vm2681, %v2692
    // Predicated region
    $region26: #{spatio_temporal_gnn_forward.1} parent=1 // pred_check
      _
    $region27: #{spatio_temporal_gnn_forward.1} parent=1 // pred_check_branch
      %2695 = sbr.rel (0) target = $region29
    $region28: #{spatio_temporal_gnn_forward.1} parent=1 // pred_region
      %s2697 = ssub.s32 16, 16
      %2698 = vsyncadd [#allocation5], %s2697
      %s2700 = sshll.u32 [#allocation6], 4
      %s2701 = int_to_ptr.vmem [resolvable:$true] %s2700
      %2703 = dma.vmem_to_hbm [thread:$0]  %s2701, 16, %s5, [#allocation5]
    $region29: #{spatio_temporal_gnn_forward.1} parent=1 // pred_fallthru
      _
    // Predicated region
    $region30: #{spatio_temporal_gnn_forward.1} parent=1 // pred_check
      _
    $region31: #{spatio_temporal_gnn_forward.1} parent=1 // pred_check_branch
      %2705 = sbr.rel (0) target = $region33
    $region32: #{spatio_temporal_gnn_forward.1} parent=1 // pred_region
      %2706 = dma.done [#allocation5], 16
    $region33: #{spatio_temporal_gnn_forward.1} parent=1 // pred_fallthru
      _
    %2707 = vsyncpa [#allocation4], 1
    %2708 = vsyncpa [#allocation5], 1

</llo_original>
